<compile_context>
chip_gen: v5e
topology: v5e:2x2
jax: 0.10.0
libtpu: 0.0.40
codegen_flags: <defaults>
</compile_context>

<pallas_src>
import math

import jax
import jax.numpy as jnp
import numpy as np
from jax.experimental import pallas as pl
from jax.experimental.pallas import tpu as pltpu


# ----------------------------- Pallas kernel ------------------------------ #
def _bilstm_chunk_kernel(g_ref, whh_ref, out_ref, hn_ref, cn_ref, h_sc, c_sc):
    """One grid step = one direction x one chunk of TC timesteps.

    g_ref   : (TC, B, 4H) precomputed x@W_ih + b for this chunk, original time order,
              gate columns ordered (i, f, o, g).
    whh_ref : (H, 4H) recurrent weights for this direction (same column order).
    out_ref : (TC, B, H) hidden outputs for this chunk's time block.
    hn_ref, cn_ref : (B, H) final state for this direction (written on last chunk).
    h_sc, c_sc     : (B, H) fp32 recurrent state scratch (carried across grid steps).
    """
    d = pl.program_id(0)              # 0 = forward, 1 = backward
    tc = pl.program_id(1)
    n_chunks = pl.num_programs(1)
    TC = out_ref.shape[0]
    H = h_sc.shape[-1]

    @pl.when(tc == 0)
    def _init():
        h_sc[...] = jnp.zeros_like(h_sc)
        c_sc[...] = jnp.zeros_like(c_sc)

    def step(j, carry):
        # forward walks rows 0..TC-1; backward walks TC-1..0 (original time descending)
        row = j * (1 - 2 * d) + d * (TC - 1)
        gates = g_ref[row] + jnp.dot(h_sc[...].astype(whh_ref.dtype), whh_ref[...],
                                     preferred_element_type=jnp.float32)
        sig = jax.nn.sigmoid(gates[:, :3 * H])        # (i, f, o) in one contiguous slab
        i_g = sig[:, 0 * H:1 * H]
        f_g = sig[:, 1 * H:2 * H]
        o_g = sig[:, 2 * H:3 * H]
        g_g = jnp.tanh(gates[:, 3 * H:])
        c_new = f_g * c_sc[...] + i_g * g_g
        h_new = o_g * jnp.tanh(c_new)
        c_sc[...] = c_new
        h_sc[...] = h_new
        out_ref[row] = h_new.astype(out_ref.dtype)
        return carry

    jax.lax.fori_loop(0, TC, step, 0, unroll=True)

    @pl.when(tc == n_chunks - 1)
    def _finalize():
        hn_ref[...] = h_sc[...]
        cn_ref[...] = c_sc[...]


# ------------------------------ JAX wrapper -------------------------------- #
def _largest_divisor_at_most(n, cap):
    best = 1
    for c in range(1, min(n, cap) + 1):
        if n % c == 0:
            best = c
    return best


def encoder_rnn_vfeat(x_btd, params, *, time_chunk=8, compute_dtype=jnp.float32):
    """Replicates EncoderRNN_VFeat.forward.

    x_btd: (B, T, D) float32
    returns: output (T, B, 2H), (hidden_n (1, B, 2H), cell_n (1, B, 2H))
    """
    B, T, D = x_btd.shape
    H = params["w_hh_f"].shape[0]
    hp = jax.lax.Precision.HIGHEST
    x_tbd = jnp.transpose(x_btd, (1, 0, 2))            # == input.permute(1, 0, 2)

    # gate-column reorder (i, f, g, o) -> (i, f, o, g): one sigmoid slab + one tanh slab.
    def reorder(w):
        return jnp.concatenate(
            [w[..., :2 * H], w[..., 3 * H:4 * H], w[..., 2 * H:3 * H]], axis=-1)

    w_ih = jnp.stack([reorder(params["w_ih_f"]), reorder(params["w_ih_b"])])   # (2, D, 4H)
    w_hh = jnp.stack([reorder(params["w_hh_f"]), reorder(params["w_hh_b"])])   # (2, H, 4H)
    bias = jnp.stack([reorder(params["b_f"]), reorder(params["b_b"])])         # (2, 1, 4H)

    # Hoisted input projection: one big GEMM per direction (T*B, D) @ (D, 4H), fp32 acc.
    gx = jnp.einsum("tbd,zdh->ztbh",
                    x_tbd.astype(compute_dtype), w_ih.astype(compute_dtype),
                    precision=hp, preferred_element_type=jnp.float32)
    gx = gx + bias[:, None]                                                    # (2, T, B, 4H)

    w_hh = w_hh.astype(compute_dtype)   # matmul operand dtype; state stays fp32 in-kernel

    TC = _largest_divisor_at_most(T, time_chunk)
    n_chunks = T // TC
    fused = (H % 128 == 0)              # lane-dense fused (T, B, 2H) store path

    def _tb(d, tc):                     # time-block index for direction d at grid step tc
        return d * (n_chunks - 1 - 2 * tc) + tc       # d=0 -> tc ; d=1 -> n_chunks-1-tc

    gates_spec = pl.BlockSpec((None, TC, B, 4 * H), lambda d, tc: (d, _tb(d, tc), 0, 0))
    # w_hh is the only resident weight left; its index_map is constant along tc so it is
    # only DMA'd when the direction changes (default double buffering is cheap here).
    whh_spec = pl.BlockSpec((None, H, 4 * H), lambda d, tc: (d, 0, 0))

    if fused:
        out_shape0 = jax.ShapeDtypeStruct((T, B, 2 * H), jnp.float32)
        out_spec0 = pl.BlockSpec((TC, B, H), lambda d, tc: (_tb(d, tc), 0, d))
    else:
        out_shape0 = jax.ShapeDtypeStruct((2, T, B, H), jnp.float32)
        out_spec0 = pl.BlockSpec((None, TC, B, H), lambda d, tc: (d, _tb(d, tc), 0, 0))

    state_spec = pl.BlockSpec((None, B, H), lambda d, tc: (d, 0, 0))

    kernel = pl.pallas_call(
        _bilstm_chunk_kernel,
        out_shape=(out_shape0,
                   jax.ShapeDtypeStruct((2, B, H), jnp.float32),    # h_n (fwd, bwd)
                   jax.ShapeDtypeStruct((2, B, H), jnp.float32)),   # c_n (fwd, bwd)
        grid_spec=pltpu.PrefetchScalarGridSpec(
            num_scalar_prefetch=0,
            grid=(2, n_chunks),                   # (direction, time chunks)
            in_specs=[gates_spec, whh_spec],
            out_specs=(out_spec0, state_spec, state_spec),
            scratch_shapes=[pltpu.VMEM((B, H), jnp.float32),        # h state (fp32)
                            pltpu.VMEM((B, H), jnp.float32)],       # c state (fp32)
        ),
        compiler_params=pltpu.CompilerParams(
            # direction axis independent (2x on v7x dual TC); time axis is the recurrence.
            dimension_semantics=("parallel", "arbitrary"),
            vmem_limit_bytes=32 * 1024 * 1024),   # raise further for large D/H/TC
    )

    out0, hn, cn = kernel(gx, w_hh)

    if fused:
        output = out0                                               # (T, B, 2H) already
    else:
        output = jnp.concatenate([out0[0], out0[1]], axis=-1)       # fallback path

    hidden_n = jnp.concatenate([hn[0], hn[1]], axis=-1)[None]       # (1, B, 2H)
    cell_n = jnp.concatenate([cn[0], cn[1]], axis=-1)[None]         # (1, B, 2H)
    return output, (hidden_n, cell_n)


# ------------------------- deterministic parameters ------------------------ #
def init_params(key, input_dim, enc_hid_dim):
    """PyTorch nn.LSTM default init: uniform(-1/sqrt(H), 1/sqrt(H)); gate order (i,f,g,o)."""
    k = 1.0 / math.sqrt(enc_hid_dim)
    names = ["w_ih_f", "w_hh_f", "b_ih_f", "b_hh_f",
             "w_ih_b", "w_hh_b", "b_ih_b", "b_hh_b"]
    shapes = [(input_dim, 4 * enc_hid_dim), (enc_hid_dim, 4 * enc_hid_dim),
              (1, 4 * enc_hid_dim), (1, 4 * enc_hid_dim)] * 2
    keys = jax.random.split(key, len(names))
    raw = {n: jax.random.uniform(kk, s, jnp.float32, minval=-k, maxval=k)
           for n, s, kk in zip(names, shapes, keys)}
    # Fold b_ih + b_hh into a single bias per direction (exact same math).
    return {
        "w_ih_f": raw["w_ih_f"], "w_hh_f": raw["w_hh_f"],
        "b_f": raw["b_ih_f"] + raw["b_hh_f"],
        "w_ih_b": raw["w_ih_b"], "w_hh_b": raw["w_hh_b"],
        "b_b": raw["b_ih_b"] + raw["b_hh_b"],
    }


# --------------------------- pure-JAX reference ---------------------------- #
def _lstm_scan_ref(x_tbd, w_ih, w_hh, b):
    T, B, D = x_tbd.shape
    H = w_hh.shape[0]
    hp = jax.lax.Precision.HIGHEST

    def step(carry, x_t):
        h, c = carry
        gates = (jnp.dot(x_t, w_ih, precision=hp)
                 + jnp.dot(h, w_hh, precision=hp) + b)
        i, f, g, o = jnp.split(gates, 4, axis=-1)
        c = jax.nn.sigmoid(f) * c + jax.nn.sigmoid(i) * jnp.tanh(g)
        h = jax.nn.sigmoid(o) * jnp.tanh(c)
        return (h, c), h

    init = (jnp.zeros((B, H), jnp.float32), jnp.zeros((B, H), jnp.float32))
    (hT, cT), hs = jax.lax.scan(step, init, x_tbd)
    return hs, hT, cT


def encoder_rnn_vfeat_ref(x_btd, params):
    x_tbd = jnp.transpose(x_btd, (1, 0, 2))
    hs_f, hT_f, cT_f = _lstm_scan_ref(x_tbd, params["w_ih_f"], params["w_hh_f"], params["b_f"])
    hs_b, hT_b, cT_b = _lstm_scan_ref(x_tbd[::-1], params["w_ih_b"], params["w_hh_b"], params["b_b"])
    output = jnp.concatenate([hs_f, hs_b[::-1]], axis=-1)
    hidden_n = jnp.concatenate([hT_f, hT_b], axis=-1)[None]
    cell_n = jnp.concatenate([cT_f, cT_b], axis=-1)[None]
    return output, (hidden_n, cell_n)


# ----------------------------------- main ---------------------------------- #
if __name__ == "__main__":
    key = jax.random.PRNGKey(0)

    # ---- aligned config (B % 8 == 0, H % 128 == 0): fused lane-dense output path ----
    B, T, D, H = 8, 16, 64, 128
    k_x, k_p, key = jax.random.split(key, 3)
    x = jax.random.normal(k_x, (B, T, D), jnp.float32)
    params = init_params(k_p, D, H)

    out, (h_n, c_n) = encoder_rnn_vfeat(x, params, time_chunk=8)
    jax.block_until_ready((out, h_n, c_n))

    out_r, (h_r, c_r) = encoder_rnn_vfeat_ref(x, params)
    np.testing.assert_allclose(np.asarray(out), np.asarray(out_r), rtol=1e-4, atol=1e-4)
    np.testing.assert_allclose(np.asarray(h_n), np.asarray(h_r), rtol=1e-4, atol=1e-4)
    np.testing.assert_allclose(np.asarray(c_n), np.asarray(c_r), rtol=1e-4, atol=1e-4)
    assert out.shape == (T, B, 2 * H)
    assert h_n.shape == (1, B, 2 * H) and c_n.shape == (1, B, 2 * H)

    # bf16 matmul operands / fp32 accumulation + state (v6e / v7x recommendation).
    out_bf, (h_bf, c_bf) = encoder_rnn_vfeat(x, params, time_chunk=8,
                                             compute_dtype=jnp.bfloat16)
    jax.block_until_ready((out_bf, h_bf, c_bf))
    np.testing.assert_allclose(np.asarray(out_bf), np.asarray(out_r), rtol=5e-2, atol=5e-2)

    # ---- small unaligned config (exercises the non-fused output fallback) ----
    B2, T2, D2, H2 = 2, 8, 16, 32
    k_x2, k_p2, key = jax.random.split(key, 3)
    x2 = jax.random.normal(k_x2, (B2, T2, D2), jnp.float32)
    params2 = init_params(k_p2, D2, H2)
    out2, (h2, c2) = encoder_rnn_vfeat(x2, params2, time_chunk=4)
    jax.block_until_ready((out2, h2, c2))
    out2_r, (h2_r, c2_r) = encoder_rnn_vfeat_ref(x2, params2)
    np.testing.assert_allclose(np.asarray(out2), np.asarray(out2_r), rtol=1e-4, atol=1e-4)
    np.testing.assert_allclose(np.asarray(h2), np.asarray(h2_r), rtol=1e-4, atol=1e-4)
    np.testing.assert_allclose(np.asarray(c2), np.asarray(c2_r), rtol=1e-4, atol=1e-4)
    assert out2.shape == (T2, B2, 2 * H2)

    print("KERNEL_OK")
</pallas_src>

<mosaic_0001>
module attributes {stable_mosaic.version = 11 : i64} {
  func.func @_bilstm_chunk_kernel(%arg0: i32, %arg1: i32, %arg2: memref<1x8x8x512xf32, #tpu.memory_space<vmem>>, %arg3: memref<1x128x512xf32, #tpu.memory_space<vmem>>, %arg4: memref<8x8x128xf32, #tpu.memory_space<vmem>>, %arg5: memref<1x8x128xf32, #tpu.memory_space<vmem>>, %arg6: memref<1x8x128xf32, #tpu.memory_space<vmem>>, %arg7: memref<8x128xf32, #tpu.memory_space<vmem>>, %arg8: memref<8x128xf32, #tpu.memory_space<vmem>>) attributes {dimension_semantics = [#tpu.dimension_semantics<parallel>, #tpu.dimension_semantics<arbitrary>], iteration_bounds = array<i64: 2, 2>, scalar_prefetch = 0 : i64, scratch_operands = 2 : i64, tpu.core_type = #tpu.core_type<tc>, window_params = [{transform_indices = @transform_0, window_bounds = array<i64: 1, 8, 8, 512>}, {transform_indices = @transform_1, window_bounds = array<i64: 1, 128, 512>}, {transform_indices = @transform_2, window_bounds = array<i64: 8, 8, 128>}, {transform_indices = @transform_3, window_bounds = array<i64: 1, 8, 128>}, {transform_indices = @transform_4, window_bounds = array<i64: 1, 8, 128>}]} {
    %c0_i32 = arith.constant 0 : i32
    %0 = arith.cmpi eq, %arg1, %c0_i32 : i32
    %1 = arith.extui %0 : i1 to i32
    %c0_i32_0 = arith.constant 0 : i32
    %2 = arith.cmpi ne, %1, %c0_i32_0 : i32
    scf.if %2 {
      %cst_170 = arith.constant 0.000000e+00 : f32
      %294 = vector.broadcast %cst_170 : f32 to vector<8x128xf32>
      %c0_171 = arith.constant 0 : index
      %c0_172 = arith.constant 0 : index
      %295 = vector.load %arg7[%c0_171, %c0_172] : memref<8x128xf32, #tpu.memory_space<vmem>>, vector<8x128xf32>
      tpu.vector_store %arg7[%c0_171, %c0_172], %294 {strides = array<i32>} : memref<8x128xf32, #tpu.memory_space<vmem>>, vector<8x128xf32>,
      %cst_173 = arith.constant 0.000000e+00 : f32
      %296 = vector.broadcast %cst_173 : f32 to vector<8x128xf32>
      %c0_174 = arith.constant 0 : index
      %c0_175 = arith.constant 0 : index
      %297 = vector.load %arg8[%c0_174, %c0_175] : memref<8x128xf32, #tpu.memory_space<vmem>>, vector<8x128xf32>
      tpu.vector_store %arg8[%c0_174, %c0_175], %296 {strides = array<i32>} : memref<8x128xf32, #tpu.memory_space<vmem>>, vector<8x128xf32>,
    } else {
    }
    %c0_i32_1 = arith.constant 0 : i32
    %c2_i32 = arith.constant 2 : i32
    %3 = arith.muli %c2_i32, %arg0 : i32
    %c1_i32 = arith.constant 1 : i32
    %4 = arith.subi %c1_i32, %3 : i32
    %5 = arith.muli %c0_i32_1, %4 : i32
    %c7_i32 = arith.constant 7 : i32
    %6 = arith.muli %arg0, %c7_i32 : i32
    %7 = arith.addi %5, %6 : i32
    %c0 = arith.constant 0 : index
    %8 = arith.index_cast %7 : i32 to index
    %c0_2 = arith.constant 0 : index
    %c0_3 = arith.constant 0 : index
    %9 = vector.load %arg2[%c0, %8, %c0_2, %c0_3] : memref<1x8x8x512xf32, #tpu.memory_space<vmem>>, vector<1x1x8x512xf32>
    %10 = vector.shape_cast %9 : vector<1x1x8x512xf32> to vector<8x512xf32>
    %c0_4 = arith.constant 0 : index
    %c0_5 = arith.constant 0 : index
    %11 = vector.load %arg7[%c0_4, %c0_5] : memref<8x128xf32, #tpu.memory_space<vmem>>, vector<8x128xf32>
    %c0_6 = arith.constant 0 : index
    %c0_7 = arith.constant 0 : index
    %c0_8 = arith.constant 0 : index
    %12 = vector.load %arg3[%c0_6, %c0_7, %c0_8] : memref<1x128x512xf32, #tpu.memory_space<vmem>>, vector<1x128x512xf32>
    %13 = vector.shape_cast %12 : vector<1x128x512xf32> to vector<128x512xf32>
    %cst = arith.constant dense<0.000000e+00> : vector<8x512xf32>
    %14 = tpu.matmul %11, %13, %cst {dimension_numbers = #tpu.dot_dimension_numbers<[1], [0], [0], [1], [0, 0, 1, 1], [], []>} : vector<8x128xf32>, vector<128x512xf32>, vector<8x512xf32> -> vector<8x512xf32>
    %15 = arith.addf %10, %14 : vector<8x512xf32>
    %16 = vector.extract_strided_slice %15 {offsets = [0, 0], sizes = [8, 384], strides = [1, 1]} : vector<8x512xf32> to vector<8x384xf32>
    %17 = arith.negf %16 : vector<8x384xf32>
    %18 = math.exp %17 : vector<8x384xf32>
    %cst_9 = arith.constant 1.000000e+00 : f32
    %19 = vector.broadcast %cst_9 : f32 to vector<8x384xf32>
    %20 = arith.addf %19, %18 : vector<8x384xf32>
    %21 = arith.divf %19, %20 : vector<8x384xf32>
    %22 = vector.extract_strided_slice %21 {offsets = [0, 0], sizes = [8, 128], strides = [1, 1]} : vector<8x384xf32> to vector<8x128xf32>
    %23 = vector.extract_strided_slice %21 {offsets = [0, 128], sizes = [8, 128], strides = [1, 1]} : vector<8x384xf32> to vector<8x128xf32>
    %24 = vector.extract_strided_slice %21 {offsets = [0, 256], sizes = [8, 128], strides = [1, 1]} : vector<8x384xf32> to vector<8x128xf32>
    %25 = vector.extract_strided_slice %15 {offsets = [0, 384], sizes = [8, 128], strides = [1, 1]} : vector<8x512xf32> to vector<8x128xf32>
    %26 = math.tanh %25 : vector<8x128xf32>
    %c0_10 = arith.constant 0 : index
    %c0_11 = arith.constant 0 : index
    %27 = vector.load %arg8[%c0_10, %c0_11] : memref<8x128xf32, #tpu.memory_space<vmem>>, vector<8x128xf32>
    %28 = arith.mulf %23, %27 : vector<8x128xf32>
    %29 = arith.mulf %22, %26 : vector<8x128xf32>
    %30 = arith.addf %28, %29 : vector<8x128xf32>
    %31 = math.tanh %30 : vector<8x128xf32>
    %32 = arith.mulf %24, %31 : vector<8x128xf32>
    %c0_12 = arith.constant 0 : index
    %c0_13 = arith.constant 0 : index
    %33 = vector.load %arg8[%c0_12, %c0_13] : memref<8x128xf32, #tpu.memory_space<vmem>>, vector<8x128xf32>
    tpu.vector_store %arg8[%c0_12, %c0_13], %30 {strides = array<i32>} : memref<8x128xf32, #tpu.memory_space<vmem>>, vector<8x128xf32>,
    %c0_14 = arith.constant 0 : index
    %c0_15 = arith.constant 0 : index
    %34 = vector.load %arg7[%c0_14, %c0_15] : memref<8x128xf32, #tpu.memory_space<vmem>>, vector<8x128xf32>
    tpu.vector_store %arg7[%c0_14, %c0_15], %32 {strides = array<i32>} : memref<8x128xf32, #tpu.memory_space<vmem>>, vector<8x128xf32>,
    %35 = arith.index_cast %7 : i32 to index
    %c0_16 = arith.constant 0 : index
    %c0_17 = arith.constant 0 : index
    %36 = vector.load %arg4[%35, %c0_16, %c0_17] : memref<8x8x128xf32, #tpu.memory_space<vmem>>, vector<1x8x128xf32>
    %37 = vector.shape_cast %36 : vector<1x8x128xf32> to vector<8x128xf32>
    %38 = vector.shape_cast %32 : vector<8x128xf32> to vector<1x8x128xf32>
    tpu.vector_store %arg4[%35, %c0_16, %c0_17], %38 {strides = array<i32>} : memref<8x8x128xf32, #tpu.memory_space<vmem>>, vector<1x8x128xf32>,
    %c1_i32_18 = arith.constant 1 : i32
    %c2_i32_19 = arith.constant 2 : i32
    %39 = arith.muli %c2_i32_19, %arg0 : i32
    %c1_i32_20 = arith.constant 1 : i32
    %40 = arith.subi %c1_i32_20, %39 : i32
    %41 = arith.muli %c1_i32_18, %40 : i32
    %c7_i32_21 = arith.constant 7 : i32
    %42 = arith.muli %arg0, %c7_i32_21 : i32
    %43 = arith.addi %41, %42 : i32
    %c0_22 = arith.constant 0 : index
    %44 = arith.index_cast %43 : i32 to index
    %c0_23 = arith.constant 0 : index
    %c0_24 = arith.constant 0 : index
    %45 = vector.load %arg2[%c0_22, %44, %c0_23, %c0_24] : memref<1x8x8x512xf32, #tpu.memory_space<vmem>>, vector<1x1x8x512xf32>
    %46 = vector.shape_cast %45 : vector<1x1x8x512xf32> to vector<8x512xf32>
    %c0_25 = arith.constant 0 : index
    %c0_26 = arith.constant 0 : index
    %47 = vector.load %arg7[%c0_25, %c0_26] : memref<8x128xf32, #tpu.memory_space<vmem>>, vector<8x128xf32>
    %c0_27 = arith.constant 0 : index
    %c0_28 = arith.constant 0 : index
    %c0_29 = arith.constant 0 : index
    %48 = vector.load %arg3[%c0_27, %c0_28, %c0_29] : memref<1x128x512xf32, #tpu.memory_space<vmem>>, vector<1x128x512xf32>
    %49 = vector.shape_cast %48 : vector<1x128x512xf32> to vector<128x512xf32>
    %cst_30 = arith.constant dense<0.000000e+00> : vector<8x512xf32>
    %50 = tpu.matmul %47, %49, %cst_30 {dimension_numbers = #tpu.dot_dimension_numbers<[1], [0], [0], [1], [0, 0, 1, 1], [], []>} : vector<8x128xf32>, vector<128x512xf32>, vector<8x512xf32> -> vector<8x512xf32>
    %51 = arith.addf %46, %50 : vector<8x512xf32>
    %52 = vector.extract_strided_slice %51 {offsets = [0, 0], sizes = [8, 384], strides = [1, 1]} : vector<8x512xf32> to vector<8x384xf32>
    %53 = arith.negf %52 : vector<8x384xf32>
    %54 = math.exp %53 : vector<8x384xf32>
    %cst_31 = arith.constant 1.000000e+00 : f32
    %55 = vector.broadcast %cst_31 : f32 to vector<8x384xf32>
    %56 = arith.addf %55, %54 : vector<8x384xf32>
    %57 = arith.divf %55, %56 : vector<8x384xf32>
    %58 = vector.extract_strided_slice %57 {offsets = [0, 0], sizes = [8, 128], strides = [1, 1]} : vector<8x384xf32> to vector<8x128xf32>
    %59 = vector.extract_strided_slice %57 {offsets = [0, 128], sizes = [8, 128], strides = [1, 1]} : vector<8x384xf32> to vector<8x128xf32>
    %60 = vector.extract_strided_slice %57 {offsets = [0, 256], sizes = [8, 128], strides = [1, 1]} : vector<8x384xf32> to vector<8x128xf32>
    %61 = vector.extract_strided_slice %51 {offsets = [0, 384], sizes = [8, 128], strides = [1, 1]} : vector<8x512xf32> to vector<8x128xf32>
    %62 = math.tanh %61 : vector<8x128xf32>
    %c0_32 = arith.constant 0 : index
    %c0_33 = arith.constant 0 : index
    %63 = vector.load %arg8[%c0_32, %c0_33] : memref<8x128xf32, #tpu.memory_space<vmem>>, vector<8x128xf32>
    %64 = arith.mulf %59, %63 : vector<8x128xf32>
    %65 = arith.mulf %58, %62 : vector<8x128xf32>
    %66 = arith.addf %64, %65 : vector<8x128xf32>
    %67 = math.tanh %66 : vector<8x128xf32>
    %68 = arith.mulf %60, %67 : vector<8x128xf32>
    %c0_34 = arith.constant 0 : index
    %c0_35 = arith.constant 0 : index
    %69 = vector.load %arg8[%c0_34, %c0_35] : memref<8x128xf32, #tpu.memory_space<vmem>>, vector<8x128xf32>
    tpu.vector_store %arg8[%c0_34, %c0_35], %66 {strides = array<i32>} : memref<8x128xf32, #tpu.memory_space<vmem>>, vector<8x128xf32>,
    %c0_36 = arith.constant 0 : index
    %c0_37 = arith.constant 0 : index
    %70 = vector.load %arg7[%c0_36, %c0_37] : memref<8x128xf32, #tpu.memory_space<vmem>>, vector<8x128xf32>
    tpu.vector_store %arg7[%c0_36, %c0_37], %68 {strides = array<i32>} : memref<8x128xf32, #tpu.memory_space<vmem>>, vector<8x128xf32>,
    %71 = arith.index_cast %43 : i32 to index
    %c0_38 = arith.constant 0 : index
    %c0_39 = arith.constant 0 : index
    %72 = vector.load %arg4[%71, %c0_38, %c0_39] : memref<8x8x128xf32, #tpu.memory_space<vmem>>, vector<1x8x128xf32>
    %73 = vector.shape_cast %72 : vector<1x8x128xf32> to vector<8x128xf32>
    %74 = vector.shape_cast %68 : vector<8x128xf32> to vector<1x8x128xf32>
    tpu.vector_store %arg4[%71, %c0_38, %c0_39], %74 {strides = array<i32>} : memref<8x8x128xf32, #tpu.memory_space<vmem>>, vector<1x8x128xf32>,
    %c2_i32_40 = arith.constant 2 : i32
    %c2_i32_41 = arith.constant 2 : i32
    %75 = arith.muli %c2_i32_41, %arg0 : i32
    %c1_i32_42 = arith.constant 1 : i32
    %76 = arith.subi %c1_i32_42, %75 : i32
    %77 = arith.muli %c2_i32_40, %76 : i32
    %c7_i32_43 = arith.constant 7 : i32
    %78 = arith.muli %arg0, %c7_i32_43 : i32
    %79 = arith.addi %77, %78 : i32
    %c0_44 = arith.constant 0 : index
    %80 = arith.index_cast %79 : i32 to index
    %c0_45 = arith.constant 0 : index
    %c0_46 = arith.constant 0 : index
    %81 = vector.load %arg2[%c0_44, %80, %c0_45, %c0_46] : memref<1x8x8x512xf32, #tpu.memory_space<vmem>>, vector<1x1x8x512xf32>
    %82 = vector.shape_cast %81 : vector<1x1x8x512xf32> to vector<8x512xf32>
    %c0_47 = arith.constant 0 : index
    %c0_48 = arith.constant 0 : index
    %83 = vector.load %arg7[%c0_47, %c0_48] : memref<8x128xf32, #tpu.memory_space<vmem>>, vector<8x128xf32>
    %c0_49 = arith.constant 0 : index
    %c0_50 = arith.constant 0 : index
    %c0_51 = arith.constant 0 : index
    %84 = vector.load %arg3[%c0_49, %c0_50, %c0_51] : memref<1x128x512xf32, #tpu.memory_space<vmem>>, vector<1x128x512xf32>
    %85 = vector.shape_cast %84 : vector<1x128x512xf32> to vector<128x512xf32>
    %cst_52 = arith.constant dense<0.000000e+00> : vector<8x512xf32>
    %86 = tpu.matmul %83, %85, %cst_52 {dimension_numbers = #tpu.dot_dimension_numbers<[1], [0], [0], [1], [0, 0, 1, 1], [], []>} : vector<8x128xf32>, vector<128x512xf32>, vector<8x512xf32> -> vector<8x512xf32>
    %87 = arith.addf %82, %86 : vector<8x512xf32>
    %88 = vector.extract_strided_slice %87 {offsets = [0, 0], sizes = [8, 384], strides = [1, 1]} : vector<8x512xf32> to vector<8x384xf32>
    %89 = arith.negf %88 : vector<8x384xf32>
    %90 = math.exp %89 : vector<8x384xf32>
    %cst_53 = arith.constant 1.000000e+00 : f32
    %91 = vector.broadcast %cst_53 : f32 to vector<8x384xf32>
    %92 = arith.addf %91, %90 : vector<8x384xf32>
    %93 = arith.divf %91, %92 : vector<8x384xf32>
    %94 = vector.extract_strided_slice %93 {offsets = [0, 0], sizes = [8, 128], strides = [1, 1]} : vector<8x384xf32> to vector<8x128xf32>
    %95 = vector.extract_strided_slice %93 {offsets = [0, 128], sizes = [8, 128], strides = [1, 1]} : vector<8x384xf32> to vector<8x128xf32>
    %96 = vector.extract_strided_slice %93 {offsets = [0, 256], sizes = [8, 128], strides = [1, 1]} : vector<8x384xf32> to vector<8x128xf32>
    %97 = vector.extract_strided_slice %87 {offsets = [0, 384], sizes = [8, 128], strides = [1, 1]} : vector<8x512xf32> to vector<8x128xf32>
    %98 = math.tanh %97 : vector<8x128xf32>
    %c0_54 = arith.constant 0 : index
    %c0_55 = arith.constant 0 : index
    %99 = vector.load %arg8[%c0_54, %c0_55] : memref<8x128xf32, #tpu.memory_space<vmem>>, vector<8x128xf32>
    %100 = arith.mulf %95, %99 : vector<8x128xf32>
    %101 = arith.mulf %94, %98 : vector<8x128xf32>
    %102 = arith.addf %100, %101 : vector<8x128xf32>
    %103 = math.tanh %102 : vector<8x128xf32>
    %104 = arith.mulf %96, %103 : vector<8x128xf32>
    %c0_56 = arith.constant 0 : index
    %c0_57 = arith.constant 0 : index
    %105 = vector.load %arg8[%c0_56, %c0_57] : memref<8x128xf32, #tpu.memory_space<vmem>>, vector<8x128xf32>
    tpu.vector_store %arg8[%c0_56, %c0_57], %102 {strides = array<i32>} : memref<8x128xf32, #tpu.memory_space<vmem>>, vector<8x128xf32>,
    %c0_58 = arith.constant 0 : index
    %c0_59 = arith.constant 0 : index
    %106 = vector.load %arg7[%c0_58, %c0_59] : memref<8x128xf32, #tpu.memory_space<vmem>>, vector<8x128xf32>
    tpu.vector_store %arg7[%c0_58, %c0_59], %104 {strides = array<i32>} : memref<8x128xf32, #tpu.memory_space<vmem>>, vector<8x128xf32>,
    %107 = arith.index_cast %79 : i32 to index
    %c0_60 = arith.constant 0 : index
    %c0_61 = arith.constant 0 : index
    %108 = vector.load %arg4[%107, %c0_60, %c0_61] : memref<8x8x128xf32, #tpu.memory_space<vmem>>, vector<1x8x128xf32>
    %109 = vector.shape_cast %108 : vector<1x8x128xf32> to vector<8x128xf32>
    %110 = vector.shape_cast %104 : vector<8x128xf32> to vector<1x8x128xf32>
    tpu.vector_store %arg4[%107, %c0_60, %c0_61], %110 {strides = array<i32>} : memref<8x8x128xf32, #tpu.memory_space<vmem>>, vector<1x8x128xf32>,
    %c3_i32 = arith.constant 3 : i32
    %c2_i32_62 = arith.constant 2 : i32
    %111 = arith.muli %c2_i32_62, %arg0 : i32
    %c1_i32_63 = arith.constant 1 : i32
    %112 = arith.subi %c1_i32_63, %111 : i32
    %113 = arith.muli %c3_i32, %112 : i32
    %c7_i32_64 = arith.constant 7 : i32
    %114 = arith.muli %arg0, %c7_i32_64 : i32
    %115 = arith.addi %113, %114 : i32
    %c0_65 = arith.constant 0 : index
    %116 = arith.index_cast %115 : i32 to index
    %c0_66 = arith.constant 0 : index
    %c0_67 = arith.constant 0 : index
    %117 = vector.load %arg2[%c0_65, %116, %c0_66, %c0_67] : memref<1x8x8x512xf32, #tpu.memory_space<vmem>>, vector<1x1x8x512xf32>
    %118 = vector.shape_cast %117 : vector<1x1x8x512xf32> to vector<8x512xf32>
    %c0_68 = arith.constant 0 : index
    %c0_69 = arith.constant 0 : index
    %119 = vector.load %arg7[%c0_68, %c0_69] : memref<8x128xf32, #tpu.memory_space<vmem>>, vector<8x128xf32>
    %c0_70 = arith.constant 0 : index
    %c0_71 = arith.constant 0 : index
    %c0_72 = arith.constant 0 : index
    %120 = vector.load %arg3[%c0_70, %c0_71, %c0_72] : memref<1x128x512xf32, #tpu.memory_space<vmem>>, vector<1x128x512xf32>
    %121 = vector.shape_cast %120 : vector<1x128x512xf32> to vector<128x512xf32>
    %cst_73 = arith.constant dense<0.000000e+00> : vector<8x512xf32>
    %122 = tpu.matmul %119, %121, %cst_73 {dimension_numbers = #tpu.dot_dimension_numbers<[1], [0], [0], [1], [0, 0, 1, 1], [], []>} : vector<8x128xf32>, vector<128x512xf32>, vector<8x512xf32> -> vector<8x512xf32>
    %123 = arith.addf %118, %122 : vector<8x512xf32>
    %124 = vector.extract_strided_slice %123 {offsets = [0, 0], sizes = [8, 384], strides = [1, 1]} : vector<8x512xf32> to vector<8x384xf32>
    %125 = arith.negf %124 : vector<8x384xf32>
    %126 = math.exp %125 : vector<8x384xf32>
    %cst_74 = arith.constant 1.000000e+00 : f32
    %127 = vector.broadcast %cst_74 : f32 to vector<8x384xf32>
    %128 = arith.addf %127, %126 : vector<8x384xf32>
    %129 = arith.divf %127, %128 : vector<8x384xf32>
    %130 = vector.extract_strided_slice %129 {offsets = [0, 0], sizes = [8, 128], strides = [1, 1]} : vector<8x384xf32> to vector<8x128xf32>
    %131 = vector.extract_strided_slice %129 {offsets = [0, 128], sizes = [8, 128], strides = [1, 1]} : vector<8x384xf32> to vector<8x128xf32>
    %132 = vector.extract_strided_slice %129 {offsets = [0, 256], sizes = [8, 128], strides = [1, 1]} : vector<8x384xf32> to vector<8x128xf32>
    %133 = vector.extract_strided_slice %123 {offsets = [0, 384], sizes = [8, 128], strides = [1, 1]} : vector<8x512xf32> to vector<8x128xf32>
    %134 = math.tanh %133 : vector<8x128xf32>
    %c0_75 = arith.constant 0 : index
    %c0_76 = arith.constant 0 : index
    %135 = vector.load %arg8[%c0_75, %c0_76] : memref<8x128xf32, #tpu.memory_space<vmem>>, vector<8x128xf32>
    %136 = arith.mulf %131, %135 : vector<8x128xf32>
    %137 = arith.mulf %130, %134 : vector<8x128xf32>
    %138 = arith.addf %136, %137 : vector<8x128xf32>
    %139 = math.tanh %138 : vector<8x128xf32>
    %140 = arith.mulf %132, %139 : vector<8x128xf32>
    %c0_77 = arith.constant 0 : index
    %c0_78 = arith.constant 0 : index
    %141 = vector.load %arg8[%c0_77, %c0_78] : memref<8x128xf32, #tpu.memory_space<vmem>>, vector<8x128xf32>
    tpu.vector_store %arg8[%c0_77, %c0_78], %138 {strides = array<i32>} : memref<8x128xf32, #tpu.memory_space<vmem>>, vector<8x128xf32>,
    %c0_79 = arith.constant 0 : index
    %c0_80 = arith.constant 0 : index
    %142 = vector.load %arg7[%c0_79, %c0_80] : memref<8x128xf32, #tpu.memory_space<vmem>>, vector<8x128xf32>
    tpu.vector_store %arg7[%c0_79, %c0_80], %140 {strides = array<i32>} : memref<8x128xf32, #tpu.memory_space<vmem>>, vector<8x128xf32>,
    %143 = arith.index_cast %115 : i32 to index
    %c0_81 = arith.constant 0 : index
    %c0_82 = arith.constant 0 : index
    %144 = vector.load %arg4[%143, %c0_81, %c0_82] : memref<8x8x128xf32, #tpu.memory_space<vmem>>, vector<1x8x128xf32>
    %145 = vector.shape_cast %144 : vector<1x8x128xf32> to vector<8x128xf32>
    %146 = vector.shape_cast %140 : vector<8x128xf32> to vector<1x8x128xf32>
    tpu.vector_store %arg4[%143, %c0_81, %c0_82], %146 {strides = array<i32>} : memref<8x8x128xf32, #tpu.memory_space<vmem>>, vector<1x8x128xf32>,
    %c4_i32 = arith.constant 4 : i32
    %c2_i32_83 = arith.constant 2 : i32
    %147 = arith.muli %c2_i32_83, %arg0 : i32
    %c1_i32_84 = arith.constant 1 : i32
    %148 = arith.subi %c1_i32_84, %147 : i32
    %149 = arith.muli %c4_i32, %148 : i32
    %c7_i32_85 = arith.constant 7 : i32
    %150 = arith.muli %arg0, %c7_i32_85 : i32
    %151 = arith.addi %149, %150 : i32
    %c0_86 = arith.constant 0 : index
    %152 = arith.index_cast %151 : i32 to index
    %c0_87 = arith.constant 0 : index
    %c0_88 = arith.constant 0 : index
    %153 = vector.load %arg2[%c0_86, %152, %c0_87, %c0_88] : memref<1x8x8x512xf32, #tpu.memory_space<vmem>>, vector<1x1x8x512xf32>
    %154 = vector.shape_cast %153 : vector<1x1x8x512xf32> to vector<8x512xf32>
    %c0_89 = arith.constant 0 : index
    %c0_90 = arith.constant 0 : index
    %155 = vector.load %arg7[%c0_89, %c0_90] : memref<8x128xf32, #tpu.memory_space<vmem>>, vector<8x128xf32>
    %c0_91 = arith.constant 0 : index
    %c0_92 = arith.constant 0 : index
    %c0_93 = arith.constant 0 : index
    %156 = vector.load %arg3[%c0_91, %c0_92, %c0_93] : memref<1x128x512xf32, #tpu.memory_space<vmem>>, vector<1x128x512xf32>
    %157 = vector.shape_cast %156 : vector<1x128x512xf32> to vector<128x512xf32>
    %cst_94 = arith.constant dense<0.000000e+00> : vector<8x512xf32>
    %158 = tpu.matmul %155, %157, %cst_94 {dimension_numbers = #tpu.dot_dimension_numbers<[1], [0], [0], [1], [0, 0, 1, 1], [], []>} : vector<8x128xf32>, vector<128x512xf32>, vector<8x512xf32> -> vector<8x512xf32>
    %159 = arith.addf %154, %158 : vector<8x512xf32>
    %160 = vector.extract_strided_slice %159 {offsets = [0, 0], sizes = [8, 384], strides = [1, 1]} : vector<8x512xf32> to vector<8x384xf32>
    %161 = arith.negf %160 : vector<8x384xf32>
    %162 = math.exp %161 : vector<8x384xf32>
    %cst_95 = arith.constant 1.000000e+00 : f32
    %163 = vector.broadcast %cst_95 : f32 to vector<8x384xf32>
    %164 = arith.addf %163, %162 : vector<8x384xf32>
    %165 = arith.divf %163, %164 : vector<8x384xf32>
    %166 = vector.extract_strided_slice %165 {offsets = [0, 0], sizes = [8, 128], strides = [1, 1]} : vector<8x384xf32> to vector<8x128xf32>
    %167 = vector.extract_strided_slice %165 {offsets = [0, 128], sizes = [8, 128], strides = [1, 1]} : vector<8x384xf32> to vector<8x128xf32>
    %168 = vector.extract_strided_slice %165 {offsets = [0, 256], sizes = [8, 128], strides = [1, 1]} : vector<8x384xf32> to vector<8x128xf32>
    %169 = vector.extract_strided_slice %159 {offsets = [0, 384], sizes = [8, 128], strides = [1, 1]} : vector<8x512xf32> to vector<8x128xf32>
    %170 = math.tanh %169 : vector<8x128xf32>
    %c0_96 = arith.constant 0 : index
    %c0_97 = arith.constant 0 : index
    %171 = vector.load %arg8[%c0_96, %c0_97] : memref<8x128xf32, #tpu.memory_space<vmem>>, vector<8x128xf32>
    %172 = arith.mulf %167, %171 : vector<8x128xf32>
    %173 = arith.mulf %166, %170 : vector<8x128xf32>
    %174 = arith.addf %172, %173 : vector<8x128xf32>
    %175 = math.tanh %174 : vector<8x128xf32>
    %176 = arith.mulf %168, %175 : vector<8x128xf32>
    %c0_98 = arith.constant 0 : index
    %c0_99 = arith.constant 0 : index
    %177 = vector.load %arg8[%c0_98, %c0_99] : memref<8x128xf32, #tpu.memory_space<vmem>>, vector<8x128xf32>
    tpu.vector_store %arg8[%c0_98, %c0_99], %174 {strides = array<i32>} : memref<8x128xf32, #tpu.memory_space<vmem>>, vector<8x128xf32>,
    %c0_100 = arith.constant 0 : index
    %c0_101 = arith.constant 0 : index
    %178 = vector.load %arg7[%c0_100, %c0_101] : memref<8x128xf32, #tpu.memory_space<vmem>>, vector<8x128xf32>
    tpu.vector_store %arg7[%c0_100, %c0_101], %176 {strides = array<i32>} : memref<8x128xf32, #tpu.memory_space<vmem>>, vector<8x128xf32>,
    %179 = arith.index_cast %151 : i32 to index
    %c0_102 = arith.constant 0 : index
    %c0_103 = arith.constant 0 : index
    %180 = vector.load %arg4[%179, %c0_102, %c0_103] : memref<8x8x128xf32, #tpu.memory_space<vmem>>, vector<1x8x128xf32>
    %181 = vector.shape_cast %180 : vector<1x8x128xf32> to vector<8x128xf32>
    %182 = vector.shape_cast %176 : vector<8x128xf32> to vector<1x8x128xf32>
    tpu.vector_store %arg4[%179, %c0_102, %c0_103], %182 {strides = array<i32>} : memref<8x8x128xf32, #tpu.memory_space<vmem>>, vector<1x8x128xf32>,
    %c5_i32 = arith.constant 5 : i32
    %c2_i32_104 = arith.constant 2 : i32
    %183 = arith.muli %c2_i32_104, %arg0 : i32
    %c1_i32_105 = arith.constant 1 : i32
    %184 = arith.subi %c1_i32_105, %183 : i32
    %185 = arith.muli %c5_i32, %184 : i32
    %c7_i32_106 = arith.constant 7 : i32
    %186 = arith.muli %arg0, %c7_i32_106 : i32
    %187 = arith.addi %185, %186 : i32
    %c0_107 = arith.constant 0 : index
    %188 = arith.index_cast %187 : i32 to index
    %c0_108 = arith.constant 0 : index
    %c0_109 = arith.constant 0 : index
    %189 = vector.load %arg2[%c0_107, %188, %c0_108, %c0_109] : memref<1x8x8x512xf32, #tpu.memory_space<vmem>>, vector<1x1x8x512xf32>
    %190 = vector.shape_cast %189 : vector<1x1x8x512xf32> to vector<8x512xf32>
    %c0_110 = arith.constant 0 : index
    %c0_111 = arith.constant 0 : index
    %191 = vector.load %arg7[%c0_110, %c0_111] : memref<8x128xf32, #tpu.memory_space<vmem>>, vector<8x128xf32>
    %c0_112 = arith.constant 0 : index
    %c0_113 = arith.constant 0 : index
    %c0_114 = arith.constant 0 : index
    %192 = vector.load %arg3[%c0_112, %c0_113, %c0_114] : memref<1x128x512xf32, #tpu.memory_space<vmem>>, vector<1x128x512xf32>
    %193 = vector.shape_cast %192 : vector<1x128x512xf32> to vector<128x512xf32>
    %cst_115 = arith.constant dense<0.000000e+00> : vector<8x512xf32>
    %194 = tpu.matmul %191, %193, %cst_115 {dimension_numbers = #tpu.dot_dimension_numbers<[1], [0], [0], [1], [0, 0, 1, 1], [], []>} : vector<8x128xf32>, vector<128x512xf32>, vector<8x512xf32> -> vector<8x512xf32>
    %195 = arith.addf %190, %194 : vector<8x512xf32>
    %196 = vector.extract_strided_slice %195 {offsets = [0, 0], sizes = [8, 384], strides = [1, 1]} : vector<8x512xf32> to vector<8x384xf32>
    %197 = arith.negf %196 : vector<8x384xf32>
    %198 = math.exp %197 : vector<8x384xf32>
    %cst_116 = arith.constant 1.000000e+00 : f32
    %199 = vector.broadcast %cst_116 : f32 to vector<8x384xf32>
    %200 = arith.addf %199, %198 : vector<8x384xf32>
    %201 = arith.divf %199, %200 : vector<8x384xf32>
    %202 = vector.extract_strided_slice %201 {offsets = [0, 0], sizes = [8, 128], strides = [1, 1]} : vector<8x384xf32> to vector<8x128xf32>
    %203 = vector.extract_strided_slice %201 {offsets = [0, 128], sizes = [8, 128], strides = [1, 1]} : vector<8x384xf32> to vector<8x128xf32>
    %204 = vector.extract_strided_slice %201 {offsets = [0, 256], sizes = [8, 128], strides = [1, 1]} : vector<8x384xf32> to vector<8x128xf32>
    %205 = vector.extract_strided_slice %195 {offsets = [0, 384], sizes = [8, 128], strides = [1, 1]} : vector<8x512xf32> to vector<8x128xf32>
    %206 = math.tanh %205 : vector<8x128xf32>
    %c0_117 = arith.constant 0 : index
    %c0_118 = arith.constant 0 : index
    %207 = vector.load %arg8[%c0_117, %c0_118] : memref<8x128xf32, #tpu.memory_space<vmem>>, vector<8x128xf32>
    %208 = arith.mulf %203, %207 : vector<8x128xf32>
    %209 = arith.mulf %202, %206 : vector<8x128xf32>
    %210 = arith.addf %208, %209 : vector<8x128xf32>
    %211 = math.tanh %210 : vector<8x128xf32>
    %212 = arith.mulf %204, %211 : vector<8x128xf32>
    %c0_119 = arith.constant 0 : index
    %c0_120 = arith.constant 0 : index
    %213 = vector.load %arg8[%c0_119, %c0_120] : memref<8x128xf32, #tpu.memory_space<vmem>>, vector<8x128xf32>
    tpu.vector_store %arg8[%c0_119, %c0_120], %210 {strides = array<i32>} : memref<8x128xf32, #tpu.memory_space<vmem>>, vector<8x128xf32>,
    %c0_121 = arith.constant 0 : index
    %c0_122 = arith.constant 0 : index
    %214 = vector.load %arg7[%c0_121, %c0_122] : memref<8x128xf32, #tpu.memory_space<vmem>>, vector<8x128xf32>
    tpu.vector_store %arg7[%c0_121, %c0_122], %212 {strides = array<i32>} : memref<8x128xf32, #tpu.memory_space<vmem>>, vector<8x128xf32>,
    %215 = arith.index_cast %187 : i32 to index
    %c0_123 = arith.constant 0 : index
    %c0_124 = arith.constant 0 : index
    %216 = vector.load %arg4[%215, %c0_123, %c0_124] : memref<8x8x128xf32, #tpu.memory_space<vmem>>, vector<1x8x128xf32>
    %217 = vector.shape_cast %216 : vector<1x8x128xf32> to vector<8x128xf32>
    %218 = vector.shape_cast %212 : vector<8x128xf32> to vector<1x8x128xf32>
    tpu.vector_store %arg4[%215, %c0_123, %c0_124], %218 {strides = array<i32>} : memref<8x8x128xf32, #tpu.memory_space<vmem>>, vector<1x8x128xf32>,
    %c6_i32 = arith.constant 6 : i32
    %c2_i32_125 = arith.constant 2 : i32
    %219 = arith.muli %c2_i32_125, %arg0 : i32
    %c1_i32_126 = arith.constant 1 : i32
    %220 = arith.subi %c1_i32_126, %219 : i32
    %221 = arith.muli %c6_i32, %220 : i32
    %c7_i32_127 = arith.constant 7 : i32
    %222 = arith.muli %arg0, %c7_i32_127 : i32
    %223 = arith.addi %221, %222 : i32
    %c0_128 = arith.constant 0 : index
    %224 = arith.index_cast %223 : i32 to index
    %c0_129 = arith.constant 0 : index
    %c0_130 = arith.constant 0 : index
    %225 = vector.load %arg2[%c0_128, %224, %c0_129, %c0_130] : memref<1x8x8x512xf32, #tpu.memory_space<vmem>>, vector<1x1x8x512xf32>
    %226 = vector.shape_cast %225 : vector<1x1x8x512xf32> to vector<8x512xf32>
    %c0_131 = arith.constant 0 : index
    %c0_132 = arith.constant 0 : index
    %227 = vector.load %arg7[%c0_131, %c0_132] : memref<8x128xf32, #tpu.memory_space<vmem>>, vector<8x128xf32>
    %c0_133 = arith.constant 0 : index
    %c0_134 = arith.constant 0 : index
    %c0_135 = arith.constant 0 : index
    %228 = vector.load %arg3[%c0_133, %c0_134, %c0_135] : memref<1x128x512xf32, #tpu.memory_space<vmem>>, vector<1x128x512xf32>
    %229 = vector.shape_cast %228 : vector<1x128x512xf32> to vector<128x512xf32>
    %cst_136 = arith.constant dense<0.000000e+00> : vector<8x512xf32>
    %230 = tpu.matmul %227, %229, %cst_136 {dimension_numbers = #tpu.dot_dimension_numbers<[1], [0], [0], [1], [0, 0, 1, 1], [], []>} : vector<8x128xf32>, vector<128x512xf32>, vector<8x512xf32> -> vector<8x512xf32>
    %231 = arith.addf %226, %230 : vector<8x512xf32>
    %232 = vector.extract_strided_slice %231 {offsets = [0, 0], sizes = [8, 384], strides = [1, 1]} : vector<8x512xf32> to vector<8x384xf32>
    %233 = arith.negf %232 : vector<8x384xf32>
    %234 = math.exp %233 : vector<8x384xf32>
    %cst_137 = arith.constant 1.000000e+00 : f32
    %235 = vector.broadcast %cst_137 : f32 to vector<8x384xf32>
    %236 = arith.addf %235, %234 : vector<8x384xf32>
    %237 = arith.divf %235, %236 : vector<8x384xf32>
    %238 = vector.extract_strided_slice %237 {offsets = [0, 0], sizes = [8, 128], strides = [1, 1]} : vector<8x384xf32> to vector<8x128xf32>
    %239 = vector.extract_strided_slice %237 {offsets = [0, 128], sizes = [8, 128], strides = [1, 1]} : vector<8x384xf32> to vector<8x128xf32>
    %240 = vector.extract_strided_slice %237 {offsets = [0, 256], sizes = [8, 128], strides = [1, 1]} : vector<8x384xf32> to vector<8x128xf32>
    %241 = vector.extract_strided_slice %231 {offsets = [0, 384], sizes = [8, 128], strides = [1, 1]} : vector<8x512xf32> to vector<8x128xf32>
    %242 = math.tanh %241 : vector<8x128xf32>
    %c0_138 = arith.constant 0 : index
    %c0_139 = arith.constant 0 : index
    %243 = vector.load %arg8[%c0_138, %c0_139] : memref<8x128xf32, #tpu.memory_space<vmem>>, vector<8x128xf32>
    %244 = arith.mulf %239, %243 : vector<8x128xf32>
    %245 = arith.mulf %238, %242 : vector<8x128xf32>
    %246 = arith.addf %244, %245 : vector<8x128xf32>
    %247 = math.tanh %246 : vector<8x128xf32>
    %248 = arith.mulf %240, %247 : vector<8x128xf32>
    %c0_140 = arith.constant 0 : index
    %c0_141 = arith.constant 0 : index
    %249 = vector.load %arg8[%c0_140, %c0_141] : memref<8x128xf32, #tpu.memory_space<vmem>>, vector<8x128xf32>
    tpu.vector_store %arg8[%c0_140, %c0_141], %246 {strides = array<i32>} : memref<8x128xf32, #tpu.memory_space<vmem>>, vector<8x128xf32>,
    %c0_142 = arith.constant 0 : index
    %c0_143 = arith.constant 0 : index
    %250 = vector.load %arg7[%c0_142, %c0_143] : memref<8x128xf32, #tpu.memory_space<vmem>>, vector<8x128xf32>
    tpu.vector_store %arg7[%c0_142, %c0_143], %248 {strides = array<i32>} : memref<8x128xf32, #tpu.memory_space<vmem>>, vector<8x128xf32>,
    %251 = arith.index_cast %223 : i32 to index
    %c0_144 = arith.constant 0 : index
    %c0_145 = arith.constant 0 : index
    %252 = vector.load %arg4[%251, %c0_144, %c0_145] : memref<8x8x128xf32, #tpu.memory_space<vmem>>, vector<1x8x128xf32>
    %253 = vector.shape_cast %252 : vector<1x8x128xf32> to vector<8x128xf32>
    %254 = vector.shape_cast %248 : vector<8x128xf32> to vector<1x8x128xf32>
    tpu.vector_store %arg4[%251, %c0_144, %c0_145], %254 {strides = array<i32>} : memref<8x8x128xf32, #tpu.memory_space<vmem>>, vector<1x8x128xf32>,
    %c7_i32_146 = arith.constant 7 : i32
    %c2_i32_147 = arith.constant 2 : i32
    %255 = arith.muli %c2_i32_147, %arg0 : i32
    %c1_i32_148 = arith.constant 1 : i32
    %256 = arith.subi %c1_i32_148, %255 : i32
    %257 = arith.muli %c7_i32_146, %256 : i32
    %c7_i32_149 = arith.constant 7 : i32
    %258 = arith.muli %arg0, %c7_i32_149 : i32
    %259 = arith.addi %257, %258 : i32
    %c0_150 = arith.constant 0 : index
    %260 = arith.index_cast %259 : i32 to index
    %c0_151 = arith.constant 0 : index
    %c0_152 = arith.constant 0 : index
    %261 = vector.load %arg2[%c0_150, %260, %c0_151, %c0_152] : memref<1x8x8x512xf32, #tpu.memory_space<vmem>>, vector<1x1x8x512xf32>
    %262 = vector.shape_cast %261 : vector<1x1x8x512xf32> to vector<8x512xf32>
    %c0_153 = arith.constant 0 : index
    %c0_154 = arith.constant 0 : index
    %263 = vector.load %arg7[%c0_153, %c0_154] : memref<8x128xf32, #tpu.memory_space<vmem>>, vector<8x128xf32>
    %c0_155 = arith.constant 0 : index
    %c0_156 = arith.constant 0 : index
    %c0_157 = arith.constant 0 : index
    %264 = vector.load %arg3[%c0_155, %c0_156, %c0_157] : memref<1x128x512xf32, #tpu.memory_space<vmem>>, vector<1x128x512xf32>
    %265 = vector.shape_cast %264 : vector<1x128x512xf32> to vector<128x512xf32>
    %cst_158 = arith.constant dense<0.000000e+00> : vector<8x512xf32>
    %266 = tpu.matmul %263, %265, %cst_158 {dimension_numbers = #tpu.dot_dimension_numbers<[1], [0], [0], [1], [0, 0, 1, 1], [], []>} : vector<8x128xf32>, vector<128x512xf32>, vector<8x512xf32> -> vector<8x512xf32>
    %267 = arith.addf %262, %266 : vector<8x512xf32>
    %268 = vector.extract_strided_slice %267 {offsets = [0, 0], sizes = [8, 384], strides = [1, 1]} : vector<8x512xf32> to vector<8x384xf32>
    %269 = arith.negf %268 : vector<8x384xf32>
    %270 = math.exp %269 : vector<8x384xf32>
    %cst_159 = arith.constant 1.000000e+00 : f32
    %271 = vector.broadcast %cst_159 : f32 to vector<8x384xf32>
    %272 = arith.addf %271, %270 : vector<8x384xf32>
    %273 = arith.divf %271, %272 : vector<8x384xf32>
    %274 = vector.extract_strided_slice %273 {offsets = [0, 0], sizes = [8, 128], strides = [1, 1]} : vector<8x384xf32> to vector<8x128xf32>
    %275 = vector.extract_strided_slice %273 {offsets = [0, 128], sizes = [8, 128], strides = [1, 1]} : vector<8x384xf32> to vector<8x128xf32>
    %276 = vector.extract_strided_slice %273 {offsets = [0, 256], sizes = [8, 128], strides = [1, 1]} : vector<8x384xf32> to vector<8x128xf32>
    %277 = vector.extract_strided_slice %267 {offsets = [0, 384], sizes = [8, 128], strides = [1, 1]} : vector<8x512xf32> to vector<8x128xf32>
    %278 = math.tanh %277 : vector<8x128xf32>
    %c0_160 = arith.constant 0 : index
    %c0_161 = arith.constant 0 : index
    %279 = vector.load %arg8[%c0_160, %c0_161] : memref<8x128xf32, #tpu.memory_space<vmem>>, vector<8x128xf32>
    %280 = arith.mulf %275, %279 : vector<8x128xf32>
    %281 = arith.mulf %274, %278 : vector<8x128xf32>
    %282 = arith.addf %280, %281 : vector<8x128xf32>
    %283 = math.tanh %282 : vector<8x128xf32>
    %284 = arith.mulf %276, %283 : vector<8x128xf32>
    %c0_162 = arith.constant 0 : index
    %c0_163 = arith.constant 0 : index
    %285 = vector.load %arg8[%c0_162, %c0_163] : memref<8x128xf32, #tpu.memory_space<vmem>>, vector<8x128xf32>
    tpu.vector_store %arg8[%c0_162, %c0_163], %282 {strides = array<i32>} : memref<8x128xf32, #tpu.memory_space<vmem>>, vector<8x128xf32>,
    %c0_164 = arith.constant 0 : index
    %c0_165 = arith.constant 0 : index
    %286 = vector.load %arg7[%c0_164, %c0_165] : memref<8x128xf32, #tpu.memory_space<vmem>>, vector<8x128xf32>
    tpu.vector_store %arg7[%c0_164, %c0_165], %284 {strides = array<i32>} : memref<8x128xf32, #tpu.memory_space<vmem>>, vector<8x128xf32>,
    %287 = arith.index_cast %259 : i32 to index
    %c0_166 = arith.constant 0 : index
    %c0_167 = arith.constant 0 : index
    %288 = vector.load %arg4[%287, %c0_166, %c0_167] : memref<8x8x128xf32, #tpu.memory_space<vmem>>, vector<1x8x128xf32>
    %289 = vector.shape_cast %288 : vector<1x8x128xf32> to vector<8x128xf32>
    %290 = vector.shape_cast %284 : vector<8x128xf32> to vector<1x8x128xf32>
    tpu.vector_store %arg4[%287, %c0_166, %c0_167], %290 {strides = array<i32>} : memref<8x8x128xf32, #tpu.memory_space<vmem>>, vector<1x8x128xf32>,
    %c8_i32 = arith.constant 8 : i32
    %c1_i32_168 = arith.constant 1 : i32
    %291 = arith.cmpi eq, %arg1, %c1_i32_168 : i32
    %292 = arith.extui %291 : i1 to i32
    %c0_i32_169 = arith.constant 0 : i32
    %293 = arith.cmpi ne, %292, %c0_i32_169 : i32
    scf.if %293 {
      %c0_170 = arith.constant 0 : index
      %c0_171 = arith.constant 0 : index
      %294 = vector.load %arg7[%c0_170, %c0_171] : memref<8x128xf32, #tpu.memory_space<vmem>>, vector<8x128xf32>
      %c0_172 = arith.constant 0 : index
      %c0_173 = arith.constant 0 : index
      %c0_174 = arith.constant 0 : index
      %295 = vector.load %arg5[%c0_172, %c0_173, %c0_174] : memref<1x8x128xf32, #tpu.memory_space<vmem>>, vector<1x8x128xf32>
      %296 = vector.shape_cast %295 : vector<1x8x128xf32> to vector<8x128xf32>
      %297 = vector.shape_cast %294 : vector<8x128xf32> to vector<1x8x128xf32>
      tpu.vector_store %arg5[%c0_172, %c0_173, %c0_174], %297 {strides = array<i32>} : memref<1x8x128xf32, #tpu.memory_space<vmem>>, vector<1x8x128xf32>,
      %c0_175 = arith.constant 0 : index
      %c0_176 = arith.constant 0 : index
      %298 = vector.load %arg8[%c0_175, %c0_176] : memref<8x128xf32, #tpu.memory_space<vmem>>, vector<8x128xf32>
      %c0_177 = arith.constant 0 : index
      %c0_178 = arith.constant 0 : index
      %c0_179 = arith.constant 0 : index
      %299 = vector.load %arg6[%c0_177, %c0_178, %c0_179] : memref<1x8x128xf32, #tpu.memory_space<vmem>>, vector<1x8x128xf32>
      %300 = vector.shape_cast %299 : vector<1x8x128xf32> to vector<8x128xf32>
      %301 = vector.shape_cast %298 : vector<8x128xf32> to vector<1x8x128xf32>
      tpu.vector_store %arg6[%c0_177, %c0_178, %c0_179], %301 {strides = array<i32>} : memref<1x8x128xf32, #tpu.memory_space<vmem>>, vector<1x8x128xf32>,
    } else {
    }
    return
  }
  func.func @transform_0(%arg0: i32, %arg1: i32) -> (i32, i32, i32, i32) {
    %c2_i32 = arith.constant 2 : i32
    %0 = arith.muli %c2_i32, %arg1 : i32
    %c1_i32 = arith.constant 1 : i32
    %1 = arith.subi %c1_i32, %0 : i32
    %2 = arith.muli %arg0, %1 : i32
    %3 = arith.addi %2, %arg1 : i32
    %c0_i32 = arith.constant 0 : i32
    %c0_i32_0 = arith.constant 0 : i32
    %c0_i32_1 = arith.constant 0 : i32
    return %arg0, %3, %c0_i32, %c0_i32_0 : i32, i32, i32, i32
  }
  func.func @transform_1(%arg0: i32, %arg1: i32) -> (i32, i32, i32) {
    %c0_i32 = arith.constant 0 : i32
    %c0_i32_0 = arith.constant 0 : i32
    %c0_i32_1 = arith.constant 0 : i32
    return %arg0, %c0_i32, %c0_i32_0 : i32, i32, i32
  }
  func.func @transform_2(%arg0: i32, %arg1: i32) -> (i32, i32, i32) {
    %c2_i32 = arith.constant 2 : i32
    %0 = arith.muli %c2_i32, %arg1 : i32
    %c1_i32 = arith.constant 1 : i32
    %1 = arith.subi %c1_i32, %0 : i32
    %2 = arith.muli %arg0, %1 : i32
    %3 = arith.addi %2, %arg1 : i32
    %c0_i32 = arith.constant 0 : i32
    %c0_i32_0 = arith.constant 0 : i32
    return %3, %c0_i32, %arg0 : i32, i32, i32
  }
  func.func @transform_3(%arg0: i32, %arg1: i32) -> (i32, i32, i32) {
    %c0_i32 = arith.constant 0 : i32
    %c0_i32_0 = arith.constant 0 : i32
    %c0_i32_1 = arith.constant 0 : i32
    return %arg0, %c0_i32, %c0_i32_0 : i32, i32, i32
  }
  func.func @transform_4(%arg0: i32, %arg1: i32) -> (i32, i32, i32) {
    %c0_i32 = arith.constant 0 : i32
    %c0_i32_0 = arith.constant 0 : i32
    %c0_i32_1 = arith.constant 0 : i32
    return %arg0, %c0_i32, %c0_i32_0 : i32, i32, i32
  }
}

</mosaic_0001>

<llo_original>
// kernel: tpu_custom_call.1
$region0: #{tpu_custom_call.1}
  #allocation0 [shape = 'u32[]', space=smem, size = 0x4, offset = 0x4, fixed_abs, tag = 'smem constant byte address 0x4 - core index']
  #allocation1 [shape = 'u32[72,128]{1,0:T(1,128)}', space=vmem, size = 0x9000, scoped, tag = 'internal scratch']
  #allocation2 [shape = 'f32[8,128]{1,0:T(8,128)}', space=vmem, size = 0x1000, scoped, tag = 'scratch operand']
  #allocation3 [shape = 'f32[8,128]{1,0:T(8,128)}', space=vmem, size = 0x1000, scoped, tag = 'scratch operand']
  %s0 = inlined_call_operand.hbm [shape: f32[2,16,8,512], index: 0, kind: input, shape index: {}]
  %s1 = inlined_call_operand.hbm [shape: f32[2,128,512], index: 1, kind: input, shape index: {}]
  %s2 = inlined_call_operand.hbm [shape: f32[16,8,256], index: 2, kind: output, shape index: {0}]
  %s3 = inlined_call_operand.hbm [shape: f32[2,8,128], index: 3, kind: output, shape index: {1}]
  %s4 = inlined_call_operand.hbm [shape: f32[2,8,128], index: 4, kind: output, shape index: {2}]
  %5 = xla_tuple %s2, %s3, %s4
  %s6 = sld [smem:[#allocation0]]
  $region73: #{tpu_custom_call.1} parent=0
    _
  %s8 = ssub.s32 1, %s6
  %s9 = scalar_select 0, %s8, %s6
  $region1: #{tpu_custom_call.1} parent=0
    #allocation4 [shape = 'u8[262144]{0}', space=vmem, size = 0x40000, scoped, tag = 'input window, operand 0']
    #allocation5 [shape = 's32[2]{0}', space=sflag, size = 0x8, scoped, tag = 'scoped memory for tpu_custom_call.1']
    #allocation6 [shape = 's32[2]{0}', space=sflag, size = 0x8, scoped, tag = 'scoped memory for tpu_custom_call.1']
    #allocation7 [shape = 'u8[524288]{0}', space=vmem, size = 0x80000, scoped, tag = 'input window, operand 1']
    #allocation8 [shape = 's32[2]{0}', space=sflag, size = 0x8, scoped, tag = 'scoped memory for tpu_custom_call.1']
    #allocation9 [shape = 'u8[65536]{0}', space=vmem, size = 0x10000, scoped, tag = 'output window, operand 0']
    #allocation10 [shape = 'u8[8192]{0}', space=vmem, size = 0x2000, scoped, tag = 'output window, operand 1']
    #allocation11 [shape = 's32[2]{0}', space=sflag, size = 0x8, scoped, tag = 'scoped memory for tpu_custom_call.1']
    #allocation12 [shape = 'u8[8192]{0}', space=vmem, size = 0x2000, scoped, tag = 'output window, operand 2']
    %10 = vsyncpa [#allocation5], 0
    %s11 = scalar_lea.sflag [#allocation5], 1
    %12 = vsyncpa %s11, 0
    %13 = vsyncpa [#allocation8], 0
    %s14 = scalar_lea.sflag [#allocation8], 1
    %15 = vsyncpa %s14, 0
    %16 = vsyncpa [#allocation6], 0
    %s17 = scalar_lea.sflag [#allocation6], 1
    %18 = vsyncpa %s17, 0
    %19 = vsyncpa [#allocation11], 0
    %s20 = scalar_lea.sflag [#allocation11], 1
    %21 = vsyncpa %s20, 0
    loop: start=0, step=1, limit=6
    $region2: #{tpu_custom_call.1} parent=1 // loop_pre_header
      _
    $region3: #{tpu_custom_call.1} parent=1 // loop_header
      %s23 = sphi 0, %s27
      %p24 = scmp.ge.s32.totalorder %s23, 6
      %s30 = sphi 0, %s42
      %s31 = sphi 0, %s38
      %s32 = sphi 0, %s30
      %s33 = sphi 0, %s31
      %s34 = sphi 0, %s32
      %s35 = sphi 0, %s33
      %s55 = sphi 0, %s57
      %s58 = sphi 0, %s55
      %s59 = sphi 0, %s58
      %s75 = sphi 0, %s59
      %s81 = sphi 0, %s83
      %s84 = sphi 0, %s81
      %s85 = sphi 0, %s84
      %s101 = sphi 0, %s85
      %s117 = sphi 0, %s119
      %s120 = sphi 0, %s117
      %s121 = sphi 0, %s120
      %s137 = sphi 0, %s121
      %s143 = sphi 0, %s145
      %s146 = sphi 0, %s143
      %s147 = sphi 0, %s146
      %s163 = sphi 0, %s147
      %s169 = sphi 0, %s171
      %s172 = sphi 0, %s169
      %s173 = sphi 0, %s172
      %s189 = sphi 0, %s173
    $region4: #{tpu_custom_call.1} parent=1 // loop_header_branch
      %26 = sbr.rel (%p24) target = $region8
    $region5: #{tpu_custom_call.1} parent=1 // loop_body
      %s28 = ssub.s32 %s23, 1
      %s29 = ssub.s32 %s23, 2
      %s36 = sadd.s32 1, %s31
      %p37 = scmp.ge.s32.totalorder %s36, 2
      %s38 = scalar_select %p37, 0, %s36
      %s39 = sadd.s32 1, %s30
      %s40 = scalar_select %p37, %s39, %s30
      %p41 = scmp.ge.s32.totalorder %s40, 2
      %s42 = scalar_select %p41, 0, %s40
      %s43 = smul.u32 %s31, 2
      %s44 = ssub.s32 1, %s43
      %s45 = smul.u32 %s30, %s44
      %s46 = sadd.s32 %s45, %s31
      %s47 = smul.u32 %s38, 2
      %s48 = ssub.s32 1, %s47
      %s49 = smul.u32 %s42, %s48
      %s50 = sadd.s32 %s49, %s38
      %s51 = ssub.s32 %s30, %s42
      %s52 = ssub.s32 %s46, %s50
      %s53 = sor.u32 %s51, %s52
      %p54 = scmp.eq.s32.totalorder %s53, 0
      %s56 = sadd.s32 %s55, 1
      %s57 = scalar_select %p54, %s55, %s56
      %p60 = pneg %p54
      %p61 = scmp.eq.s32.totalorder %s23, 3
      %p62 = por %p60, %p61
      %p63 = scmp.ne.s32.totalorder %s55, %s58
      %p64 = scmp.eq.s32.totalorder %s23, 0
      %p65 = por %p63, %p64
      %p66 = scmp.ne.s32.totalorder %s55, %s58
      %p67 = scmp.eq.s32.totalorder %s28, 3
      %p68 = por %p66, %p67
      %p69 = scmp.ne.s32.totalorder %s58, %s59
      %p70 = scmp.eq.s32.totalorder %s28, 0
      %p71 = por %p69, %p70
      %p72 = scmp.ne.s32.totalorder %s58, %s59
      %p73 = scmp.eq.s32.totalorder %s29, 3
      %p74 = por %p72, %p73
      %p76 = scmp.ne.s32.totalorder %s59, %s75
      %p77 = scmp.eq.s32.totalorder %s29, 0
      %p78 = por %p76, %p77
      %s79 = ssub.s32 %s30, %s42
      %p80 = scmp.eq.s32.totalorder %s79, 0
      %s82 = sadd.s32 %s81, 1
      %s83 = scalar_select %p80, %s81, %s82
      %p86 = pneg %p80
      %p87 = scmp.eq.s32.totalorder %s23, 3
      %p88 = por %p86, %p87
      %p89 = scmp.ne.s32.totalorder %s81, %s84
      %p90 = scmp.eq.s32.totalorder %s23, 0
      %p91 = por %p89, %p90
      %p92 = scmp.ne.s32.totalorder %s81, %s84
      %p93 = scmp.eq.s32.totalorder %s28, 3
      %p94 = por %p92, %p93
      %p95 = scmp.ne.s32.totalorder %s84, %s85
      %p96 = scmp.eq.s32.totalorder %s28, 0
      %p97 = por %p95, %p96
      %p98 = scmp.ne.s32.totalorder %s84, %s85
      %p99 = scmp.eq.s32.totalorder %s29, 3
      %p100 = por %p98, %p99
      %p102 = scmp.ne.s32.totalorder %s85, %s101
      %p103 = scmp.eq.s32.totalorder %s29, 0
      %p104 = por %p102, %p103
      %s105 = smul.u32 %s31, 2
      %s106 = ssub.s32 1, %s105
      %s107 = smul.u32 %s30, %s106
      %s108 = sadd.s32 %s107, %s31
      %s109 = smul.u32 %s38, 2
      %s110 = ssub.s32 1, %s109
      %s111 = smul.u32 %s42, %s110
      %s112 = sadd.s32 %s111, %s38
      %s113 = ssub.s32 %s108, %s112
      %s114 = ssub.s32 %s30, %s42
      %s115 = sor.u32 %s113, %s114
      %p116 = scmp.eq.s32.totalorder %s115, 0
      %s118 = sadd.s32 %s117, 1
      %s119 = scalar_select %p116, %s117, %s118
      %p122 = pneg %p116
      %p123 = scmp.eq.s32.totalorder %s23, 3
      %p124 = por %p122, %p123
      %p125 = scmp.ne.s32.totalorder %s117, %s120
      %p126 = scmp.eq.s32.totalorder %s23, 0
      %p127 = por %p125, %p126
      %p128 = scmp.ne.s32.totalorder %s117, %s120
      %p129 = scmp.eq.s32.totalorder %s28, 3
      %p130 = por %p128, %p129
      %p131 = scmp.ne.s32.totalorder %s120, %s121
      %p132 = scmp.eq.s32.totalorder %s28, 0
      %p133 = por %p131, %p132
      %p134 = scmp.ne.s32.totalorder %s120, %s121
      %p135 = scmp.eq.s32.totalorder %s29, 3
      %p136 = por %p134, %p135
      %p138 = scmp.ne.s32.totalorder %s121, %s137
      %p139 = scmp.eq.s32.totalorder %s29, 0
      %p140 = por %p138, %p139
      %s141 = ssub.s32 %s30, %s42
      %p142 = scmp.eq.s32.totalorder %s141, 0
      %s144 = sadd.s32 %s143, 1
      %s145 = scalar_select %p142, %s143, %s144
      %p148 = pneg %p142
      %p149 = scmp.eq.s32.totalorder %s23, 3
      %p150 = por %p148, %p149
      %p151 = scmp.ne.s32.totalorder %s143, %s146
      %p152 = scmp.eq.s32.totalorder %s23, 0
      %p153 = por %p151, %p152
      %p154 = scmp.ne.s32.totalorder %s143, %s146
      %p155 = scmp.eq.s32.totalorder %s28, 3
      %p156 = por %p154, %p155
      %p157 = scmp.ne.s32.totalorder %s146, %s147
      %p158 = scmp.eq.s32.totalorder %s28, 0
      %p159 = por %p157, %p158
      %p160 = scmp.ne.s32.totalorder %s146, %s147
      %p161 = scmp.eq.s32.totalorder %s29, 3
      %p162 = por %p160, %p161
      %p164 = scmp.ne.s32.totalorder %s147, %s163
      %p165 = scmp.eq.s32.totalorder %s29, 0
      %p166 = por %p164, %p165
      %s167 = ssub.s32 %s30, %s42
      %p168 = scmp.eq.s32.totalorder %s167, 0
      %s170 = sadd.s32 %s169, 1
      %s171 = scalar_select %p168, %s169, %s170
      %p174 = pneg %p168
      %p175 = scmp.eq.s32.totalorder %s23, 3
      %p176 = por %p174, %p175
      %p177 = scmp.ne.s32.totalorder %s169, %s172
      %p178 = scmp.eq.s32.totalorder %s23, 0
      %p179 = por %p177, %p178
      %p180 = scmp.ne.s32.totalorder %s169, %s172
      %p181 = scmp.eq.s32.totalorder %s28, 3
      %p182 = por %p180, %p181
      %p183 = scmp.ne.s32.totalorder %s172, %s173
      %p184 = scmp.eq.s32.totalorder %s28, 0
      %p185 = por %p183, %p184
      %p186 = scmp.ne.s32.totalorder %s172, %s173
      %p187 = scmp.eq.s32.totalorder %s29, 3
      %p188 = por %p186, %p187
      %p190 = scmp.ne.s32.totalorder %s173, %s189
      %p191 = scmp.eq.s32.totalorder %s29, 0
      %p192 = por %p190, %p191
      %p193 = scmp.le.s32.totalorder 1, %s23
      %p194 = scmp.lt.s32.totalorder %s23, 5
      %p195 = pnand %p193, %p194
      %p196 = pneg %p195
      // Predicated region
      $region9: #{tpu_custom_call.1} parent=5 // pred_check
        _
      $region10: #{tpu_custom_call.1} parent=5 // pred_check_branch
        %198 = sbr.rel (%p195) target = $region12
      $region11: #{tpu_custom_call.1} parent=5 // pred_region
        %s199 = ssub.s32 %s23, 1
      $region12: #{tpu_custom_call.1} parent=5 // pred_fallthru
        _
      %p200 = scmp.lt.s32.totalorder %s23, 4
      // Predicated region
      $region13: #{tpu_custom_call.1} parent=5 // pred_check
        %p201 = pneg %p200
      $region14: #{tpu_custom_call.1} parent=5 // pred_check_branch
        %203 = sbr.rel (%p201) target = $region16
      $region15: #{tpu_custom_call.1} parent=5 // pred_region
        // Predicated region
        $region17: #{tpu_custom_call.1} parent=15 // pred_check
          %p204 = pneg %p65
        $region18: #{tpu_custom_call.1} parent=15 // pred_check_branch
          %206 = sbr.rel (%p204) target = $region20
        $region19: #{tpu_custom_call.1} parent=15 // pred_region
          %s207 = sand.u32 %s55, 1
          %s208 = scalar_lea.sflag [#allocation5], %s207
          %s209 = sand.u32 %s55, 1
          %s210 = smul.addr %s209, 256
          %s211 = scalar_lea.vmem [#allocation4], %s210
          %s212 = smul.u32 %s31, 2
          %s213 = ssub.s32 1, %s212
          %s214 = smul.u32 %s30, %s213
          %s215 = sadd.s32 %s214, %s31
          %s216 = smul.u32 8, %s215
          %218 = vsyncadd %s208, 0
          %s219 = smul.addr %s216, 4
          %s220 = smul.addr %s30, 64
          %s221 = sadd.s32 %s219, %s220
          %s222 = smul.addr %s221, 8
          %s223 = scalar_lea.hbm %s0, %s222
          %s224 = sshll.u32 %s223, 4
          %s225 = int_to_ptr.hbm [resolvable:$true] %s224
          %s226 = sshll.u32 %s211, 4
          %s227 = int_to_ptr.vmem [resolvable:$true] %s226
          %232 = dma.hbm_to_vmem [thread:$0]  %s225, 4096, %s227, %s208, 512, 512, 32
        $region20: #{tpu_custom_call.1} parent=15 // pred_fallthru
          _
        // Predicated region
        $region21: #{tpu_custom_call.1} parent=15 // pred_check
          %p233 = pneg %p91
        $region22: #{tpu_custom_call.1} parent=15 // pred_check_branch
          %235 = sbr.rel (%p233) target = $region24
        $region23: #{tpu_custom_call.1} parent=15 // pred_region
          %s236 = sand.u32 %s81, 1
          %s237 = scalar_lea.sflag [#allocation8], %s236
          %s238 = sand.u32 %s81, 1
          %s239 = smul.addr %s238, 512
          %s240 = scalar_lea.vmem [#allocation7], %s239
          %242 = vsyncadd %s237, 0
          %s243 = smul.addr %s30, 64
          %s244 = smul.addr %s243, 8
          %s245 = scalar_lea.hbm %s1, %s244
          %s246 = sshll.u32 %s245, 4
          %s247 = int_to_ptr.hbm [resolvable:$true] %s246
          %s248 = sshll.u32 %s240, 4
          %s249 = int_to_ptr.vmem [resolvable:$true] %s248
          %254 = dma.hbm_to_vmem [thread:$0]  %s247, 8192, %s249, %s237, 512, 512, 32
        $region24: #{tpu_custom_call.1} parent=15 // pred_fallthru
          _
      $region16: #{tpu_custom_call.1} parent=5 // pred_fallthru
        _
      %p255 = scmp.le.s32.totalorder 1, %s23
      %p256 = scmp.lt.s32.totalorder %s23, 5
      %p257 = pnand %p255, %p256
      %p258 = pneg %p257
      // Predicated region
      $region25: #{tpu_custom_call.1} parent=5 // pred_check
        _
      $region26: #{tpu_custom_call.1} parent=5 // pred_check_branch
        %260 = sbr.rel (%p257) target = $region28
      $region27: #{tpu_custom_call.1} parent=5 // pred_region
        %s261 = ssub.s32 %s23, 1
        %s262 = sand.u32 %s58, 1
        %s263 = scalar_lea.sflag [#allocation5], %s262
        %s264 = sand.u32 %s58, 1
        %s265 = smul.addr %s264, 256
        %s266 = scalar_lea.vmem [#allocation4], %s265
        // Predicated region
        $region29: #{tpu_custom_call.1} parent=27 // pred_check
          %p267 = pneg %p71
        $region30: #{tpu_custom_call.1} parent=27 // pred_check_branch
          %269 = sbr.rel (%p267) target = $region32
        $region31: #{tpu_custom_call.1} parent=27 // pred_region
          %271 = dma.done %s263, 4096
        $region32: #{tpu_custom_call.1} parent=27 // pred_fallthru
          _
        %s272 = sand.u32 %s84, 1
        %s273 = scalar_lea.sflag [#allocation8], %s272
        %s274 = sand.u32 %s84, 1
        %s275 = smul.addr %s274, 512
        %s276 = scalar_lea.vmem [#allocation7], %s275
        // Predicated region
        $region33: #{tpu_custom_call.1} parent=27 // pred_check
          %p277 = pneg %p97
        $region34: #{tpu_custom_call.1} parent=27 // pred_check_branch
          %279 = sbr.rel (%p277) target = $region36
        $region35: #{tpu_custom_call.1} parent=27 // pred_region
          %281 = dma.done %s273, 8192
        $region36: #{tpu_custom_call.1} parent=27 // pred_fallthru
          _
        %s282 = sand.u32 %s58, 1
        %s283 = scalar_lea.sflag [#allocation5], %s282
        %s284 = sand.u32 %s58, 1
        %s285 = smul.addr %s284, 256
        %s286 = scalar_lea.vmem [#allocation4], %s285
        %p287 = pneg %p71
        %p288 = pneg %p68
        %s289 = sand.u32 %s84, 1
        %s290 = scalar_lea.sflag [#allocation8], %s289
        %s291 = sand.u32 %s84, 1
        %s292 = smul.addr %s291, 512
        %s293 = scalar_lea.vmem [#allocation7], %s292
        %p294 = pneg %p97
        %p295 = pneg %p94
        %p296 = pneg %p133
        %p297 = pneg %p130
        %s298 = sand.u32 %s120, 1
        %s299 = scalar_lea.sflag [#allocation6], %s298
        %s300 = sand.u32 %s120, 1
        %s301 = smul.addr %s300, 64
        %s302 = scalar_lea.vmem [#allocation9], %s301
        %p303 = pneg %p159
        %p304 = pneg %p156
        %s305 = sand.u32 %s28, 1
        %s306 = scalar_lea.sflag [#allocation11], %s305
        %s307 = sand.u32 %s146, 1
        %s308 = smul.addr %s307, 8
        %s309 = scalar_lea.vmem [#allocation10], %s308
        %p310 = pneg %p185
        %p311 = pneg %p182
        %s312 = sand.u32 %s28, 1
        %s313 = scalar_lea.sflag [#allocation11], %s312
        %s314 = sand.u32 %s172, 1
        %s315 = smul.addr %s314, 8
        %s316 = scalar_lea.vmem [#allocation12], %s315
        %s317 = smul.u32 %s33, 2
        %s318 = ssub.s32 1, %s317
        %s319 = smul.u32 %s32, %s318
        %s320 = sadd.s32 %s319, %s33
        %s321 = smul.u32 8, %s320
        %s322 = smul.u32 %s33, 2
        %s323 = ssub.s32 1, %s322
        %s324 = smul.u32 %s32, %s323
        %s325 = sadd.s32 %s324, %s33
        %s326 = smul.u32 8, %s325
        %p327 = scmp.eq.s32.totalorder %s33, 0
        // Predicated region
        $region37: #{tpu_custom_call.1} parent=27 // pred_check
          %p328 = pneg %p327
        $region38: #{tpu_custom_call.1} parent=27 // pred_check_branch
          %330 = sbr.rel (%p328) target = $region40
        $region39: #{tpu_custom_call.1} parent=27 // pred_region
          %331 = vst [vmem:[#allocation2] sm:$0xff] 0.0
          %332 = vst [vmem:[#allocation3] sm:$0xff] 0.0
        $region40: #{tpu_custom_call.1} parent=27 // pred_fallthru
          _
        %s333 = smul.u32 %s32, 7
        %s334 = smul.u32 %s333, 4
        %s335 = smul.addr %s334, 8
        %s336 = scalar_lea.vmem %s266, %s335 [#allocation4]
        %v337 = vld [vmem:[%s336] sm:$0xff]
        %v338 = vld [vmem:[%s336 + $0x8] sm:$0xff]
        %v339 = vld [vmem:[%s336 + $0x10] sm:$0xff]
        %v340 = vld [vmem:[%s336 + $0x18] sm:$0xff]
        %v341 = vld [vmem:[#allocation2] sm:$0xff]
        %v342 = vld [vmem:[%s276] sm:$0xff]
        %v343 = vld [vmem:[%s276 + $0x8] sm:$0xff]
        %v344 = vld [vmem:[%s276 + $0x10] sm:$0xff]
        %v345 = vld [vmem:[%s276 + $0x18] sm:$0xff]
        %v346 = vld [vmem:[%s276 + $0x20] sm:$0xff]
        %v347 = vld [vmem:[%s276 + $0x28] sm:$0xff]
        %v348 = vld [vmem:[%s276 + $0x30] sm:$0xff]
        %v349 = vld [vmem:[%s276 + $0x38] sm:$0xff]
        %v350 = vld [vmem:[%s276 + $0x40] sm:$0xff]
        %v351 = vld [vmem:[%s276 + $0x48] sm:$0xff]
        %v352 = vld [vmem:[%s276 + $0x50] sm:$0xff]
        %v353 = vld [vmem:[%s276 + $0x58] sm:$0xff]
        %v354 = vld [vmem:[%s276 + $0x60] sm:$0xff]
        %v355 = vld [vmem:[%s276 + $0x68] sm:$0xff]
        %v356 = vld [vmem:[%s276 + $0x70] sm:$0xff]
        %v357 = vld [vmem:[%s276 + $0x78] sm:$0xff]
        %v358 = vld [vmem:[%s276 + $0x80] sm:$0xff]
        %v359 = vld [vmem:[%s276 + $0x88] sm:$0xff]
        %v360 = vld [vmem:[%s276 + $0x90] sm:$0xff]
        %v361 = vld [vmem:[%s276 + $0x98] sm:$0xff]
        %v362 = vld [vmem:[%s276 + $0xa0] sm:$0xff]
        %v363 = vld [vmem:[%s276 + $0xa8] sm:$0xff]
        %v364 = vld [vmem:[%s276 + $0xb0] sm:$0xff]
        %v365 = vld [vmem:[%s276 + $0xb8] sm:$0xff]
        %v366 = vld [vmem:[%s276 + $0xc0] sm:$0xff]
        %v367 = vld [vmem:[%s276 + $0xc8] sm:$0xff]
        %v368 = vld [vmem:[%s276 + $0xd0] sm:$0xff]
        %v369 = vld [vmem:[%s276 + $0xd8] sm:$0xff]
        %v370 = vld [vmem:[%s276 + $0xe0] sm:$0xff]
        %v371 = vld [vmem:[%s276 + $0xe8] sm:$0xff]
        %v372 = vld [vmem:[%s276 + $0xf0] sm:$0xff]
        %v373 = vld [vmem:[%s276 + $0xf8] sm:$0xff]
        %v374 = vld [vmem:[%s276 + $0x100] sm:$0xff]
        %v375 = vld [vmem:[%s276 + $0x108] sm:$0xff]
        %v376 = vld [vmem:[%s276 + $0x110] sm:$0xff]
        %v377 = vld [vmem:[%s276 + $0x118] sm:$0xff]
        %v378 = vld [vmem:[%s276 + $0x120] sm:$0xff]
        %v379 = vld [vmem:[%s276 + $0x128] sm:$0xff]
        %v380 = vld [vmem:[%s276 + $0x130] sm:$0xff]
        %v381 = vld [vmem:[%s276 + $0x138] sm:$0xff]
        %v382 = vld [vmem:[%s276 + $0x140] sm:$0xff]
        %v383 = vld [vmem:[%s276 + $0x148] sm:$0xff]
        %v384 = vld [vmem:[%s276 + $0x150] sm:$0xff]
        %v385 = vld [vmem:[%s276 + $0x158] sm:$0xff]
        %v386 = vld [vmem:[%s276 + $0x160] sm:$0xff]
        %v387 = vld [vmem:[%s276 + $0x168] sm:$0xff]
        %v388 = vld [vmem:[%s276 + $0x170] sm:$0xff]
        %v389 = vld [vmem:[%s276 + $0x178] sm:$0xff]
        %v390 = vld [vmem:[%s276 + $0x180] sm:$0xff]
        %v391 = vld [vmem:[%s276 + $0x188] sm:$0xff]
        %v392 = vld [vmem:[%s276 + $0x190] sm:$0xff]
        %v393 = vld [vmem:[%s276 + $0x198] sm:$0xff]
        %v394 = vld [vmem:[%s276 + $0x1a0] sm:$0xff]
        %v395 = vld [vmem:[%s276 + $0x1a8] sm:$0xff]
        %v396 = vld [vmem:[%s276 + $0x1b0] sm:$0xff]
        %v397 = vld [vmem:[%s276 + $0x1b8] sm:$0xff]
        %v398 = vld [vmem:[%s276 + $0x1c0] sm:$0xff]
        %v399 = vld [vmem:[%s276 + $0x1c8] sm:$0xff]
        %v400 = vld [vmem:[%s276 + $0x1d0] sm:$0xff]
        %v401 = vld [vmem:[%s276 + $0x1d8] sm:$0xff]
        %v402 = vld [vmem:[%s276 + $0x1e0] sm:$0xff]
        %v403 = vld [vmem:[%s276 + $0x1e8] sm:$0xff]
        %v404 = vld [vmem:[%s276 + $0x1f0] sm:$0xff]
        %v405 = vld [vmem:[%s276 + $0x1f8] sm:$0xff]
        %406 = vmatpush.msra.mxu0 %v402
        %407 = vmatpush.msra.mxu0 %v398
        %408 = vmatpush.msra.mxu0 %v394
        %409 = vmatpush.msra.mxu0 %v390
        %410 = vmatpush.msra.mxu0 %v386
        %411 = vmatpush.msra.mxu0 %v382
        %412 = vmatpush.msra.mxu0 %v378
        %413 = vmatpush.msra.mxu0 %v374
        %414 = vmatpush.msra.mxu0 %v370
        %415 = vmatpush.msra.mxu0 %v366
        %416 = vmatpush.msra.mxu0 %v362
        %417 = vmatpush.msra.mxu0 %v358
        %418 = vmatpush.msra.mxu0 %v354
        %419 = vmatpush.msra.mxu0 %v350
        %420 = vmatpush.msra.mxu0 %v346
        %421 = vmatpush.msra.mxu0 %v342
        %422 = vmatmul.f32.gmra.mxu0 %v341
        %v423 = vpop.f32.mrf.mxu0
        %v424 = vadd.f32 0.0, %v423
        %425 = vdwg.mxu0
        %426 = vmatpush.msra.mxu0 %v403
        %427 = vmatpush.msra.mxu0 %v399
        %428 = vmatpush.msra.mxu0 %v395
        %429 = vmatpush.msra.mxu0 %v391
        %430 = vmatpush.msra.mxu0 %v387
        %431 = vmatpush.msra.mxu0 %v383
        %432 = vmatpush.msra.mxu0 %v379
        %433 = vmatpush.msra.mxu0 %v375
        %434 = vmatpush.msra.mxu0 %v371
        %435 = vmatpush.msra.mxu0 %v367
        %436 = vmatpush.msra.mxu0 %v363
        %437 = vmatpush.msra.mxu0 %v359
        %438 = vmatpush.msra.mxu0 %v355
        %439 = vmatpush.msra.mxu0 %v351
        %440 = vmatpush.msra.mxu0 %v347
        %441 = vmatpush.msra.mxu0 %v343
        %442 = vmatmul.f32.gmra.mxu0 %v341
        %v443 = vpop.f32.mrf.mxu0
        %v444 = vadd.f32 0.0, %v443
        %445 = vdwg.mxu0
        %446 = vmatpush.msra.mxu0 %v404
        %447 = vmatpush.msra.mxu0 %v400
        %448 = vmatpush.msra.mxu0 %v396
        %449 = vmatpush.msra.mxu0 %v392
        %450 = vmatpush.msra.mxu0 %v388
        %451 = vmatpush.msra.mxu0 %v384
        %452 = vmatpush.msra.mxu0 %v380
        %453 = vmatpush.msra.mxu0 %v376
        %454 = vmatpush.msra.mxu0 %v372
        %455 = vmatpush.msra.mxu0 %v368
        %456 = vmatpush.msra.mxu0 %v364
        %457 = vmatpush.msra.mxu0 %v360
        %458 = vmatpush.msra.mxu0 %v356
        %459 = vmatpush.msra.mxu0 %v352
        %460 = vmatpush.msra.mxu0 %v348
        %461 = vmatpush.msra.mxu0 %v344
        %462 = vmatmul.f32.gmra.mxu0 %v341
        %v463 = vpop.f32.mrf.mxu0
        %v464 = vadd.f32 0.0, %v463
        %465 = vdwg.mxu0
        %466 = vmatpush.msra.mxu0 %v405
        %467 = vmatpush.msra.mxu0 %v401
        %468 = vmatpush.msra.mxu0 %v397
        %469 = vmatpush.msra.mxu0 %v393
        %470 = vmatpush.msra.mxu0 %v389
        %471 = vmatpush.msra.mxu0 %v385
        %472 = vmatpush.msra.mxu0 %v381
        %473 = vmatpush.msra.mxu0 %v377
        %474 = vmatpush.msra.mxu0 %v373
        %475 = vmatpush.msra.mxu0 %v369
        %476 = vmatpush.msra.mxu0 %v365
        %477 = vmatpush.msra.mxu0 %v361
        %478 = vmatpush.msra.mxu0 %v357
        %479 = vmatpush.msra.mxu0 %v353
        %480 = vmatpush.msra.mxu0 %v349
        %481 = vmatpush.msra.mxu0 %v345
        %482 = vmatmul.f32.gmra.mxu0 %v341
        %v483 = vpop.f32.mrf.mxu0
        %v484 = vadd.f32 0.0, %v483
        %485 = vdwg.mxu0
        %v486 = vadd.f32 %v337, %v424
        %v487 = vadd.f32 %v338, %v444
        %v488 = vadd.f32 %v339, %v464
        %v489 = vadd.f32 %v340, %v484
        %v490 = vxor.u32 %v486, 2147483648
        %v491 = vxor.u32 %v487, 2147483648
        %v492 = vxor.u32 %v488, 2147483648
        %v493 = vmul.f32 %v490, 1.442695
        %v494 = vpow.pop %v493
        %v495 = vmul.f32 %v491, 1.442695
        %v496 = vpow.pop %v495
        %v497 = vmul.f32 %v492, 1.442695
        %v498 = vpow.pop %v497
        %v499 = vadd.f32 %v494, 1.0
        %v500 = vadd.f32 %v496, 1.0
        %v501 = vadd.f32 %v498, 1.0
        %v502 = vrcp.pop %v499
        %v503 = vmul.f32 %v499, %v502
        %v504 = vsub.f32 1.0, %v503
        %v505 = vmul.f32 %v502, %v504
        %v506 = vadd.f32 %v502, %v505
        %vm507 = vweird.f32 %v499
        %vm508 = vweird.f32 %v502
        %vm509 = vmor %vm507, %vm508
        %v510 = vsel %vm509, %v502, %v506
        %v511 = vand.u32 2147483647, %v499
        %vm512 = vcmp.eq.f32.partialorder %v511, 8.507059e+37
        %v513 = vand.u32 %v499, 2147483648
        %v514 = vor.u32 1.1754944e-38, %v513
        %v515 = vsel %vm512, %v514, %v510
        %v516 = vmul.f32 1.0, %v515
        %v517 = vrcp.pop %v500
        %v518 = vmul.f32 %v500, %v517
        %v519 = vsub.f32 1.0, %v518
        %v520 = vmul.f32 %v517, %v519
        %v521 = vadd.f32 %v517, %v520
        %vm522 = vweird.f32 %v500
        %vm523 = vweird.f32 %v517
        %vm524 = vmor %vm522, %vm523
        %v525 = vsel %vm524, %v517, %v521
        %v526 = vand.u32 2147483647, %v500
        %vm527 = vcmp.eq.f32.partialorder %v526, 8.507059e+37
        %v528 = vand.u32 %v500, 2147483648
        %v529 = vor.u32 1.1754944e-38, %v528
        %v530 = vsel %vm527, %v529, %v525
        %v531 = vmul.f32 1.0, %v530
        %v532 = vrcp.pop %v501
        %v533 = vmul.f32 %v501, %v532
        %v534 = vsub.f32 1.0, %v533
        %v535 = vmul.f32 %v532, %v534
        %v536 = vadd.f32 %v532, %v535
        %vm537 = vweird.f32 %v501
        %vm538 = vweird.f32 %v532
        %vm539 = vmor %vm537, %vm538
        %v540 = vsel %vm539, %v532, %v536
        %v541 = vand.u32 2147483647, %v501
        %vm542 = vcmp.eq.f32.partialorder %v541, 8.507059e+37
        %v543 = vand.u32 %v501, 2147483648
        %v544 = vor.u32 1.1754944e-38, %v543
        %v545 = vsel %vm542, %v544, %v540
        %v546 = vmul.f32 1.0, %v545
        %v547 = vtanh.pop %v489
        %v548 = vld [vmem:[#allocation3] sm:$0xff]
        %v549 = vmul.f32 %v531, %v548
        %v550 = vmul.f32 %v516, %v547
        %v551 = vadd.f32 %v549, %v550
        %v552 = vtanh.pop %v551
        %v553 = vmul.f32 %v546, %v552
        %554 = vst [vmem:[#allocation3] sm:$0xff] %v551
        %555 = vst [vmem:[#allocation2] sm:$0xff] %v553
        %s556 = smul.u32 %s333, 8
        %s557 = scalar_lea.vmem %s302, %s556 [#allocation9]
        %558 = vst [vmem:[%s557] sm:$0xff] %v553
        %s559 = smul.u32 %s32, 2
        %s560 = ssub.s32 1, %s559
        %s561 = sadd.s32 %s560, %s333
        %s562 = smul.u32 %s561, 4
        %s563 = smul.addr %s562, 8
        %s564 = scalar_lea.vmem %s266, %s563 [#allocation4]
        %v565 = vld [vmem:[%s564] sm:$0xff]
        %v566 = vld [vmem:[%s564 + $0x8] sm:$0xff]
        %v567 = vld [vmem:[%s564 + $0x10] sm:$0xff]
        %v568 = vld [vmem:[%s564 + $0x18] sm:$0xff]
        %v569 = vld [vmem:[#allocation2] sm:$0xff]
        %v570 = vld [vmem:[%s276] sm:$0xff]
        %v571 = vld [vmem:[%s276 + $0x8] sm:$0xff]
        %v572 = vld [vmem:[%s276 + $0x10] sm:$0xff]
        %v573 = vld [vmem:[%s276 + $0x18] sm:$0xff]
        %v574 = vld [vmem:[%s276 + $0x20] sm:$0xff]
        %v575 = vld [vmem:[%s276 + $0x28] sm:$0xff]
        %v576 = vld [vmem:[%s276 + $0x30] sm:$0xff]
        %v577 = vld [vmem:[%s276 + $0x38] sm:$0xff]
        %v578 = vld [vmem:[%s276 + $0x40] sm:$0xff]
        %v579 = vld [vmem:[%s276 + $0x48] sm:$0xff]
        %v580 = vld [vmem:[%s276 + $0x50] sm:$0xff]
        %v581 = vld [vmem:[%s276 + $0x58] sm:$0xff]
        %v582 = vld [vmem:[%s276 + $0x60] sm:$0xff]
        %v583 = vld [vmem:[%s276 + $0x68] sm:$0xff]
        %v584 = vld [vmem:[%s276 + $0x70] sm:$0xff]
        %v585 = vld [vmem:[%s276 + $0x78] sm:$0xff]
        %v586 = vld [vmem:[%s276 + $0x80] sm:$0xff]
        %v587 = vld [vmem:[%s276 + $0x88] sm:$0xff]
        %v588 = vld [vmem:[%s276 + $0x90] sm:$0xff]
        %v589 = vld [vmem:[%s276 + $0x98] sm:$0xff]
        %v590 = vld [vmem:[%s276 + $0xa0] sm:$0xff]
        %v591 = vld [vmem:[%s276 + $0xa8] sm:$0xff]
        %v592 = vld [vmem:[%s276 + $0xb0] sm:$0xff]
        %v593 = vld [vmem:[%s276 + $0xb8] sm:$0xff]
        %v594 = vld [vmem:[%s276 + $0xc0] sm:$0xff]
        %v595 = vld [vmem:[%s276 + $0xc8] sm:$0xff]
        %v596 = vld [vmem:[%s276 + $0xd0] sm:$0xff]
        %v597 = vld [vmem:[%s276 + $0xd8] sm:$0xff]
        %v598 = vld [vmem:[%s276 + $0xe0] sm:$0xff]
        %v599 = vld [vmem:[%s276 + $0xe8] sm:$0xff]
        %v600 = vld [vmem:[%s276 + $0xf0] sm:$0xff]
        %v601 = vld [vmem:[%s276 + $0xf8] sm:$0xff]
        %v602 = vld [vmem:[%s276 + $0x100] sm:$0xff]
        %v603 = vld [vmem:[%s276 + $0x108] sm:$0xff]
        %v604 = vld [vmem:[%s276 + $0x110] sm:$0xff]
        %v605 = vld [vmem:[%s276 + $0x118] sm:$0xff]
        %v606 = vld [vmem:[%s276 + $0x120] sm:$0xff]
        %v607 = vld [vmem:[%s276 + $0x128] sm:$0xff]
        %v608 = vld [vmem:[%s276 + $0x130] sm:$0xff]
        %v609 = vld [vmem:[%s276 + $0x138] sm:$0xff]
        %v610 = vld [vmem:[%s276 + $0x140] sm:$0xff]
        %v611 = vld [vmem:[%s276 + $0x148] sm:$0xff]
        %v612 = vld [vmem:[%s276 + $0x150] sm:$0xff]
        %v613 = vld [vmem:[%s276 + $0x158] sm:$0xff]
        %v614 = vld [vmem:[%s276 + $0x160] sm:$0xff]
        %v615 = vld [vmem:[%s276 + $0x168] sm:$0xff]
        %v616 = vld [vmem:[%s276 + $0x170] sm:$0xff]
        %v617 = vld [vmem:[%s276 + $0x178] sm:$0xff]
        %v618 = vld [vmem:[%s276 + $0x180] sm:$0xff]
        %v619 = vld [vmem:[%s276 + $0x188] sm:$0xff]
        %v620 = vld [vmem:[%s276 + $0x190] sm:$0xff]
        %v621 = vld [vmem:[%s276 + $0x198] sm:$0xff]
        %v622 = vld [vmem:[%s276 + $0x1a0] sm:$0xff]
        %v623 = vld [vmem:[%s276 + $0x1a8] sm:$0xff]
        %v624 = vld [vmem:[%s276 + $0x1b0] sm:$0xff]
        %v625 = vld [vmem:[%s276 + $0x1b8] sm:$0xff]
        %v626 = vld [vmem:[%s276 + $0x1c0] sm:$0xff]
        %v627 = vld [vmem:[%s276 + $0x1c8] sm:$0xff]
        %v628 = vld [vmem:[%s276 + $0x1d0] sm:$0xff]
        %v629 = vld [vmem:[%s276 + $0x1d8] sm:$0xff]
        %v630 = vld [vmem:[%s276 + $0x1e0] sm:$0xff]
        %v631 = vld [vmem:[%s276 + $0x1e8] sm:$0xff]
        %v632 = vld [vmem:[%s276 + $0x1f0] sm:$0xff]
        %v633 = vld [vmem:[%s276 + $0x1f8] sm:$0xff]
        %634 = vmatpush.msra.mxu0 %v630
        %635 = vmatpush.msra.mxu0 %v626
        %636 = vmatpush.msra.mxu0 %v622
        %637 = vmatpush.msra.mxu0 %v618
        %638 = vmatpush.msra.mxu0 %v614
        %639 = vmatpush.msra.mxu0 %v610
        %640 = vmatpush.msra.mxu0 %v606
        %641 = vmatpush.msra.mxu0 %v602
        %642 = vmatpush.msra.mxu0 %v598
        %643 = vmatpush.msra.mxu0 %v594
        %644 = vmatpush.msra.mxu0 %v590
        %645 = vmatpush.msra.mxu0 %v586
        %646 = vmatpush.msra.mxu0 %v582
        %647 = vmatpush.msra.mxu0 %v578
        %648 = vmatpush.msra.mxu0 %v574
        %649 = vmatpush.msra.mxu0 %v570
        %650 = vmatmul.f32.gmra.mxu0 %v569
        %v651 = vpop.f32.mrf.mxu0
        %v652 = vadd.f32 0.0, %v651
        %653 = vdwg.mxu0
        %654 = vmatpush.msra.mxu0 %v631
        %655 = vmatpush.msra.mxu0 %v627
        %656 = vmatpush.msra.mxu0 %v623
        %657 = vmatpush.msra.mxu0 %v619
        %658 = vmatpush.msra.mxu0 %v615
        %659 = vmatpush.msra.mxu0 %v611
        %660 = vmatpush.msra.mxu0 %v607
        %661 = vmatpush.msra.mxu0 %v603
        %662 = vmatpush.msra.mxu0 %v599
        %663 = vmatpush.msra.mxu0 %v595
        %664 = vmatpush.msra.mxu0 %v591
        %665 = vmatpush.msra.mxu0 %v587
        %666 = vmatpush.msra.mxu0 %v583
        %667 = vmatpush.msra.mxu0 %v579
        %668 = vmatpush.msra.mxu0 %v575
        %669 = vmatpush.msra.mxu0 %v571
        %670 = vmatmul.f32.gmra.mxu0 %v569
        %v671 = vpop.f32.mrf.mxu0
        %v672 = vadd.f32 0.0, %v671
        %673 = vdwg.mxu0
        %674 = vmatpush.msra.mxu0 %v632
        %675 = vmatpush.msra.mxu0 %v628
        %676 = vmatpush.msra.mxu0 %v624
        %677 = vmatpush.msra.mxu0 %v620
        %678 = vmatpush.msra.mxu0 %v616
        %679 = vmatpush.msra.mxu0 %v612
        %680 = vmatpush.msra.mxu0 %v608
        %681 = vmatpush.msra.mxu0 %v604
        %682 = vmatpush.msra.mxu0 %v600
        %683 = vmatpush.msra.mxu0 %v596
        %684 = vmatpush.msra.mxu0 %v592
        %685 = vmatpush.msra.mxu0 %v588
        %686 = vmatpush.msra.mxu0 %v584
        %687 = vmatpush.msra.mxu0 %v580
        %688 = vmatpush.msra.mxu0 %v576
        %689 = vmatpush.msra.mxu0 %v572
        %690 = vmatmul.f32.gmra.mxu0 %v569
        %v691 = vpop.f32.mrf.mxu0
        %v692 = vadd.f32 0.0, %v691
        %693 = vdwg.mxu0
        %694 = vmatpush.msra.mxu0 %v633
        %695 = vmatpush.msra.mxu0 %v629
        %696 = vmatpush.msra.mxu0 %v625
        %697 = vmatpush.msra.mxu0 %v621
        %698 = vmatpush.msra.mxu0 %v617
        %699 = vmatpush.msra.mxu0 %v613
        %700 = vmatpush.msra.mxu0 %v609
        %701 = vmatpush.msra.mxu0 %v605
        %702 = vmatpush.msra.mxu0 %v601
        %703 = vmatpush.msra.mxu0 %v597
        %704 = vmatpush.msra.mxu0 %v593
        %705 = vmatpush.msra.mxu0 %v589
        %706 = vmatpush.msra.mxu0 %v585
        %707 = vmatpush.msra.mxu0 %v581
        %708 = vmatpush.msra.mxu0 %v577
        %709 = vmatpush.msra.mxu0 %v573
        %710 = vmatmul.f32.gmra.mxu0 %v569
        %v711 = vpop.f32.mrf.mxu0
        %v712 = vadd.f32 0.0, %v711
        %713 = vdwg.mxu0
        %v714 = vadd.f32 %v565, %v652
        %v715 = vadd.f32 %v566, %v672
        %v716 = vadd.f32 %v567, %v692
        %v717 = vadd.f32 %v568, %v712
        %v718 = vxor.u32 %v714, 2147483648
        %v719 = vxor.u32 %v715, 2147483648
        %v720 = vxor.u32 %v716, 2147483648
        %v721 = vmul.f32 %v718, 1.442695
        %v722 = vpow.pop %v721
        %v723 = vmul.f32 %v719, 1.442695
        %v724 = vpow.pop %v723
        %v725 = vmul.f32 %v720, 1.442695
        %v726 = vpow.pop %v725
        %v727 = vadd.f32 %v722, 1.0
        %v728 = vadd.f32 %v724, 1.0
        %v729 = vadd.f32 %v726, 1.0
        %v730 = vrcp.pop %v727
        %v731 = vmul.f32 %v727, %v730
        %v732 = vsub.f32 1.0, %v731
        %v733 = vmul.f32 %v730, %v732
        %v734 = vadd.f32 %v730, %v733
        %vm735 = vweird.f32 %v727
        %vm736 = vweird.f32 %v730
        %vm737 = vmor %vm735, %vm736
        %v738 = vsel %vm737, %v730, %v734
        %v739 = vand.u32 2147483647, %v727
        %vm740 = vcmp.eq.f32.partialorder %v739, 8.507059e+37
        %v741 = vand.u32 %v727, 2147483648
        %v742 = vor.u32 1.1754944e-38, %v741
        %v743 = vsel %vm740, %v742, %v738
        %v744 = vmul.f32 1.0, %v743
        %v745 = vrcp.pop %v728
        %v746 = vmul.f32 %v728, %v745
        %v747 = vsub.f32 1.0, %v746
        %v748 = vmul.f32 %v745, %v747
        %v749 = vadd.f32 %v745, %v748
        %vm750 = vweird.f32 %v728
        %vm751 = vweird.f32 %v745
        %vm752 = vmor %vm750, %vm751
        %v753 = vsel %vm752, %v745, %v749
        %v754 = vand.u32 2147483647, %v728
        %vm755 = vcmp.eq.f32.partialorder %v754, 8.507059e+37
        %v756 = vand.u32 %v728, 2147483648
        %v757 = vor.u32 1.1754944e-38, %v756
        %v758 = vsel %vm755, %v757, %v753
        %v759 = vmul.f32 1.0, %v758
        %v760 = vrcp.pop %v729
        %v761 = vmul.f32 %v729, %v760
        %v762 = vsub.f32 1.0, %v761
        %v763 = vmul.f32 %v760, %v762
        %v764 = vadd.f32 %v760, %v763
        %vm765 = vweird.f32 %v729
        %vm766 = vweird.f32 %v760
        %vm767 = vmor %vm765, %vm766
        %v768 = vsel %vm767, %v760, %v764
        %v769 = vand.u32 2147483647, %v729
        %vm770 = vcmp.eq.f32.partialorder %v769, 8.507059e+37
        %v771 = vand.u32 %v729, 2147483648
        %v772 = vor.u32 1.1754944e-38, %v771
        %v773 = vsel %vm770, %v772, %v768
        %v774 = vmul.f32 1.0, %v773
        %v775 = vtanh.pop %v717
        %v776 = vld [vmem:[#allocation3] sm:$0xff]
        %v777 = vmul.f32 %v759, %v776
        %v778 = vmul.f32 %v744, %v775
        %v779 = vadd.f32 %v777, %v778
        %v780 = vtanh.pop %v779
        %v781 = vmul.f32 %v774, %v780
        %782 = vst [vmem:[#allocation3] sm:$0xff] %v779
        %783 = vst [vmem:[#allocation2] sm:$0xff] %v781
        %s784 = smul.u32 %s561, 8
        %s785 = scalar_lea.vmem %s302, %s784 [#allocation9]
        %786 = vst [vmem:[%s785] sm:$0xff] %v781
        %s787 = smul.u32 %s560, 2
        %s788 = sadd.s32 %s787, %s333
        %s789 = smul.u32 %s788, 4
        %s790 = smul.addr %s789, 8
        %s791 = scalar_lea.vmem %s266, %s790 [#allocation4]
        %v792 = vld [vmem:[%s791] sm:$0xff]
        %v793 = vld [vmem:[%s791 + $0x8] sm:$0xff]
        %v794 = vld [vmem:[%s791 + $0x10] sm:$0xff]
        %v795 = vld [vmem:[%s791 + $0x18] sm:$0xff]
        %v796 = vld [vmem:[#allocation2] sm:$0xff]
        %v797 = vld [vmem:[%s276] sm:$0xff]
        %v798 = vld [vmem:[%s276 + $0x8] sm:$0xff]
        %v799 = vld [vmem:[%s276 + $0x10] sm:$0xff]
        %v800 = vld [vmem:[%s276 + $0x18] sm:$0xff]
        %v801 = vld [vmem:[%s276 + $0x20] sm:$0xff]
        %v802 = vld [vmem:[%s276 + $0x28] sm:$0xff]
        %v803 = vld [vmem:[%s276 + $0x30] sm:$0xff]
        %v804 = vld [vmem:[%s276 + $0x38] sm:$0xff]
        %v805 = vld [vmem:[%s276 + $0x40] sm:$0xff]
        %v806 = vld [vmem:[%s276 + $0x48] sm:$0xff]
        %v807 = vld [vmem:[%s276 + $0x50] sm:$0xff]
        %v808 = vld [vmem:[%s276 + $0x58] sm:$0xff]
        %v809 = vld [vmem:[%s276 + $0x60] sm:$0xff]
        %v810 = vld [vmem:[%s276 + $0x68] sm:$0xff]
        %v811 = vld [vmem:[%s276 + $0x70] sm:$0xff]
        %v812 = vld [vmem:[%s276 + $0x78] sm:$0xff]
        %v813 = vld [vmem:[%s276 + $0x80] sm:$0xff]
        %v814 = vld [vmem:[%s276 + $0x88] sm:$0xff]
        %v815 = vld [vmem:[%s276 + $0x90] sm:$0xff]
        %v816 = vld [vmem:[%s276 + $0x98] sm:$0xff]
        %v817 = vld [vmem:[%s276 + $0xa0] sm:$0xff]
        %v818 = vld [vmem:[%s276 + $0xa8] sm:$0xff]
        %v819 = vld [vmem:[%s276 + $0xb0] sm:$0xff]
        %v820 = vld [vmem:[%s276 + $0xb8] sm:$0xff]
        %v821 = vld [vmem:[%s276 + $0xc0] sm:$0xff]
        %v822 = vld [vmem:[%s276 + $0xc8] sm:$0xff]
        %v823 = vld [vmem:[%s276 + $0xd0] sm:$0xff]
        %v824 = vld [vmem:[%s276 + $0xd8] sm:$0xff]
        %v825 = vld [vmem:[%s276 + $0xe0] sm:$0xff]
        %v826 = vld [vmem:[%s276 + $0xe8] sm:$0xff]
        %v827 = vld [vmem:[%s276 + $0xf0] sm:$0xff]
        %v828 = vld [vmem:[%s276 + $0xf8] sm:$0xff]
        %v829 = vld [vmem:[%s276 + $0x100] sm:$0xff]
        %v830 = vld [vmem:[%s276 + $0x108] sm:$0xff]
        %v831 = vld [vmem:[%s276 + $0x110] sm:$0xff]
        %v832 = vld [vmem:[%s276 + $0x118] sm:$0xff]
        %v833 = vld [vmem:[%s276 + $0x120] sm:$0xff]
        %v834 = vld [vmem:[%s276 + $0x128] sm:$0xff]
        %v835 = vld [vmem:[%s276 + $0x130] sm:$0xff]
        %v836 = vld [vmem:[%s276 + $0x138] sm:$0xff]
        %v837 = vld [vmem:[%s276 + $0x140] sm:$0xff]
        %v838 = vld [vmem:[%s276 + $0x148] sm:$0xff]
        %v839 = vld [vmem:[%s276 + $0x150] sm:$0xff]
        %v840 = vld [vmem:[%s276 + $0x158] sm:$0xff]
        %v841 = vld [vmem:[%s276 + $0x160] sm:$0xff]
        %v842 = vld [vmem:[%s276 + $0x168] sm:$0xff]
        %v843 = vld [vmem:[%s276 + $0x170] sm:$0xff]
        %v844 = vld [vmem:[%s276 + $0x178] sm:$0xff]
        %v845 = vld [vmem:[%s276 + $0x180] sm:$0xff]
        %v846 = vld [vmem:[%s276 + $0x188] sm:$0xff]
        %v847 = vld [vmem:[%s276 + $0x190] sm:$0xff]
        %v848 = vld [vmem:[%s276 + $0x198] sm:$0xff]
        %v849 = vld [vmem:[%s276 + $0x1a0] sm:$0xff]
        %v850 = vld [vmem:[%s276 + $0x1a8] sm:$0xff]
        %v851 = vld [vmem:[%s276 + $0x1b0] sm:$0xff]
        %v852 = vld [vmem:[%s276 + $0x1b8] sm:$0xff]
        %v853 = vld [vmem:[%s276 + $0x1c0] sm:$0xff]
        %v854 = vld [vmem:[%s276 + $0x1c8] sm:$0xff]
        %v855 = vld [vmem:[%s276 + $0x1d0] sm:$0xff]
        %v856 = vld [vmem:[%s276 + $0x1d8] sm:$0xff]
        %v857 = vld [vmem:[%s276 + $0x1e0] sm:$0xff]
        %v858 = vld [vmem:[%s276 + $0x1e8] sm:$0xff]
        %v859 = vld [vmem:[%s276 + $0x1f0] sm:$0xff]
        %v860 = vld [vmem:[%s276 + $0x1f8] sm:$0xff]
        %861 = vmatpush.msra.mxu0 %v857
        %862 = vmatpush.msra.mxu0 %v853
        %863 = vmatpush.msra.mxu0 %v849
        %864 = vmatpush.msra.mxu0 %v845
        %865 = vmatpush.msra.mxu0 %v841
        %866 = vmatpush.msra.mxu0 %v837
        %867 = vmatpush.msra.mxu0 %v833
        %868 = vmatpush.msra.mxu0 %v829
        %869 = vmatpush.msra.mxu0 %v825
        %870 = vmatpush.msra.mxu0 %v821
        %871 = vmatpush.msra.mxu0 %v817
        %872 = vmatpush.msra.mxu0 %v813
        %873 = vmatpush.msra.mxu0 %v809
        %874 = vmatpush.msra.mxu0 %v805
        %875 = vmatpush.msra.mxu0 %v801
        %876 = vmatpush.msra.mxu0 %v797
        %877 = vmatmul.f32.gmra.mxu0 %v796
        %v878 = vpop.f32.mrf.mxu0
        %v879 = vadd.f32 0.0, %v878
        %880 = vdwg.mxu0
        %881 = vmatpush.msra.mxu0 %v858
        %882 = vmatpush.msra.mxu0 %v854
        %883 = vmatpush.msra.mxu0 %v850
        %884 = vmatpush.msra.mxu0 %v846
        %885 = vmatpush.msra.mxu0 %v842
        %886 = vmatpush.msra.mxu0 %v838
        %887 = vmatpush.msra.mxu0 %v834
        %888 = vmatpush.msra.mxu0 %v830
        %889 = vmatpush.msra.mxu0 %v826
        %890 = vmatpush.msra.mxu0 %v822
        %891 = vmatpush.msra.mxu0 %v818
        %892 = vmatpush.msra.mxu0 %v814
        %893 = vmatpush.msra.mxu0 %v810
        %894 = vmatpush.msra.mxu0 %v806
        %895 = vmatpush.msra.mxu0 %v802
        %896 = vmatpush.msra.mxu0 %v798
        %897 = vmatmul.f32.gmra.mxu0 %v796
        %v898 = vpop.f32.mrf.mxu0
        %v899 = vadd.f32 0.0, %v898
        %900 = vdwg.mxu0
        %901 = vmatpush.msra.mxu0 %v859
        %902 = vmatpush.msra.mxu0 %v855
        %903 = vmatpush.msra.mxu0 %v851
        %904 = vmatpush.msra.mxu0 %v847
        %905 = vmatpush.msra.mxu0 %v843
        %906 = vmatpush.msra.mxu0 %v839
        %907 = vmatpush.msra.mxu0 %v835
        %908 = vmatpush.msra.mxu0 %v831
        %909 = vmatpush.msra.mxu0 %v827
        %910 = vmatpush.msra.mxu0 %v823
        %911 = vmatpush.msra.mxu0 %v819
        %912 = vmatpush.msra.mxu0 %v815
        %913 = vmatpush.msra.mxu0 %v811
        %914 = vmatpush.msra.mxu0 %v807
        %915 = vmatpush.msra.mxu0 %v803
        %916 = vmatpush.msra.mxu0 %v799
        %917 = vmatmul.f32.gmra.mxu0 %v796
        %v918 = vpop.f32.mrf.mxu0
        %v919 = vadd.f32 0.0, %v918
        %920 = vdwg.mxu0
        %921 = vmatpush.msra.mxu0 %v860
        %922 = vmatpush.msra.mxu0 %v856
        %923 = vmatpush.msra.mxu0 %v852
        %924 = vmatpush.msra.mxu0 %v848
        %925 = vmatpush.msra.mxu0 %v844
        %926 = vmatpush.msra.mxu0 %v840
        %927 = vmatpush.msra.mxu0 %v836
        %928 = vmatpush.msra.mxu0 %v832
        %929 = vmatpush.msra.mxu0 %v828
        %930 = vmatpush.msra.mxu0 %v824
        %931 = vmatpush.msra.mxu0 %v820
        %932 = vmatpush.msra.mxu0 %v816
        %933 = vmatpush.msra.mxu0 %v812
        %934 = vmatpush.msra.mxu0 %v808
        %935 = vmatpush.msra.mxu0 %v804
        %936 = vmatpush.msra.mxu0 %v800
        %937 = vmatmul.f32.gmra.mxu0 %v796
        %v938 = vpop.f32.mrf.mxu0
        %v939 = vadd.f32 0.0, %v938
        %940 = vdwg.mxu0
        %v941 = vadd.f32 %v792, %v879
        %v942 = vadd.f32 %v793, %v899
        %v943 = vadd.f32 %v794, %v919
        %v944 = vadd.f32 %v795, %v939
        %v945 = vxor.u32 %v941, 2147483648
        %v946 = vxor.u32 %v942, 2147483648
        %v947 = vxor.u32 %v943, 2147483648
        %v948 = vmul.f32 %v945, 1.442695
        %v949 = vpow.pop %v948
        %v950 = vmul.f32 %v946, 1.442695
        %v951 = vpow.pop %v950
        %v952 = vmul.f32 %v947, 1.442695
        %v953 = vpow.pop %v952
        %v954 = vadd.f32 %v949, 1.0
        %v955 = vadd.f32 %v951, 1.0
        %v956 = vadd.f32 %v953, 1.0
        %v957 = vrcp.pop %v954
        %v958 = vmul.f32 %v954, %v957
        %v959 = vsub.f32 1.0, %v958
        %v960 = vmul.f32 %v957, %v959
        %v961 = vadd.f32 %v957, %v960
        %vm962 = vweird.f32 %v954
        %vm963 = vweird.f32 %v957
        %vm964 = vmor %vm962, %vm963
        %v965 = vsel %vm964, %v957, %v961
        %v966 = vand.u32 2147483647, %v954
        %vm967 = vcmp.eq.f32.partialorder %v966, 8.507059e+37
        %v968 = vand.u32 %v954, 2147483648
        %v969 = vor.u32 1.1754944e-38, %v968
        %v970 = vsel %vm967, %v969, %v965
        %v971 = vmul.f32 1.0, %v970
        %v972 = vrcp.pop %v955
        %v973 = vmul.f32 %v955, %v972
        %v974 = vsub.f32 1.0, %v973
        %v975 = vmul.f32 %v972, %v974
        %v976 = vadd.f32 %v972, %v975
        %vm977 = vweird.f32 %v955
        %vm978 = vweird.f32 %v972
        %vm979 = vmor %vm977, %vm978
        %v980 = vsel %vm979, %v972, %v976
        %v981 = vand.u32 2147483647, %v955
        %vm982 = vcmp.eq.f32.partialorder %v981, 8.507059e+37
        %v983 = vand.u32 %v955, 2147483648
        %v984 = vor.u32 1.1754944e-38, %v983
        %v985 = vsel %vm982, %v984, %v980
        %v986 = vmul.f32 1.0, %v985
        %v987 = vrcp.pop %v956
        %v988 = vmul.f32 %v956, %v987
        %v989 = vsub.f32 1.0, %v988
        %v990 = vmul.f32 %v987, %v989
        %v991 = vadd.f32 %v987, %v990
        %vm992 = vweird.f32 %v956
        %vm993 = vweird.f32 %v987
        %vm994 = vmor %vm992, %vm993
        %v995 = vsel %vm994, %v987, %v991
        %v996 = vand.u32 2147483647, %v956
        %vm997 = vcmp.eq.f32.partialorder %v996, 8.507059e+37
        %v998 = vand.u32 %v956, 2147483648
        %v999 = vor.u32 1.1754944e-38, %v998
        %v1000 = vsel %vm997, %v999, %v995
        %v1001 = vmul.f32 1.0, %v1000
        %v1002 = vtanh.pop %v944
        %v1003 = vld [vmem:[#allocation3] sm:$0xff]
        %v1004 = vmul.f32 %v986, %v1003
        %v1005 = vmul.f32 %v971, %v1002
        %v1006 = vadd.f32 %v1004, %v1005
        %v1007 = vtanh.pop %v1006
        %v1008 = vmul.f32 %v1001, %v1007
        %1009 = vst [vmem:[#allocation3] sm:$0xff] %v1006
        %1010 = vst [vmem:[#allocation2] sm:$0xff] %v1008
        %s1011 = smul.u32 %s788, 8
        %s1012 = scalar_lea.vmem %s302, %s1011 [#allocation9]
        %1013 = vst [vmem:[%s1012] sm:$0xff] %v1008
        %s1014 = smul.u32 %s560, 3
        %s1015 = sadd.s32 %s1014, %s333
        %s1016 = smul.u32 %s1015, 4
        %s1017 = smul.addr %s1016, 8
        %s1018 = scalar_lea.vmem %s266, %s1017 [#allocation4]
        %v1019 = vld [vmem:[%s1018] sm:$0xff]
        %v1020 = vld [vmem:[%s1018 + $0x8] sm:$0xff]
        %v1021 = vld [vmem:[%s1018 + $0x10] sm:$0xff]
        %v1022 = vld [vmem:[%s1018 + $0x18] sm:$0xff]
        %v1023 = vld [vmem:[#allocation2] sm:$0xff]
        %v1024 = vld [vmem:[%s276] sm:$0xff]
        %v1025 = vld [vmem:[%s276 + $0x8] sm:$0xff]
        %v1026 = vld [vmem:[%s276 + $0x10] sm:$0xff]
        %v1027 = vld [vmem:[%s276 + $0x18] sm:$0xff]
        %v1028 = vld [vmem:[%s276 + $0x20] sm:$0xff]
        %v1029 = vld [vmem:[%s276 + $0x28] sm:$0xff]
        %v1030 = vld [vmem:[%s276 + $0x30] sm:$0xff]
        %v1031 = vld [vmem:[%s276 + $0x38] sm:$0xff]
        %v1032 = vld [vmem:[%s276 + $0x40] sm:$0xff]
        %v1033 = vld [vmem:[%s276 + $0x48] sm:$0xff]
        %v1034 = vld [vmem:[%s276 + $0x50] sm:$0xff]
        %v1035 = vld [vmem:[%s276 + $0x58] sm:$0xff]
        %v1036 = vld [vmem:[%s276 + $0x60] sm:$0xff]
        %v1037 = vld [vmem:[%s276 + $0x68] sm:$0xff]
        %v1038 = vld [vmem:[%s276 + $0x70] sm:$0xff]
        %v1039 = vld [vmem:[%s276 + $0x78] sm:$0xff]
        %v1040 = vld [vmem:[%s276 + $0x80] sm:$0xff]
        %v1041 = vld [vmem:[%s276 + $0x88] sm:$0xff]
        %v1042 = vld [vmem:[%s276 + $0x90] sm:$0xff]
        %v1043 = vld [vmem:[%s276 + $0x98] sm:$0xff]
        %v1044 = vld [vmem:[%s276 + $0xa0] sm:$0xff]
        %v1045 = vld [vmem:[%s276 + $0xa8] sm:$0xff]
        %v1046 = vld [vmem:[%s276 + $0xb0] sm:$0xff]
        %v1047 = vld [vmem:[%s276 + $0xb8] sm:$0xff]
        %v1048 = vld [vmem:[%s276 + $0xc0] sm:$0xff]
        %v1049 = vld [vmem:[%s276 + $0xc8] sm:$0xff]
        %v1050 = vld [vmem:[%s276 + $0xd0] sm:$0xff]
        %v1051 = vld [vmem:[%s276 + $0xd8] sm:$0xff]
        %v1052 = vld [vmem:[%s276 + $0xe0] sm:$0xff]
        %v1053 = vld [vmem:[%s276 + $0xe8] sm:$0xff]
        %v1054 = vld [vmem:[%s276 + $0xf0] sm:$0xff]
        %v1055 = vld [vmem:[%s276 + $0xf8] sm:$0xff]
        %v1056 = vld [vmem:[%s276 + $0x100] sm:$0xff]
        %v1057 = vld [vmem:[%s276 + $0x108] sm:$0xff]
        %v1058 = vld [vmem:[%s276 + $0x110] sm:$0xff]
        %v1059 = vld [vmem:[%s276 + $0x118] sm:$0xff]
        %v1060 = vld [vmem:[%s276 + $0x120] sm:$0xff]
        %v1061 = vld [vmem:[%s276 + $0x128] sm:$0xff]
        %v1062 = vld [vmem:[%s276 + $0x130] sm:$0xff]
        %v1063 = vld [vmem:[%s276 + $0x138] sm:$0xff]
        %v1064 = vld [vmem:[%s276 + $0x140] sm:$0xff]
        %v1065 = vld [vmem:[%s276 + $0x148] sm:$0xff]
        %v1066 = vld [vmem:[%s276 + $0x150] sm:$0xff]
        %v1067 = vld [vmem:[%s276 + $0x158] sm:$0xff]
        %v1068 = vld [vmem:[%s276 + $0x160] sm:$0xff]
        %v1069 = vld [vmem:[%s276 + $0x168] sm:$0xff]
        %v1070 = vld [vmem:[%s276 + $0x170] sm:$0xff]
        %v1071 = vld [vmem:[%s276 + $0x178] sm:$0xff]
        %v1072 = vld [vmem:[%s276 + $0x180] sm:$0xff]
        %v1073 = vld [vmem:[%s276 + $0x188] sm:$0xff]
        %v1074 = vld [vmem:[%s276 + $0x190] sm:$0xff]
        %v1075 = vld [vmem:[%s276 + $0x198] sm:$0xff]
        %v1076 = vld [vmem:[%s276 + $0x1a0] sm:$0xff]
        %v1077 = vld [vmem:[%s276 + $0x1a8] sm:$0xff]
        %v1078 = vld [vmem:[%s276 + $0x1b0] sm:$0xff]
        %v1079 = vld [vmem:[%s276 + $0x1b8] sm:$0xff]
        %v1080 = vld [vmem:[%s276 + $0x1c0] sm:$0xff]
        %v1081 = vld [vmem:[%s276 + $0x1c8] sm:$0xff]
        %v1082 = vld [vmem:[%s276 + $0x1d0] sm:$0xff]
        %v1083 = vld [vmem:[%s276 + $0x1d8] sm:$0xff]
        %v1084 = vld [vmem:[%s276 + $0x1e0] sm:$0xff]
        %v1085 = vld [vmem:[%s276 + $0x1e8] sm:$0xff]
        %v1086 = vld [vmem:[%s276 + $0x1f0] sm:$0xff]
        %v1087 = vld [vmem:[%s276 + $0x1f8] sm:$0xff]
        %1088 = vmatpush.msra.mxu0 %v1084
        %1089 = vmatpush.msra.mxu0 %v1080
        %1090 = vmatpush.msra.mxu0 %v1076
        %1091 = vmatpush.msra.mxu0 %v1072
        %1092 = vmatpush.msra.mxu0 %v1068
        %1093 = vmatpush.msra.mxu0 %v1064
        %1094 = vmatpush.msra.mxu0 %v1060
        %1095 = vmatpush.msra.mxu0 %v1056
        %1096 = vmatpush.msra.mxu0 %v1052
        %1097 = vmatpush.msra.mxu0 %v1048
        %1098 = vmatpush.msra.mxu0 %v1044
        %1099 = vmatpush.msra.mxu0 %v1040
        %1100 = vmatpush.msra.mxu0 %v1036
        %1101 = vmatpush.msra.mxu0 %v1032
        %1102 = vmatpush.msra.mxu0 %v1028
        %1103 = vmatpush.msra.mxu0 %v1024
        %1104 = vmatmul.f32.gmra.mxu0 %v1023
        %v1105 = vpop.f32.mrf.mxu0
        %v1106 = vadd.f32 0.0, %v1105
        %1107 = vdwg.mxu0
        %1108 = vmatpush.msra.mxu0 %v1085
        %1109 = vmatpush.msra.mxu0 %v1081
        %1110 = vmatpush.msra.mxu0 %v1077
        %1111 = vmatpush.msra.mxu0 %v1073
        %1112 = vmatpush.msra.mxu0 %v1069
        %1113 = vmatpush.msra.mxu0 %v1065
        %1114 = vmatpush.msra.mxu0 %v1061
        %1115 = vmatpush.msra.mxu0 %v1057
        %1116 = vmatpush.msra.mxu0 %v1053
        %1117 = vmatpush.msra.mxu0 %v1049
        %1118 = vmatpush.msra.mxu0 %v1045
        %1119 = vmatpush.msra.mxu0 %v1041
        %1120 = vmatpush.msra.mxu0 %v1037
        %1121 = vmatpush.msra.mxu0 %v1033
        %1122 = vmatpush.msra.mxu0 %v1029
        %1123 = vmatpush.msra.mxu0 %v1025
        %1124 = vmatmul.f32.gmra.mxu0 %v1023
        %v1125 = vpop.f32.mrf.mxu0
        %v1126 = vadd.f32 0.0, %v1125
        %1127 = vdwg.mxu0
        %1128 = vmatpush.msra.mxu0 %v1086
        %1129 = vmatpush.msra.mxu0 %v1082
        %1130 = vmatpush.msra.mxu0 %v1078
        %1131 = vmatpush.msra.mxu0 %v1074
        %1132 = vmatpush.msra.mxu0 %v1070
        %1133 = vmatpush.msra.mxu0 %v1066
        %1134 = vmatpush.msra.mxu0 %v1062
        %1135 = vmatpush.msra.mxu0 %v1058
        %1136 = vmatpush.msra.mxu0 %v1054
        %1137 = vmatpush.msra.mxu0 %v1050
        %1138 = vmatpush.msra.mxu0 %v1046
        %1139 = vmatpush.msra.mxu0 %v1042
        %1140 = vmatpush.msra.mxu0 %v1038
        %1141 = vmatpush.msra.mxu0 %v1034
        %1142 = vmatpush.msra.mxu0 %v1030
        %1143 = vmatpush.msra.mxu0 %v1026
        %1144 = vmatmul.f32.gmra.mxu0 %v1023
        %v1145 = vpop.f32.mrf.mxu0
        %v1146 = vadd.f32 0.0, %v1145
        %1147 = vdwg.mxu0
        %1148 = vmatpush.msra.mxu0 %v1087
        %1149 = vmatpush.msra.mxu0 %v1083
        %1150 = vmatpush.msra.mxu0 %v1079
        %1151 = vmatpush.msra.mxu0 %v1075
        %1152 = vmatpush.msra.mxu0 %v1071
        %1153 = vmatpush.msra.mxu0 %v1067
        %1154 = vmatpush.msra.mxu0 %v1063
        %1155 = vmatpush.msra.mxu0 %v1059
        %1156 = vmatpush.msra.mxu0 %v1055
        %1157 = vmatpush.msra.mxu0 %v1051
        %1158 = vmatpush.msra.mxu0 %v1047
        %1159 = vmatpush.msra.mxu0 %v1043
        %1160 = vmatpush.msra.mxu0 %v1039
        %1161 = vmatpush.msra.mxu0 %v1035
        %1162 = vmatpush.msra.mxu0 %v1031
        %1163 = vmatpush.msra.mxu0 %v1027
        %1164 = vmatmul.f32.gmra.mxu0 %v1023
        %v1165 = vpop.f32.mrf.mxu0
        %v1166 = vadd.f32 0.0, %v1165
        %1167 = vdwg.mxu0
        %v1168 = vadd.f32 %v1019, %v1106
        %v1169 = vadd.f32 %v1020, %v1126
        %v1170 = vadd.f32 %v1021, %v1146
        %v1171 = vadd.f32 %v1022, %v1166
        %v1172 = vxor.u32 %v1168, 2147483648
        %v1173 = vxor.u32 %v1169, 2147483648
        %v1174 = vxor.u32 %v1170, 2147483648
        %v1175 = vmul.f32 %v1172, 1.442695
        %v1176 = vpow.pop %v1175
        %v1177 = vmul.f32 %v1173, 1.442695
        %v1178 = vpow.pop %v1177
        %v1179 = vmul.f32 %v1174, 1.442695
        %v1180 = vpow.pop %v1179
        %v1181 = vadd.f32 %v1176, 1.0
        %v1182 = vadd.f32 %v1178, 1.0
        %v1183 = vadd.f32 %v1180, 1.0
        %v1184 = vrcp.pop %v1181
        %v1185 = vmul.f32 %v1181, %v1184
        %v1186 = vsub.f32 1.0, %v1185
        %v1187 = vmul.f32 %v1184, %v1186
        %v1188 = vadd.f32 %v1184, %v1187
        %vm1189 = vweird.f32 %v1181
        %vm1190 = vweird.f32 %v1184
        %vm1191 = vmor %vm1189, %vm1190
        %v1192 = vsel %vm1191, %v1184, %v1188
        %v1193 = vand.u32 2147483647, %v1181
        %vm1194 = vcmp.eq.f32.partialorder %v1193, 8.507059e+37
        %v1195 = vand.u32 %v1181, 2147483648
        %v1196 = vor.u32 1.1754944e-38, %v1195
        %v1197 = vsel %vm1194, %v1196, %v1192
        %v1198 = vmul.f32 1.0, %v1197
        %v1199 = vrcp.pop %v1182
        %v1200 = vmul.f32 %v1182, %v1199
        %v1201 = vsub.f32 1.0, %v1200
        %v1202 = vmul.f32 %v1199, %v1201
        %v1203 = vadd.f32 %v1199, %v1202
        %vm1204 = vweird.f32 %v1182
        %vm1205 = vweird.f32 %v1199
        %vm1206 = vmor %vm1204, %vm1205
        %v1207 = vsel %vm1206, %v1199, %v1203
        %v1208 = vand.u32 2147483647, %v1182
        %vm1209 = vcmp.eq.f32.partialorder %v1208, 8.507059e+37
        %v1210 = vand.u32 %v1182, 2147483648
        %v1211 = vor.u32 1.1754944e-38, %v1210
        %v1212 = vsel %vm1209, %v1211, %v1207
        %v1213 = vmul.f32 1.0, %v1212
        %v1214 = vrcp.pop %v1183
        %v1215 = vmul.f32 %v1183, %v1214
        %v1216 = vsub.f32 1.0, %v1215
        %v1217 = vmul.f32 %v1214, %v1216
        %v1218 = vadd.f32 %v1214, %v1217
        %vm1219 = vweird.f32 %v1183
        %vm1220 = vweird.f32 %v1214
        %vm1221 = vmor %vm1219, %vm1220
        %v1222 = vsel %vm1221, %v1214, %v1218
        %v1223 = vand.u32 2147483647, %v1183
        %vm1224 = vcmp.eq.f32.partialorder %v1223, 8.507059e+37
        %v1225 = vand.u32 %v1183, 2147483648
        %v1226 = vor.u32 1.1754944e-38, %v1225
        %v1227 = vsel %vm1224, %v1226, %v1222
        %v1228 = vmul.f32 1.0, %v1227
        %v1229 = vtanh.pop %v1171
        %v1230 = vld [vmem:[#allocation3] sm:$0xff]
        %v1231 = vmul.f32 %v1213, %v1230
        %v1232 = vmul.f32 %v1198, %v1229
        %v1233 = vadd.f32 %v1231, %v1232
        %v1234 = vtanh.pop %v1233
        %v1235 = vmul.f32 %v1228, %v1234
        %1236 = vst [vmem:[#allocation3] sm:$0xff] %v1233
        %1237 = vst [vmem:[#allocation2] sm:$0xff] %v1235
        %s1238 = smul.u32 %s1015, 8
        %s1239 = scalar_lea.vmem %s302, %s1238 [#allocation9]
        %1240 = vst [vmem:[%s1239] sm:$0xff] %v1235
        %s1241 = smul.u32 %s560, 4
        %s1242 = sadd.s32 %s1241, %s333
        %s1243 = smul.u32 %s1242, 4
        %s1244 = smul.addr %s1243, 8
        %s1245 = scalar_lea.vmem %s266, %s1244 [#allocation4]
        %v1246 = vld [vmem:[%s1245] sm:$0xff]
        %v1247 = vld [vmem:[%s1245 + $0x8] sm:$0xff]
        %v1248 = vld [vmem:[%s1245 + $0x10] sm:$0xff]
        %v1249 = vld [vmem:[%s1245 + $0x18] sm:$0xff]
        %v1250 = vld [vmem:[#allocation2] sm:$0xff]
        %v1251 = vld [vmem:[%s276] sm:$0xff]
        %v1252 = vld [vmem:[%s276 + $0x8] sm:$0xff]
        %v1253 = vld [vmem:[%s276 + $0x10] sm:$0xff]
        %v1254 = vld [vmem:[%s276 + $0x18] sm:$0xff]
        %v1255 = vld [vmem:[%s276 + $0x20] sm:$0xff]
        %v1256 = vld [vmem:[%s276 + $0x28] sm:$0xff]
        %v1257 = vld [vmem:[%s276 + $0x30] sm:$0xff]
        %v1258 = vld [vmem:[%s276 + $0x38] sm:$0xff]
        %v1259 = vld [vmem:[%s276 + $0x40] sm:$0xff]
        %v1260 = vld [vmem:[%s276 + $0x48] sm:$0xff]
        %v1261 = vld [vmem:[%s276 + $0x50] sm:$0xff]
        %v1262 = vld [vmem:[%s276 + $0x58] sm:$0xff]
        %v1263 = vld [vmem:[%s276 + $0x60] sm:$0xff]
        %v1264 = vld [vmem:[%s276 + $0x68] sm:$0xff]
        %v1265 = vld [vmem:[%s276 + $0x70] sm:$0xff]
        %v1266 = vld [vmem:[%s276 + $0x78] sm:$0xff]
        %v1267 = vld [vmem:[%s276 + $0x80] sm:$0xff]
        %v1268 = vld [vmem:[%s276 + $0x88] sm:$0xff]
        %v1269 = vld [vmem:[%s276 + $0x90] sm:$0xff]
        %v1270 = vld [vmem:[%s276 + $0x98] sm:$0xff]
        %v1271 = vld [vmem:[%s276 + $0xa0] sm:$0xff]
        %v1272 = vld [vmem:[%s276 + $0xa8] sm:$0xff]
        %v1273 = vld [vmem:[%s276 + $0xb0] sm:$0xff]
        %v1274 = vld [vmem:[%s276 + $0xb8] sm:$0xff]
        %v1275 = vld [vmem:[%s276 + $0xc0] sm:$0xff]
        %v1276 = vld [vmem:[%s276 + $0xc8] sm:$0xff]
        %v1277 = vld [vmem:[%s276 + $0xd0] sm:$0xff]
        %v1278 = vld [vmem:[%s276 + $0xd8] sm:$0xff]
        %v1279 = vld [vmem:[%s276 + $0xe0] sm:$0xff]
        %v1280 = vld [vmem:[%s276 + $0xe8] sm:$0xff]
        %v1281 = vld [vmem:[%s276 + $0xf0] sm:$0xff]
        %v1282 = vld [vmem:[%s276 + $0xf8] sm:$0xff]
        %v1283 = vld [vmem:[%s276 + $0x100] sm:$0xff]
        %v1284 = vld [vmem:[%s276 + $0x108] sm:$0xff]
        %v1285 = vld [vmem:[%s276 + $0x110] sm:$0xff]
        %v1286 = vld [vmem:[%s276 + $0x118] sm:$0xff]
        %v1287 = vld [vmem:[%s276 + $0x120] sm:$0xff]
        %v1288 = vld [vmem:[%s276 + $0x128] sm:$0xff]
        %v1289 = vld [vmem:[%s276 + $0x130] sm:$0xff]
        %v1290 = vld [vmem:[%s276 + $0x138] sm:$0xff]
        %v1291 = vld [vmem:[%s276 + $0x140] sm:$0xff]
        %v1292 = vld [vmem:[%s276 + $0x148] sm:$0xff]
        %v1293 = vld [vmem:[%s276 + $0x150] sm:$0xff]
        %v1294 = vld [vmem:[%s276 + $0x158] sm:$0xff]
        %v1295 = vld [vmem:[%s276 + $0x160] sm:$0xff]
        %v1296 = vld [vmem:[%s276 + $0x168] sm:$0xff]
        %v1297 = vld [vmem:[%s276 + $0x170] sm:$0xff]
        %v1298 = vld [vmem:[%s276 + $0x178] sm:$0xff]
        %v1299 = vld [vmem:[%s276 + $0x180] sm:$0xff]
        %v1300 = vld [vmem:[%s276 + $0x188] sm:$0xff]
        %v1301 = vld [vmem:[%s276 + $0x190] sm:$0xff]
        %v1302 = vld [vmem:[%s276 + $0x198] sm:$0xff]
        %v1303 = vld [vmem:[%s276 + $0x1a0] sm:$0xff]
        %v1304 = vld [vmem:[%s276 + $0x1a8] sm:$0xff]
        %v1305 = vld [vmem:[%s276 + $0x1b0] sm:$0xff]
        %v1306 = vld [vmem:[%s276 + $0x1b8] sm:$0xff]
        %v1307 = vld [vmem:[%s276 + $0x1c0] sm:$0xff]
        %v1308 = vld [vmem:[%s276 + $0x1c8] sm:$0xff]
        %v1309 = vld [vmem:[%s276 + $0x1d0] sm:$0xff]
        %v1310 = vld [vmem:[%s276 + $0x1d8] sm:$0xff]
        %v1311 = vld [vmem:[%s276 + $0x1e0] sm:$0xff]
        %v1312 = vld [vmem:[%s276 + $0x1e8] sm:$0xff]
        %v1313 = vld [vmem:[%s276 + $0x1f0] sm:$0xff]
        %v1314 = vld [vmem:[%s276 + $0x1f8] sm:$0xff]
        %1315 = vmatpush.msra.mxu0 %v1311
        %1316 = vmatpush.msra.mxu0 %v1307
        %1317 = vmatpush.msra.mxu0 %v1303
        %1318 = vmatpush.msra.mxu0 %v1299
        %1319 = vmatpush.msra.mxu0 %v1295
        %1320 = vmatpush.msra.mxu0 %v1291
        %1321 = vmatpush.msra.mxu0 %v1287
        %1322 = vmatpush.msra.mxu0 %v1283
        %1323 = vmatpush.msra.mxu0 %v1279
        %1324 = vmatpush.msra.mxu0 %v1275
        %1325 = vmatpush.msra.mxu0 %v1271
        %1326 = vmatpush.msra.mxu0 %v1267
        %1327 = vmatpush.msra.mxu0 %v1263
        %1328 = vmatpush.msra.mxu0 %v1259
        %1329 = vmatpush.msra.mxu0 %v1255
        %1330 = vmatpush.msra.mxu0 %v1251
        %1331 = vmatmul.f32.gmra.mxu0 %v1250
        %v1332 = vpop.f32.mrf.mxu0
        %v1333 = vadd.f32 0.0, %v1332
        %1334 = vdwg.mxu0
        %1335 = vmatpush.msra.mxu0 %v1312
        %1336 = vmatpush.msra.mxu0 %v1308
        %1337 = vmatpush.msra.mxu0 %v1304
        %1338 = vmatpush.msra.mxu0 %v1300
        %1339 = vmatpush.msra.mxu0 %v1296
        %1340 = vmatpush.msra.mxu0 %v1292
        %1341 = vmatpush.msra.mxu0 %v1288
        %1342 = vmatpush.msra.mxu0 %v1284
        %1343 = vmatpush.msra.mxu0 %v1280
        %1344 = vmatpush.msra.mxu0 %v1276
        %1345 = vmatpush.msra.mxu0 %v1272
        %1346 = vmatpush.msra.mxu0 %v1268
        %1347 = vmatpush.msra.mxu0 %v1264
        %1348 = vmatpush.msra.mxu0 %v1260
        %1349 = vmatpush.msra.mxu0 %v1256
        %1350 = vmatpush.msra.mxu0 %v1252
        %1351 = vmatmul.f32.gmra.mxu0 %v1250
        %v1352 = vpop.f32.mrf.mxu0
        %v1353 = vadd.f32 0.0, %v1352
        %1354 = vdwg.mxu0
        %1355 = vmatpush.msra.mxu0 %v1313
        %1356 = vmatpush.msra.mxu0 %v1309
        %1357 = vmatpush.msra.mxu0 %v1305
        %1358 = vmatpush.msra.mxu0 %v1301
        %1359 = vmatpush.msra.mxu0 %v1297
        %1360 = vmatpush.msra.mxu0 %v1293
        %1361 = vmatpush.msra.mxu0 %v1289
        %1362 = vmatpush.msra.mxu0 %v1285
        %1363 = vmatpush.msra.mxu0 %v1281
        %1364 = vmatpush.msra.mxu0 %v1277
        %1365 = vmatpush.msra.mxu0 %v1273
        %1366 = vmatpush.msra.mxu0 %v1269
        %1367 = vmatpush.msra.mxu0 %v1265
        %1368 = vmatpush.msra.mxu0 %v1261
        %1369 = vmatpush.msra.mxu0 %v1257
        %1370 = vmatpush.msra.mxu0 %v1253
        %1371 = vmatmul.f32.gmra.mxu0 %v1250
        %v1372 = vpop.f32.mrf.mxu0
        %v1373 = vadd.f32 0.0, %v1372
        %1374 = vdwg.mxu0
        %1375 = vmatpush.msra.mxu0 %v1314
        %1376 = vmatpush.msra.mxu0 %v1310
        %1377 = vmatpush.msra.mxu0 %v1306
        %1378 = vmatpush.msra.mxu0 %v1302
        %1379 = vmatpush.msra.mxu0 %v1298
        %1380 = vmatpush.msra.mxu0 %v1294
        %1381 = vmatpush.msra.mxu0 %v1290
        %1382 = vmatpush.msra.mxu0 %v1286
        %1383 = vmatpush.msra.mxu0 %v1282
        %1384 = vmatpush.msra.mxu0 %v1278
        %1385 = vmatpush.msra.mxu0 %v1274
        %1386 = vmatpush.msra.mxu0 %v1270
        %1387 = vmatpush.msra.mxu0 %v1266
        %1388 = vmatpush.msra.mxu0 %v1262
        %1389 = vmatpush.msra.mxu0 %v1258
        %1390 = vmatpush.msra.mxu0 %v1254
        %1391 = vmatmul.f32.gmra.mxu0 %v1250
        %v1392 = vpop.f32.mrf.mxu0
        %v1393 = vadd.f32 0.0, %v1392
        %1394 = vdwg.mxu0
        %v1395 = vadd.f32 %v1246, %v1333
        %v1396 = vadd.f32 %v1247, %v1353
        %v1397 = vadd.f32 %v1248, %v1373
        %v1398 = vadd.f32 %v1249, %v1393
        %v1399 = vxor.u32 %v1395, 2147483648
        %v1400 = vxor.u32 %v1396, 2147483648
        %v1401 = vxor.u32 %v1397, 2147483648
        %v1402 = vmul.f32 %v1399, 1.442695
        %v1403 = vpow.pop %v1402
        %v1404 = vmul.f32 %v1400, 1.442695
        %v1405 = vpow.pop %v1404
        %v1406 = vmul.f32 %v1401, 1.442695
        %v1407 = vpow.pop %v1406
        %v1408 = vadd.f32 %v1403, 1.0
        %v1409 = vadd.f32 %v1405, 1.0
        %v1410 = vadd.f32 %v1407, 1.0
        %v1411 = vrcp.pop %v1408
        %v1412 = vmul.f32 %v1408, %v1411
        %v1413 = vsub.f32 1.0, %v1412
        %v1414 = vmul.f32 %v1411, %v1413
        %v1415 = vadd.f32 %v1411, %v1414
        %vm1416 = vweird.f32 %v1408
        %vm1417 = vweird.f32 %v1411
        %vm1418 = vmor %vm1416, %vm1417
        %v1419 = vsel %vm1418, %v1411, %v1415
        %v1420 = vand.u32 2147483647, %v1408
        %vm1421 = vcmp.eq.f32.partialorder %v1420, 8.507059e+37
        %v1422 = vand.u32 %v1408, 2147483648
        %v1423 = vor.u32 1.1754944e-38, %v1422
        %v1424 = vsel %vm1421, %v1423, %v1419
        %v1425 = vmul.f32 1.0, %v1424
        %v1426 = vrcp.pop %v1409
        %v1427 = vmul.f32 %v1409, %v1426
        %v1428 = vsub.f32 1.0, %v1427
        %v1429 = vmul.f32 %v1426, %v1428
        %v1430 = vadd.f32 %v1426, %v1429
        %vm1431 = vweird.f32 %v1409
        %vm1432 = vweird.f32 %v1426
        %vm1433 = vmor %vm1431, %vm1432
        %v1434 = vsel %vm1433, %v1426, %v1430
        %v1435 = vand.u32 2147483647, %v1409
        %vm1436 = vcmp.eq.f32.partialorder %v1435, 8.507059e+37
        %v1437 = vand.u32 %v1409, 2147483648
        %v1438 = vor.u32 1.1754944e-38, %v1437
        %v1439 = vsel %vm1436, %v1438, %v1434
        %v1440 = vmul.f32 1.0, %v1439
        %v1441 = vrcp.pop %v1410
        %v1442 = vmul.f32 %v1410, %v1441
        %v1443 = vsub.f32 1.0, %v1442
        %v1444 = vmul.f32 %v1441, %v1443
        %v1445 = vadd.f32 %v1441, %v1444
        %vm1446 = vweird.f32 %v1410
        %vm1447 = vweird.f32 %v1441
        %vm1448 = vmor %vm1446, %vm1447
        %v1449 = vsel %vm1448, %v1441, %v1445
        %v1450 = vand.u32 2147483647, %v1410
        %vm1451 = vcmp.eq.f32.partialorder %v1450, 8.507059e+37
        %v1452 = vand.u32 %v1410, 2147483648
        %v1453 = vor.u32 1.1754944e-38, %v1452
        %v1454 = vsel %vm1451, %v1453, %v1449
        %v1455 = vmul.f32 1.0, %v1454
        %v1456 = vtanh.pop %v1398
        %v1457 = vld [vmem:[#allocation3] sm:$0xff]
        %v1458 = vmul.f32 %v1440, %v1457
        %v1459 = vmul.f32 %v1425, %v1456
        %v1460 = vadd.f32 %v1458, %v1459
        %v1461 = vtanh.pop %v1460
        %v1462 = vmul.f32 %v1455, %v1461
        %1463 = vst [vmem:[#allocation3] sm:$0xff] %v1460
        %1464 = vst [vmem:[#allocation2] sm:$0xff] %v1462
        %s1465 = smul.u32 %s1242, 8
        %s1466 = scalar_lea.vmem %s302, %s1465 [#allocation9]
        %1467 = vst [vmem:[%s1466] sm:$0xff] %v1462
        %s1468 = smul.u32 %s560, 5
        %s1469 = sadd.s32 %s1468, %s333
        %s1470 = smul.u32 %s1469, 4
        %s1471 = smul.addr %s1470, 8
        %s1472 = scalar_lea.vmem %s266, %s1471 [#allocation4]
        %v1473 = vld [vmem:[%s1472] sm:$0xff]
        %v1474 = vld [vmem:[%s1472 + $0x8] sm:$0xff]
        %v1475 = vld [vmem:[%s1472 + $0x10] sm:$0xff]
        %v1476 = vld [vmem:[%s1472 + $0x18] sm:$0xff]
        %v1477 = vld [vmem:[#allocation2] sm:$0xff]
        %v1478 = vld [vmem:[%s276] sm:$0xff]
        %v1479 = vld [vmem:[%s276 + $0x8] sm:$0xff]
        %v1480 = vld [vmem:[%s276 + $0x10] sm:$0xff]
        %v1481 = vld [vmem:[%s276 + $0x18] sm:$0xff]
        %v1482 = vld [vmem:[%s276 + $0x20] sm:$0xff]
        %v1483 = vld [vmem:[%s276 + $0x28] sm:$0xff]
        %v1484 = vld [vmem:[%s276 + $0x30] sm:$0xff]
        %v1485 = vld [vmem:[%s276 + $0x38] sm:$0xff]
        %v1486 = vld [vmem:[%s276 + $0x40] sm:$0xff]
        %v1487 = vld [vmem:[%s276 + $0x48] sm:$0xff]
        %v1488 = vld [vmem:[%s276 + $0x50] sm:$0xff]
        %v1489 = vld [vmem:[%s276 + $0x58] sm:$0xff]
        %v1490 = vld [vmem:[%s276 + $0x60] sm:$0xff]
        %v1491 = vld [vmem:[%s276 + $0x68] sm:$0xff]
        %v1492 = vld [vmem:[%s276 + $0x70] sm:$0xff]
        %v1493 = vld [vmem:[%s276 + $0x78] sm:$0xff]
        %v1494 = vld [vmem:[%s276 + $0x80] sm:$0xff]
        %v1495 = vld [vmem:[%s276 + $0x88] sm:$0xff]
        %v1496 = vld [vmem:[%s276 + $0x90] sm:$0xff]
        %v1497 = vld [vmem:[%s276 + $0x98] sm:$0xff]
        %v1498 = vld [vmem:[%s276 + $0xa0] sm:$0xff]
        %v1499 = vld [vmem:[%s276 + $0xa8] sm:$0xff]
        %v1500 = vld [vmem:[%s276 + $0xb0] sm:$0xff]
        %v1501 = vld [vmem:[%s276 + $0xb8] sm:$0xff]
        %v1502 = vld [vmem:[%s276 + $0xc0] sm:$0xff]
        %v1503 = vld [vmem:[%s276 + $0xc8] sm:$0xff]
        %v1504 = vld [vmem:[%s276 + $0xd0] sm:$0xff]
        %v1505 = vld [vmem:[%s276 + $0xd8] sm:$0xff]
        %v1506 = vld [vmem:[%s276 + $0xe0] sm:$0xff]
        %v1507 = vld [vmem:[%s276 + $0xe8] sm:$0xff]
        %v1508 = vld [vmem:[%s276 + $0xf0] sm:$0xff]
        %v1509 = vld [vmem:[%s276 + $0xf8] sm:$0xff]
        %v1510 = vld [vmem:[%s276 + $0x100] sm:$0xff]
        %v1511 = vld [vmem:[%s276 + $0x108] sm:$0xff]
        %v1512 = vld [vmem:[%s276 + $0x110] sm:$0xff]
        %v1513 = vld [vmem:[%s276 + $0x118] sm:$0xff]
        %v1514 = vld [vmem:[%s276 + $0x120] sm:$0xff]
        %v1515 = vld [vmem:[%s276 + $0x128] sm:$0xff]
        %v1516 = vld [vmem:[%s276 + $0x130] sm:$0xff]
        %v1517 = vld [vmem:[%s276 + $0x138] sm:$0xff]
        %v1518 = vld [vmem:[%s276 + $0x140] sm:$0xff]
        %v1519 = vld [vmem:[%s276 + $0x148] sm:$0xff]
        %v1520 = vld [vmem:[%s276 + $0x150] sm:$0xff]
        %v1521 = vld [vmem:[%s276 + $0x158] sm:$0xff]
        %v1522 = vld [vmem:[%s276 + $0x160] sm:$0xff]
        %v1523 = vld [vmem:[%s276 + $0x168] sm:$0xff]
        %v1524 = vld [vmem:[%s276 + $0x170] sm:$0xff]
        %v1525 = vld [vmem:[%s276 + $0x178] sm:$0xff]
        %v1526 = vld [vmem:[%s276 + $0x180] sm:$0xff]
        %v1527 = vld [vmem:[%s276 + $0x188] sm:$0xff]
        %v1528 = vld [vmem:[%s276 + $0x190] sm:$0xff]
        %v1529 = vld [vmem:[%s276 + $0x198] sm:$0xff]
        %v1530 = vld [vmem:[%s276 + $0x1a0] sm:$0xff]
        %v1531 = vld [vmem:[%s276 + $0x1a8] sm:$0xff]
        %v1532 = vld [vmem:[%s276 + $0x1b0] sm:$0xff]
        %v1533 = vld [vmem:[%s276 + $0x1b8] sm:$0xff]
        %v1534 = vld [vmem:[%s276 + $0x1c0] sm:$0xff]
        %v1535 = vld [vmem:[%s276 + $0x1c8] sm:$0xff]
        %v1536 = vld [vmem:[%s276 + $0x1d0] sm:$0xff]
        %v1537 = vld [vmem:[%s276 + $0x1d8] sm:$0xff]
        %v1538 = vld [vmem:[%s276 + $0x1e0] sm:$0xff]
        %v1539 = vld [vmem:[%s276 + $0x1e8] sm:$0xff]
        %v1540 = vld [vmem:[%s276 + $0x1f0] sm:$0xff]
        %v1541 = vld [vmem:[%s276 + $0x1f8] sm:$0xff]
        %1542 = vmatpush.msra.mxu0 %v1538
        %1543 = vmatpush.msra.mxu0 %v1534
        %1544 = vmatpush.msra.mxu0 %v1530
        %1545 = vmatpush.msra.mxu0 %v1526
        %1546 = vmatpush.msra.mxu0 %v1522
        %1547 = vmatpush.msra.mxu0 %v1518
        %1548 = vmatpush.msra.mxu0 %v1514
        %1549 = vmatpush.msra.mxu0 %v1510
        %1550 = vmatpush.msra.mxu0 %v1506
        %1551 = vmatpush.msra.mxu0 %v1502
        %1552 = vmatpush.msra.mxu0 %v1498
        %1553 = vmatpush.msra.mxu0 %v1494
        %1554 = vmatpush.msra.mxu0 %v1490
        %1555 = vmatpush.msra.mxu0 %v1486
        %1556 = vmatpush.msra.mxu0 %v1482
        %1557 = vmatpush.msra.mxu0 %v1478
        %1558 = vmatmul.f32.gmra.mxu0 %v1477
        %v1559 = vpop.f32.mrf.mxu0
        %v1560 = vadd.f32 0.0, %v1559
        %1561 = vdwg.mxu0
        %1562 = vmatpush.msra.mxu0 %v1539
        %1563 = vmatpush.msra.mxu0 %v1535
        %1564 = vmatpush.msra.mxu0 %v1531
        %1565 = vmatpush.msra.mxu0 %v1527
        %1566 = vmatpush.msra.mxu0 %v1523
        %1567 = vmatpush.msra.mxu0 %v1519
        %1568 = vmatpush.msra.mxu0 %v1515
        %1569 = vmatpush.msra.mxu0 %v1511
        %1570 = vmatpush.msra.mxu0 %v1507
        %1571 = vmatpush.msra.mxu0 %v1503
        %1572 = vmatpush.msra.mxu0 %v1499
        %1573 = vmatpush.msra.mxu0 %v1495
        %1574 = vmatpush.msra.mxu0 %v1491
        %1575 = vmatpush.msra.mxu0 %v1487
        %1576 = vmatpush.msra.mxu0 %v1483
        %1577 = vmatpush.msra.mxu0 %v1479
        %1578 = vmatmul.f32.gmra.mxu0 %v1477
        %v1579 = vpop.f32.mrf.mxu0
        %v1580 = vadd.f32 0.0, %v1579
        %1581 = vdwg.mxu0
        %1582 = vmatpush.msra.mxu0 %v1540
        %1583 = vmatpush.msra.mxu0 %v1536
        %1584 = vmatpush.msra.mxu0 %v1532
        %1585 = vmatpush.msra.mxu0 %v1528
        %1586 = vmatpush.msra.mxu0 %v1524
        %1587 = vmatpush.msra.mxu0 %v1520
        %1588 = vmatpush.msra.mxu0 %v1516
        %1589 = vmatpush.msra.mxu0 %v1512
        %1590 = vmatpush.msra.mxu0 %v1508
        %1591 = vmatpush.msra.mxu0 %v1504
        %1592 = vmatpush.msra.mxu0 %v1500
        %1593 = vmatpush.msra.mxu0 %v1496
        %1594 = vmatpush.msra.mxu0 %v1492
        %1595 = vmatpush.msra.mxu0 %v1488
        %1596 = vmatpush.msra.mxu0 %v1484
        %1597 = vmatpush.msra.mxu0 %v1480
        %1598 = vmatmul.f32.gmra.mxu0 %v1477
        %v1599 = vpop.f32.mrf.mxu0
        %v1600 = vadd.f32 0.0, %v1599
        %1601 = vdwg.mxu0
        %1602 = vmatpush.msra.mxu0 %v1541
        %1603 = vmatpush.msra.mxu0 %v1537
        %1604 = vmatpush.msra.mxu0 %v1533
        %1605 = vmatpush.msra.mxu0 %v1529
        %1606 = vmatpush.msra.mxu0 %v1525
        %1607 = vmatpush.msra.mxu0 %v1521
        %1608 = vmatpush.msra.mxu0 %v1517
        %1609 = vmatpush.msra.mxu0 %v1513
        %1610 = vmatpush.msra.mxu0 %v1509
        %1611 = vmatpush.msra.mxu0 %v1505
        %1612 = vmatpush.msra.mxu0 %v1501
        %1613 = vmatpush.msra.mxu0 %v1497
        %1614 = vmatpush.msra.mxu0 %v1493
        %1615 = vmatpush.msra.mxu0 %v1489
        %1616 = vmatpush.msra.mxu0 %v1485
        %1617 = vmatpush.msra.mxu0 %v1481
        %1618 = vmatmul.f32.gmra.mxu0 %v1477
        %v1619 = vpop.f32.mrf.mxu0
        %v1620 = vadd.f32 0.0, %v1619
        %1621 = vdwg.mxu0
        %v1622 = vadd.f32 %v1473, %v1560
        %v1623 = vadd.f32 %v1474, %v1580
        %v1624 = vadd.f32 %v1475, %v1600
        %v1625 = vadd.f32 %v1476, %v1620
        %v1626 = vxor.u32 %v1622, 2147483648
        %v1627 = vxor.u32 %v1623, 2147483648
        %v1628 = vxor.u32 %v1624, 2147483648
        %v1629 = vmul.f32 %v1626, 1.442695
        %v1630 = vpow.pop %v1629
        %v1631 = vmul.f32 %v1627, 1.442695
        %v1632 = vpow.pop %v1631
        %v1633 = vmul.f32 %v1628, 1.442695
        %v1634 = vpow.pop %v1633
        %v1635 = vadd.f32 %v1630, 1.0
        %v1636 = vadd.f32 %v1632, 1.0
        %v1637 = vadd.f32 %v1634, 1.0
        %v1638 = vrcp.pop %v1635
        %v1639 = vmul.f32 %v1635, %v1638
        %v1640 = vsub.f32 1.0, %v1639
        %v1641 = vmul.f32 %v1638, %v1640
        %v1642 = vadd.f32 %v1638, %v1641
        %vm1643 = vweird.f32 %v1635
        %vm1644 = vweird.f32 %v1638
        %vm1645 = vmor %vm1643, %vm1644
        %v1646 = vsel %vm1645, %v1638, %v1642
        %v1647 = vand.u32 2147483647, %v1635
        %vm1648 = vcmp.eq.f32.partialorder %v1647, 8.507059e+37
        %v1649 = vand.u32 %v1635, 2147483648
        %v1650 = vor.u32 1.1754944e-38, %v1649
        %v1651 = vsel %vm1648, %v1650, %v1646
        %v1652 = vmul.f32 1.0, %v1651
        %v1653 = vrcp.pop %v1636
        %v1654 = vmul.f32 %v1636, %v1653
        %v1655 = vsub.f32 1.0, %v1654
        %v1656 = vmul.f32 %v1653, %v1655
        %v1657 = vadd.f32 %v1653, %v1656
        %vm1658 = vweird.f32 %v1636
        %vm1659 = vweird.f32 %v1653
        %vm1660 = vmor %vm1658, %vm1659
        %v1661 = vsel %vm1660, %v1653, %v1657
        %v1662 = vand.u32 2147483647, %v1636
        %vm1663 = vcmp.eq.f32.partialorder %v1662, 8.507059e+37
        %v1664 = vand.u32 %v1636, 2147483648
        %v1665 = vor.u32 1.1754944e-38, %v1664
        %v1666 = vsel %vm1663, %v1665, %v1661
        %v1667 = vmul.f32 1.0, %v1666
        %v1668 = vrcp.pop %v1637
        %v1669 = vmul.f32 %v1637, %v1668
        %v1670 = vsub.f32 1.0, %v1669
        %v1671 = vmul.f32 %v1668, %v1670
        %v1672 = vadd.f32 %v1668, %v1671
        %vm1673 = vweird.f32 %v1637
        %vm1674 = vweird.f32 %v1668
        %vm1675 = vmor %vm1673, %vm1674
        %v1676 = vsel %vm1675, %v1668, %v1672
        %v1677 = vand.u32 2147483647, %v1637
        %vm1678 = vcmp.eq.f32.partialorder %v1677, 8.507059e+37
        %v1679 = vand.u32 %v1637, 2147483648
        %v1680 = vor.u32 1.1754944e-38, %v1679
        %v1681 = vsel %vm1678, %v1680, %v1676
        %v1682 = vmul.f32 1.0, %v1681
        %v1683 = vtanh.pop %v1625
        %v1684 = vld [vmem:[#allocation3] sm:$0xff]
        %v1685 = vmul.f32 %v1667, %v1684
        %v1686 = vmul.f32 %v1652, %v1683
        %v1687 = vadd.f32 %v1685, %v1686
        %v1688 = vtanh.pop %v1687
        %v1689 = vmul.f32 %v1682, %v1688
        %1690 = vst [vmem:[#allocation3] sm:$0xff] %v1687
        %1691 = vst [vmem:[#allocation2] sm:$0xff] %v1689
        %s1692 = smul.u32 %s1469, 8
        %s1693 = scalar_lea.vmem %s302, %s1692 [#allocation9]
        %1694 = vst [vmem:[%s1693] sm:$0xff] %v1689
        %s1695 = smul.u32 %s560, 6
        %s1696 = sadd.s32 %s1695, %s333
        %s1697 = smul.u32 %s1696, 4
        %s1698 = smul.addr %s1697, 8
        %s1699 = scalar_lea.vmem %s266, %s1698 [#allocation4]
        %v1700 = vld [vmem:[%s1699] sm:$0xff]
        %v1701 = vld [vmem:[%s1699 + $0x8] sm:$0xff]
        %v1702 = vld [vmem:[%s1699 + $0x10] sm:$0xff]
        %v1703 = vld [vmem:[%s1699 + $0x18] sm:$0xff]
        %v1704 = vld [vmem:[#allocation2] sm:$0xff]
        %v1705 = vld [vmem:[%s276] sm:$0xff]
        %v1706 = vld [vmem:[%s276 + $0x8] sm:$0xff]
        %v1707 = vld [vmem:[%s276 + $0x10] sm:$0xff]
        %v1708 = vld [vmem:[%s276 + $0x18] sm:$0xff]
        %v1709 = vld [vmem:[%s276 + $0x20] sm:$0xff]
        %v1710 = vld [vmem:[%s276 + $0x28] sm:$0xff]
        %v1711 = vld [vmem:[%s276 + $0x30] sm:$0xff]
        %v1712 = vld [vmem:[%s276 + $0x38] sm:$0xff]
        %v1713 = vld [vmem:[%s276 + $0x40] sm:$0xff]
        %v1714 = vld [vmem:[%s276 + $0x48] sm:$0xff]
        %v1715 = vld [vmem:[%s276 + $0x50] sm:$0xff]
        %v1716 = vld [vmem:[%s276 + $0x58] sm:$0xff]
        %v1717 = vld [vmem:[%s276 + $0x60] sm:$0xff]
        %v1718 = vld [vmem:[%s276 + $0x68] sm:$0xff]
        %v1719 = vld [vmem:[%s276 + $0x70] sm:$0xff]
        %v1720 = vld [vmem:[%s276 + $0x78] sm:$0xff]
        %v1721 = vld [vmem:[%s276 + $0x80] sm:$0xff]
        %v1722 = vld [vmem:[%s276 + $0x88] sm:$0xff]
        %v1723 = vld [vmem:[%s276 + $0x90] sm:$0xff]
        %v1724 = vld [vmem:[%s276 + $0x98] sm:$0xff]
        %v1725 = vld [vmem:[%s276 + $0xa0] sm:$0xff]
        %v1726 = vld [vmem:[%s276 + $0xa8] sm:$0xff]
        %v1727 = vld [vmem:[%s276 + $0xb0] sm:$0xff]
        %v1728 = vld [vmem:[%s276 + $0xb8] sm:$0xff]
        %v1729 = vld [vmem:[%s276 + $0xc0] sm:$0xff]
        %v1730 = vld [vmem:[%s276 + $0xc8] sm:$0xff]
        %v1731 = vld [vmem:[%s276 + $0xd0] sm:$0xff]
        %v1732 = vld [vmem:[%s276 + $0xd8] sm:$0xff]
        %v1733 = vld [vmem:[%s276 + $0xe0] sm:$0xff]
        %v1734 = vld [vmem:[%s276 + $0xe8] sm:$0xff]
        %v1735 = vld [vmem:[%s276 + $0xf0] sm:$0xff]
        %v1736 = vld [vmem:[%s276 + $0xf8] sm:$0xff]
        %v1737 = vld [vmem:[%s276 + $0x100] sm:$0xff]
        %v1738 = vld [vmem:[%s276 + $0x108] sm:$0xff]
        %v1739 = vld [vmem:[%s276 + $0x110] sm:$0xff]
        %v1740 = vld [vmem:[%s276 + $0x118] sm:$0xff]
        %v1741 = vld [vmem:[%s276 + $0x120] sm:$0xff]
        %v1742 = vld [vmem:[%s276 + $0x128] sm:$0xff]
        %v1743 = vld [vmem:[%s276 + $0x130] sm:$0xff]
        %v1744 = vld [vmem:[%s276 + $0x138] sm:$0xff]
        %v1745 = vld [vmem:[%s276 + $0x140] sm:$0xff]
        %v1746 = vld [vmem:[%s276 + $0x148] sm:$0xff]
        %v1747 = vld [vmem:[%s276 + $0x150] sm:$0xff]
        %v1748 = vld [vmem:[%s276 + $0x158] sm:$0xff]
        %v1749 = vld [vmem:[%s276 + $0x160] sm:$0xff]
        %v1750 = vld [vmem:[%s276 + $0x168] sm:$0xff]
        %v1751 = vld [vmem:[%s276 + $0x170] sm:$0xff]
        %v1752 = vld [vmem:[%s276 + $0x178] sm:$0xff]
        %v1753 = vld [vmem:[%s276 + $0x180] sm:$0xff]
        %v1754 = vld [vmem:[%s276 + $0x188] sm:$0xff]
        %v1755 = vld [vmem:[%s276 + $0x190] sm:$0xff]
        %v1756 = vld [vmem:[%s276 + $0x198] sm:$0xff]
        %v1757 = vld [vmem:[%s276 + $0x1a0] sm:$0xff]
        %v1758 = vld [vmem:[%s276 + $0x1a8] sm:$0xff]
        %v1759 = vld [vmem:[%s276 + $0x1b0] sm:$0xff]
        %v1760 = vld [vmem:[%s276 + $0x1b8] sm:$0xff]
        %v1761 = vld [vmem:[%s276 + $0x1c0] sm:$0xff]
        %v1762 = vld [vmem:[%s276 + $0x1c8] sm:$0xff]
        %v1763 = vld [vmem:[%s276 + $0x1d0] sm:$0xff]
        %v1764 = vld [vmem:[%s276 + $0x1d8] sm:$0xff]
        %v1765 = vld [vmem:[%s276 + $0x1e0] sm:$0xff]
        %v1766 = vld [vmem:[%s276 + $0x1e8] sm:$0xff]
        %v1767 = vld [vmem:[%s276 + $0x1f0] sm:$0xff]
        %v1768 = vld [vmem:[%s276 + $0x1f8] sm:$0xff]
        %1769 = vmatpush.msra.mxu0 %v1765
        %1770 = vmatpush.msra.mxu0 %v1761
        %1771 = vmatpush.msra.mxu0 %v1757
        %1772 = vmatpush.msra.mxu0 %v1753
        %1773 = vmatpush.msra.mxu0 %v1749
        %1774 = vmatpush.msra.mxu0 %v1745
        %1775 = vmatpush.msra.mxu0 %v1741
        %1776 = vmatpush.msra.mxu0 %v1737
        %1777 = vmatpush.msra.mxu0 %v1733
        %1778 = vmatpush.msra.mxu0 %v1729
        %1779 = vmatpush.msra.mxu0 %v1725
        %1780 = vmatpush.msra.mxu0 %v1721
        %1781 = vmatpush.msra.mxu0 %v1717
        %1782 = vmatpush.msra.mxu0 %v1713
        %1783 = vmatpush.msra.mxu0 %v1709
        %1784 = vmatpush.msra.mxu0 %v1705
        %1785 = vmatmul.f32.gmra.mxu0 %v1704
        %v1786 = vpop.f32.mrf.mxu0
        %v1787 = vadd.f32 0.0, %v1786
        %1788 = vdwg.mxu0
        %1789 = vmatpush.msra.mxu0 %v1766
        %1790 = vmatpush.msra.mxu0 %v1762
        %1791 = vmatpush.msra.mxu0 %v1758
        %1792 = vmatpush.msra.mxu0 %v1754
        %1793 = vmatpush.msra.mxu0 %v1750
        %1794 = vmatpush.msra.mxu0 %v1746
        %1795 = vmatpush.msra.mxu0 %v1742
        %1796 = vmatpush.msra.mxu0 %v1738
        %1797 = vmatpush.msra.mxu0 %v1734
        %1798 = vmatpush.msra.mxu0 %v1730
        %1799 = vmatpush.msra.mxu0 %v1726
        %1800 = vmatpush.msra.mxu0 %v1722
        %1801 = vmatpush.msra.mxu0 %v1718
        %1802 = vmatpush.msra.mxu0 %v1714
        %1803 = vmatpush.msra.mxu0 %v1710
        %1804 = vmatpush.msra.mxu0 %v1706
        %1805 = vmatmul.f32.gmra.mxu0 %v1704
        %v1806 = vpop.f32.mrf.mxu0
        %v1807 = vadd.f32 0.0, %v1806
        %1808 = vdwg.mxu0
        %1809 = vmatpush.msra.mxu0 %v1767
        %1810 = vmatpush.msra.mxu0 %v1763
        %1811 = vmatpush.msra.mxu0 %v1759
        %1812 = vmatpush.msra.mxu0 %v1755
        %1813 = vmatpush.msra.mxu0 %v1751
        %1814 = vmatpush.msra.mxu0 %v1747
        %1815 = vmatpush.msra.mxu0 %v1743
        %1816 = vmatpush.msra.mxu0 %v1739
        %1817 = vmatpush.msra.mxu0 %v1735
        %1818 = vmatpush.msra.mxu0 %v1731
        %1819 = vmatpush.msra.mxu0 %v1727
        %1820 = vmatpush.msra.mxu0 %v1723
        %1821 = vmatpush.msra.mxu0 %v1719
        %1822 = vmatpush.msra.mxu0 %v1715
        %1823 = vmatpush.msra.mxu0 %v1711
        %1824 = vmatpush.msra.mxu0 %v1707
        %1825 = vmatmul.f32.gmra.mxu0 %v1704
        %v1826 = vpop.f32.mrf.mxu0
        %v1827 = vadd.f32 0.0, %v1826
        %1828 = vdwg.mxu0
        %1829 = vmatpush.msra.mxu0 %v1768
        %1830 = vmatpush.msra.mxu0 %v1764
        %1831 = vmatpush.msra.mxu0 %v1760
        %1832 = vmatpush.msra.mxu0 %v1756
        %1833 = vmatpush.msra.mxu0 %v1752
        %1834 = vmatpush.msra.mxu0 %v1748
        %1835 = vmatpush.msra.mxu0 %v1744
        %1836 = vmatpush.msra.mxu0 %v1740
        %1837 = vmatpush.msra.mxu0 %v1736
        %1838 = vmatpush.msra.mxu0 %v1732
        %1839 = vmatpush.msra.mxu0 %v1728
        %1840 = vmatpush.msra.mxu0 %v1724
        %1841 = vmatpush.msra.mxu0 %v1720
        %1842 = vmatpush.msra.mxu0 %v1716
        %1843 = vmatpush.msra.mxu0 %v1712
        %1844 = vmatpush.msra.mxu0 %v1708
        %1845 = vmatmul.f32.gmra.mxu0 %v1704
        %v1846 = vpop.f32.mrf.mxu0
        %v1847 = vadd.f32 0.0, %v1846
        %1848 = vdwg.mxu0
        %v1849 = vadd.f32 %v1700, %v1787
        %v1850 = vadd.f32 %v1701, %v1807
        %v1851 = vadd.f32 %v1702, %v1827
        %v1852 = vadd.f32 %v1703, %v1847
        %v1853 = vxor.u32 %v1849, 2147483648
        %v1854 = vxor.u32 %v1850, 2147483648
        %v1855 = vxor.u32 %v1851, 2147483648
        %v1856 = vmul.f32 %v1853, 1.442695
        %v1857 = vpow.pop %v1856
        %v1858 = vmul.f32 %v1854, 1.442695
        %v1859 = vpow.pop %v1858
        %v1860 = vmul.f32 %v1855, 1.442695
        %v1861 = vpow.pop %v1860
        %v1862 = vadd.f32 %v1857, 1.0
        %v1863 = vadd.f32 %v1859, 1.0
        %v1864 = vadd.f32 %v1861, 1.0
        %v1865 = vrcp.pop %v1862
        %v1866 = vmul.f32 %v1862, %v1865
        %v1867 = vsub.f32 1.0, %v1866
        %v1868 = vmul.f32 %v1865, %v1867
        %v1869 = vadd.f32 %v1865, %v1868
        %vm1870 = vweird.f32 %v1862
        %vm1871 = vweird.f32 %v1865
        %vm1872 = vmor %vm1870, %vm1871
        %v1873 = vsel %vm1872, %v1865, %v1869
        %v1874 = vand.u32 2147483647, %v1862
        %vm1875 = vcmp.eq.f32.partialorder %v1874, 8.507059e+37
        %v1876 = vand.u32 %v1862, 2147483648
        %v1877 = vor.u32 1.1754944e-38, %v1876
        %v1878 = vsel %vm1875, %v1877, %v1873
        %v1879 = vmul.f32 1.0, %v1878
        %v1880 = vrcp.pop %v1863
        %v1881 = vmul.f32 %v1863, %v1880
        %v1882 = vsub.f32 1.0, %v1881
        %v1883 = vmul.f32 %v1880, %v1882
        %v1884 = vadd.f32 %v1880, %v1883
        %vm1885 = vweird.f32 %v1863
        %vm1886 = vweird.f32 %v1880
        %vm1887 = vmor %vm1885, %vm1886
        %v1888 = vsel %vm1887, %v1880, %v1884
        %v1889 = vand.u32 2147483647, %v1863
        %vm1890 = vcmp.eq.f32.partialorder %v1889, 8.507059e+37
        %v1891 = vand.u32 %v1863, 2147483648
        %v1892 = vor.u32 1.1754944e-38, %v1891
        %v1893 = vsel %vm1890, %v1892, %v1888
        %v1894 = vmul.f32 1.0, %v1893
        %v1895 = vrcp.pop %v1864
        %v1896 = vmul.f32 %v1864, %v1895
        %v1897 = vsub.f32 1.0, %v1896
        %v1898 = vmul.f32 %v1895, %v1897
        %v1899 = vadd.f32 %v1895, %v1898
        %vm1900 = vweird.f32 %v1864
        %vm1901 = vweird.f32 %v1895
        %vm1902 = vmor %vm1900, %vm1901
        %v1903 = vsel %vm1902, %v1895, %v1899
        %v1904 = vand.u32 2147483647, %v1864
        %vm1905 = vcmp.eq.f32.partialorder %v1904, 8.507059e+37
        %v1906 = vand.u32 %v1864, 2147483648
        %v1907 = vor.u32 1.1754944e-38, %v1906
        %v1908 = vsel %vm1905, %v1907, %v1903
        %v1909 = vmul.f32 1.0, %v1908
        %v1910 = vtanh.pop %v1852
        %v1911 = vld [vmem:[#allocation3] sm:$0xff]
        %v1912 = vmul.f32 %v1894, %v1911
        %v1913 = vmul.f32 %v1879, %v1910
        %v1914 = vadd.f32 %v1912, %v1913
        %v1915 = vtanh.pop %v1914
        %v1916 = vmul.f32 %v1909, %v1915
        %1917 = vst [vmem:[#allocation3] sm:$0xff] %v1914
        %1918 = vst [vmem:[#allocation2] sm:$0xff] %v1916
        %s1919 = smul.u32 %s1696, 8
        %s1920 = scalar_lea.vmem %s302, %s1919 [#allocation9]
        %1921 = vst [vmem:[%s1920] sm:$0xff] %v1916
        %s1922 = smul.u32 %s560, 7
        %s1923 = sadd.s32 %s1922, %s333
        %s1924 = smul.u32 %s1923, 4
        %s1925 = smul.addr %s1924, 8
        %s1926 = scalar_lea.vmem %s266, %s1925 [#allocation4]
        %v1927 = vld [vmem:[%s1926] sm:$0xff]
        %v1928 = vld [vmem:[%s1926 + $0x8] sm:$0xff]
        %v1929 = vld [vmem:[%s1926 + $0x10] sm:$0xff]
        %v1930 = vld [vmem:[%s1926 + $0x18] sm:$0xff]
        %v1931 = vld [vmem:[#allocation2] sm:$0xff]
        %v1932 = vld [vmem:[%s276] sm:$0xff]
        %v1933 = vld [vmem:[%s276 + $0x8] sm:$0xff]
        %v1934 = vld [vmem:[%s276 + $0x10] sm:$0xff]
        %v1935 = vld [vmem:[%s276 + $0x18] sm:$0xff]
        %v1936 = vld [vmem:[%s276 + $0x20] sm:$0xff]
        %v1937 = vld [vmem:[%s276 + $0x28] sm:$0xff]
        %v1938 = vld [vmem:[%s276 + $0x30] sm:$0xff]
        %v1939 = vld [vmem:[%s276 + $0x38] sm:$0xff]
        %v1940 = vld [vmem:[%s276 + $0x40] sm:$0xff]
        %v1941 = vld [vmem:[%s276 + $0x48] sm:$0xff]
        %v1942 = vld [vmem:[%s276 + $0x50] sm:$0xff]
        %v1943 = vld [vmem:[%s276 + $0x58] sm:$0xff]
        %v1944 = vld [vmem:[%s276 + $0x60] sm:$0xff]
        %v1945 = vld [vmem:[%s276 + $0x68] sm:$0xff]
        %v1946 = vld [vmem:[%s276 + $0x70] sm:$0xff]
        %v1947 = vld [vmem:[%s276 + $0x78] sm:$0xff]
        %v1948 = vld [vmem:[%s276 + $0x80] sm:$0xff]
        %v1949 = vld [vmem:[%s276 + $0x88] sm:$0xff]
        %v1950 = vld [vmem:[%s276 + $0x90] sm:$0xff]
        %v1951 = vld [vmem:[%s276 + $0x98] sm:$0xff]
        %v1952 = vld [vmem:[%s276 + $0xa0] sm:$0xff]
        %v1953 = vld [vmem:[%s276 + $0xa8] sm:$0xff]
        %v1954 = vld [vmem:[%s276 + $0xb0] sm:$0xff]
        %v1955 = vld [vmem:[%s276 + $0xb8] sm:$0xff]
        %v1956 = vld [vmem:[%s276 + $0xc0] sm:$0xff]
        %v1957 = vld [vmem:[%s276 + $0xc8] sm:$0xff]
        %v1958 = vld [vmem:[%s276 + $0xd0] sm:$0xff]
        %v1959 = vld [vmem:[%s276 + $0xd8] sm:$0xff]
        %v1960 = vld [vmem:[%s276 + $0xe0] sm:$0xff]
        %v1961 = vld [vmem:[%s276 + $0xe8] sm:$0xff]
        %v1962 = vld [vmem:[%s276 + $0xf0] sm:$0xff]
        %v1963 = vld [vmem:[%s276 + $0xf8] sm:$0xff]
        %v1964 = vld [vmem:[%s276 + $0x100] sm:$0xff]
        %v1965 = vld [vmem:[%s276 + $0x108] sm:$0xff]
        %v1966 = vld [vmem:[%s276 + $0x110] sm:$0xff]
        %v1967 = vld [vmem:[%s276 + $0x118] sm:$0xff]
        %v1968 = vld [vmem:[%s276 + $0x120] sm:$0xff]
        %v1969 = vld [vmem:[%s276 + $0x128] sm:$0xff]
        %v1970 = vld [vmem:[%s276 + $0x130] sm:$0xff]
        %v1971 = vld [vmem:[%s276 + $0x138] sm:$0xff]
        %v1972 = vld [vmem:[%s276 + $0x140] sm:$0xff]
        %v1973 = vld [vmem:[%s276 + $0x148] sm:$0xff]
        %v1974 = vld [vmem:[%s276 + $0x150] sm:$0xff]
        %v1975 = vld [vmem:[%s276 + $0x158] sm:$0xff]
        %v1976 = vld [vmem:[%s276 + $0x160] sm:$0xff]
        %v1977 = vld [vmem:[%s276 + $0x168] sm:$0xff]
        %v1978 = vld [vmem:[%s276 + $0x170] sm:$0xff]
        %v1979 = vld [vmem:[%s276 + $0x178] sm:$0xff]
        %v1980 = vld [vmem:[%s276 + $0x180] sm:$0xff]
        %v1981 = vld [vmem:[%s276 + $0x188] sm:$0xff]
        %v1982 = vld [vmem:[%s276 + $0x190] sm:$0xff]
        %v1983 = vld [vmem:[%s276 + $0x198] sm:$0xff]
        %v1984 = vld [vmem:[%s276 + $0x1a0] sm:$0xff]
        %v1985 = vld [vmem:[%s276 + $0x1a8] sm:$0xff]
        %v1986 = vld [vmem:[%s276 + $0x1b0] sm:$0xff]
        %v1987 = vld [vmem:[%s276 + $0x1b8] sm:$0xff]
        %v1988 = vld [vmem:[%s276 + $0x1c0] sm:$0xff]
        %v1989 = vld [vmem:[%s276 + $0x1c8] sm:$0xff]
        %v1990 = vld [vmem:[%s276 + $0x1d0] sm:$0xff]
        %v1991 = vld [vmem:[%s276 + $0x1d8] sm:$0xff]
        %v1992 = vld [vmem:[%s276 + $0x1e0] sm:$0xff]
        %v1993 = vld [vmem:[%s276 + $0x1e8] sm:$0xff]
        %v1994 = vld [vmem:[%s276 + $0x1f0] sm:$0xff]
        %v1995 = vld [vmem:[%s276 + $0x1f8] sm:$0xff]
        %1996 = vmatpush.msra.mxu0 %v1992
        %1997 = vmatpush.msra.mxu0 %v1988
        %1998 = vmatpush.msra.mxu0 %v1984
        %1999 = vmatpush.msra.mxu0 %v1980
        %2000 = vmatpush.msra.mxu0 %v1976
        %2001 = vmatpush.msra.mxu0 %v1972
        %2002 = vmatpush.msra.mxu0 %v1968
        %2003 = vmatpush.msra.mxu0 %v1964
        %2004 = vmatpush.msra.mxu0 %v1960
        %2005 = vmatpush.msra.mxu0 %v1956
        %2006 = vmatpush.msra.mxu0 %v1952
        %2007 = vmatpush.msra.mxu0 %v1948
        %2008 = vmatpush.msra.mxu0 %v1944
        %2009 = vmatpush.msra.mxu0 %v1940
        %2010 = vmatpush.msra.mxu0 %v1936
        %2011 = vmatpush.msra.mxu0 %v1932
        %2012 = vmatmul.f32.gmra.mxu0 %v1931
        %v2013 = vpop.f32.mrf.mxu0
        %v2014 = vadd.f32 0.0, %v2013
        %2015 = vdwg.mxu0
        %2016 = vmatpush.msra.mxu0 %v1993
        %2017 = vmatpush.msra.mxu0 %v1989
        %2018 = vmatpush.msra.mxu0 %v1985
        %2019 = vmatpush.msra.mxu0 %v1981
        %2020 = vmatpush.msra.mxu0 %v1977
        %2021 = vmatpush.msra.mxu0 %v1973
        %2022 = vmatpush.msra.mxu0 %v1969
        %2023 = vmatpush.msra.mxu0 %v1965
        %2024 = vmatpush.msra.mxu0 %v1961
        %2025 = vmatpush.msra.mxu0 %v1957
        %2026 = vmatpush.msra.mxu0 %v1953
        %2027 = vmatpush.msra.mxu0 %v1949
        %2028 = vmatpush.msra.mxu0 %v1945
        %2029 = vmatpush.msra.mxu0 %v1941
        %2030 = vmatpush.msra.mxu0 %v1937
        %2031 = vmatpush.msra.mxu0 %v1933
        %2032 = vmatmul.f32.gmra.mxu0 %v1931
        %v2033 = vpop.f32.mrf.mxu0
        %v2034 = vadd.f32 0.0, %v2033
        %2035 = vdwg.mxu0
        %2036 = vmatpush.msra.mxu0 %v1994
        %2037 = vmatpush.msra.mxu0 %v1990
        %2038 = vmatpush.msra.mxu0 %v1986
        %2039 = vmatpush.msra.mxu0 %v1982
        %2040 = vmatpush.msra.mxu0 %v1978
        %2041 = vmatpush.msra.mxu0 %v1974
        %2042 = vmatpush.msra.mxu0 %v1970
        %2043 = vmatpush.msra.mxu0 %v1966
        %2044 = vmatpush.msra.mxu0 %v1962
        %2045 = vmatpush.msra.mxu0 %v1958
        %2046 = vmatpush.msra.mxu0 %v1954
        %2047 = vmatpush.msra.mxu0 %v1950
        %2048 = vmatpush.msra.mxu0 %v1946
        %2049 = vmatpush.msra.mxu0 %v1942
        %2050 = vmatpush.msra.mxu0 %v1938
        %2051 = vmatpush.msra.mxu0 %v1934
        %2052 = vmatmul.f32.gmra.mxu0 %v1931
        %v2053 = vpop.f32.mrf.mxu0
        %v2054 = vadd.f32 0.0, %v2053
        %2055 = vdwg.mxu0
        %2056 = vmatpush.msra.mxu0 %v1995
        %2057 = vmatpush.msra.mxu0 %v1991
        %2058 = vmatpush.msra.mxu0 %v1987
        %2059 = vmatpush.msra.mxu0 %v1983
        %2060 = vmatpush.msra.mxu0 %v1979
        %2061 = vmatpush.msra.mxu0 %v1975
        %2062 = vmatpush.msra.mxu0 %v1971
        %2063 = vmatpush.msra.mxu0 %v1967
        %2064 = vmatpush.msra.mxu0 %v1963
        %2065 = vmatpush.msra.mxu0 %v1959
        %2066 = vmatpush.msra.mxu0 %v1955
        %2067 = vmatpush.msra.mxu0 %v1951
        %2068 = vmatpush.msra.mxu0 %v1947
        %2069 = vmatpush.msra.mxu0 %v1943
        %2070 = vmatpush.msra.mxu0 %v1939
        %2071 = vmatpush.msra.mxu0 %v1935
        %2072 = vmatmul.f32.gmra.mxu0 %v1931
        %v2073 = vpop.f32.mrf.mxu0
        %v2074 = vadd.f32 0.0, %v2073
        %2075 = vdwg.mxu0
        %v2076 = vadd.f32 %v1927, %v2014
        %v2077 = vadd.f32 %v1928, %v2034
        %v2078 = vadd.f32 %v1929, %v2054
        %v2079 = vadd.f32 %v1930, %v2074
        %v2080 = vxor.u32 %v2076, 2147483648
        %v2081 = vxor.u32 %v2077, 2147483648
        %v2082 = vxor.u32 %v2078, 2147483648
        %v2083 = vmul.f32 %v2080, 1.442695
        %v2084 = vpow.pop %v2083
        %v2085 = vmul.f32 %v2081, 1.442695
        %v2086 = vpow.pop %v2085
        %v2087 = vmul.f32 %v2082, 1.442695
        %v2088 = vpow.pop %v2087
        %v2089 = vadd.f32 %v2084, 1.0
        %v2090 = vadd.f32 %v2086, 1.0
        %v2091 = vadd.f32 %v2088, 1.0
        %v2092 = vrcp.pop %v2089
        %v2093 = vmul.f32 %v2089, %v2092
        %v2094 = vsub.f32 1.0, %v2093
        %v2095 = vmul.f32 %v2092, %v2094
        %v2096 = vadd.f32 %v2092, %v2095
        %vm2097 = vweird.f32 %v2089
        %vm2098 = vweird.f32 %v2092
        %vm2099 = vmor %vm2097, %vm2098
        %v2100 = vsel %vm2099, %v2092, %v2096
        %v2101 = vand.u32 2147483647, %v2089
        %vm2102 = vcmp.eq.f32.partialorder %v2101, 8.507059e+37
        %v2103 = vand.u32 %v2089, 2147483648
        %v2104 = vor.u32 1.1754944e-38, %v2103
        %v2105 = vsel %vm2102, %v2104, %v2100
        %v2106 = vmul.f32 1.0, %v2105
        %v2107 = vrcp.pop %v2090
        %v2108 = vmul.f32 %v2090, %v2107
        %v2109 = vsub.f32 1.0, %v2108
        %v2110 = vmul.f32 %v2107, %v2109
        %v2111 = vadd.f32 %v2107, %v2110
        %vm2112 = vweird.f32 %v2090
        %vm2113 = vweird.f32 %v2107
        %vm2114 = vmor %vm2112, %vm2113
        %v2115 = vsel %vm2114, %v2107, %v2111
        %v2116 = vand.u32 2147483647, %v2090
        %vm2117 = vcmp.eq.f32.partialorder %v2116, 8.507059e+37
        %v2118 = vand.u32 %v2090, 2147483648
        %v2119 = vor.u32 1.1754944e-38, %v2118
        %v2120 = vsel %vm2117, %v2119, %v2115
        %v2121 = vmul.f32 1.0, %v2120
        %v2122 = vrcp.pop %v2091
        %v2123 = vmul.f32 %v2091, %v2122
        %v2124 = vsub.f32 1.0, %v2123
        %v2125 = vmul.f32 %v2122, %v2124
        %v2126 = vadd.f32 %v2122, %v2125
        %vm2127 = vweird.f32 %v2091
        %vm2128 = vweird.f32 %v2122
        %vm2129 = vmor %vm2127, %vm2128
        %v2130 = vsel %vm2129, %v2122, %v2126
        %v2131 = vand.u32 2147483647, %v2091
        %vm2132 = vcmp.eq.f32.partialorder %v2131, 8.507059e+37
        %v2133 = vand.u32 %v2091, 2147483648
        %v2134 = vor.u32 1.1754944e-38, %v2133
        %v2135 = vsel %vm2132, %v2134, %v2130
        %v2136 = vmul.f32 1.0, %v2135
        %v2137 = vtanh.pop %v2079
        %v2138 = vld [vmem:[#allocation3] sm:$0xff]
        %v2139 = vmul.f32 %v2121, %v2138
        %v2140 = vmul.f32 %v2106, %v2137
        %v2141 = vadd.f32 %v2139, %v2140
        %v2142 = vtanh.pop %v2141
        %v2143 = vmul.f32 %v2136, %v2142
        %2144 = vst [vmem:[#allocation3] sm:$0xff] %v2141
        %2145 = vst [vmem:[#allocation2] sm:$0xff] %v2143
        %s2146 = smul.u32 %s1923, 8
        %s2147 = scalar_lea.vmem %s302, %s2146 [#allocation9]
        %2148 = vst [vmem:[%s2147] sm:$0xff] %v2143
        %p2149 = scmp.eq.s32.totalorder %s33, 1
        // Predicated region
        $region41: #{tpu_custom_call.1} parent=27 // pred_check
          %p2150 = pneg %p2149
        $region42: #{tpu_custom_call.1} parent=27 // pred_check_branch
          %2152 = sbr.rel (%p2150) target = $region44
        $region43: #{tpu_custom_call.1} parent=27 // pred_region
          %v2153 = vld [vmem:[#allocation2] sm:$0xff]
          %2154 = vst [vmem:[%s309] sm:$0xff] %v2153
          %v2155 = vld [vmem:[#allocation3] sm:$0xff]
          %2156 = vst [vmem:[%s316] sm:$0xff] %v2155
        $region44: #{tpu_custom_call.1} parent=27 // pred_fallthru
          _
        %s2157 = sand.u32 %s120, 1
        %s2158 = scalar_lea.sflag [#allocation6], %s2157
        %s2159 = sand.u32 %s120, 1
        %s2160 = smul.addr %s2159, 64
        %s2161 = scalar_lea.vmem [#allocation9], %s2160
        %s2162 = sand.u32 %s28, 1
        %s2163 = scalar_lea.sflag [#allocation11], %s2162
        %s2164 = sand.u32 %s146, 1
        %s2165 = smul.addr %s2164, 8
        %s2166 = scalar_lea.vmem [#allocation10], %s2165
        %s2167 = sand.u32 %s28, 1
        %s2168 = scalar_lea.sflag [#allocation11], %s2167
        %s2169 = sand.u32 %s172, 1
        %s2170 = smul.addr %s2169, 8
        %s2171 = scalar_lea.vmem [#allocation12], %s2170
        // Predicated region
        $region45: #{tpu_custom_call.1} parent=27 // pred_check
          %p2172 = pneg %p130
        $region46: #{tpu_custom_call.1} parent=27 // pred_check_branch
          %2174 = sbr.rel (%p2172) target = $region48
        $region47: #{tpu_custom_call.1} parent=27 // pred_region
          %s2175 = smul.u32 %s33, 2
          %s2176 = ssub.s32 1, %s2175
          %s2177 = smul.u32 %s32, %s2176
          %s2178 = sadd.s32 %s2177, %s33
          %s2179 = smul.u32 8, %s2178
          %2181 = vsyncadd %s2158, 0
          %s2182 = smul.addr %s2179, 2
          %s2183 = sadd.s32 %s32, %s2182
          %s2184 = smul.addr %s2183, 8
          %s2185 = scalar_lea.hbm %s2, %s2184
          %s2186 = sshll.u32 %s2161, 4
          %s2187 = int_to_ptr.vmem [resolvable:$true] %s2186
          %s2188 = sshll.u32 %s2185, 4
          %s2189 = int_to_ptr.hbm [resolvable:$true] %s2188
          %2194 = dma.vmem_to_hbm [thread:$0]  %s2187, 1024, %s2189, %s2158, 128, 256, 8
        $region48: #{tpu_custom_call.1} parent=27 // pred_fallthru
          _
        // Predicated region
        $region49: #{tpu_custom_call.1} parent=27 // pred_check
          %p2195 = pneg %p156
        $region50: #{tpu_custom_call.1} parent=27 // pred_check_branch
          %2197 = sbr.rel (%p2195) target = $region52
        $region51: #{tpu_custom_call.1} parent=27 // pred_region
          %2199 = vsyncadd %s2163, 0
          %s2200 = smul.addr %s32, 8
          %s2201 = scalar_lea.hbm %s3, %s2200
          %s2203 = sshll.u32 %s2166, 4
          %s2204 = int_to_ptr.vmem [resolvable:$true] %s2203
          %s2205 = sshll.u32 %s2201, 4
          %s2206 = int_to_ptr.hbm [resolvable:$true] %s2205
          %2208 = dma.vmem_to_hbm [thread:$0]  %s2204, 128, %s2206, %s2163
        $region52: #{tpu_custom_call.1} parent=27 // pred_fallthru
          _
        // Predicated region
        $region53: #{tpu_custom_call.1} parent=27 // pred_check
          %p2209 = pneg %p182
        $region54: #{tpu_custom_call.1} parent=27 // pred_check_branch
          %2211 = sbr.rel (%p2209) target = $region56
        $region55: #{tpu_custom_call.1} parent=27 // pred_region
          %2213 = vsyncadd %s2168, 0
          %s2214 = smul.addr %s32, 8
          %s2215 = scalar_lea.hbm %s4, %s2214
          %s2217 = sshll.u32 %s2171, 4
          %s2218 = int_to_ptr.vmem [resolvable:$true] %s2217
          %s2219 = sshll.u32 %s2215, 4
          %s2220 = int_to_ptr.hbm [resolvable:$true] %s2219
          %2222 = dma.vmem_to_hbm [thread:$0]  %s2218, 128, %s2220, %s2168
        $region56: #{tpu_custom_call.1} parent=27 // pred_fallthru
          _
      $region28: #{tpu_custom_call.1} parent=5 // pred_fallthru
        _
      %p2223 = scmp.le.s32.totalorder 2, %s23
      // Predicated region
      $region57: #{tpu_custom_call.1} parent=5 // pred_check
        %p2224 = pneg %p2223
      $region58: #{tpu_custom_call.1} parent=5 // pred_check_branch
        %2226 = sbr.rel (%p2224) target = $region60
      $region59: #{tpu_custom_call.1} parent=5 // pred_region
        %s2227 = ssub.s32 %s23, 2
        // Predicated region
        $region61: #{tpu_custom_call.1} parent=59 // pred_check
          %p2228 = pneg %p136
        $region62: #{tpu_custom_call.1} parent=59 // pred_check_branch
          %2230 = sbr.rel (%p2228) target = $region64
        $region63: #{tpu_custom_call.1} parent=59 // pred_region
          %s2231 = sand.u32 %s121, 1
          %s2232 = scalar_lea.sflag [#allocation6], %s2231
          %s2233 = sand.u32 %s121, 1
          %s2234 = smul.addr %s2233, 64
          %s2235 = scalar_lea.vmem [#allocation9], %s2234
          %2237 = dma.done %s2232, 1024
        $region64: #{tpu_custom_call.1} parent=59 // pred_fallthru
          _
        // Predicated region
        $region65: #{tpu_custom_call.1} parent=59 // pred_check
          %p2238 = pneg %p162
        $region66: #{tpu_custom_call.1} parent=59 // pred_check_branch
          %2240 = sbr.rel (%p2238) target = $region68
        $region67: #{tpu_custom_call.1} parent=59 // pred_region
          %s2241 = sand.u32 %s29, 1
          %s2242 = scalar_lea.sflag [#allocation11], %s2241
          %s2243 = sand.u32 %s147, 1
          %s2244 = smul.addr %s2243, 8
          %s2245 = scalar_lea.vmem [#allocation10], %s2244
          %2247 = dma.done %s2242, 128
        $region68: #{tpu_custom_call.1} parent=59 // pred_fallthru
          _
        // Predicated region
        $region69: #{tpu_custom_call.1} parent=59 // pred_check
          %p2248 = pneg %p188
        $region70: #{tpu_custom_call.1} parent=59 // pred_check_branch
          %2250 = sbr.rel (%p2248) target = $region72
        $region71: #{tpu_custom_call.1} parent=59 // pred_region
          %s2251 = sand.u32 %s29, 1
          %s2252 = scalar_lea.sflag [#allocation11], %s2251
          %s2253 = sand.u32 %s173, 1
          %s2254 = smul.addr %s2253, 8
          %s2255 = scalar_lea.vmem [#allocation12], %s2254
          %2257 = dma.done %s2252, 128
        $region72: #{tpu_custom_call.1} parent=59 // pred_fallthru
          _
      $region60: #{tpu_custom_call.1} parent=5 // pred_fallthru
        _
    $region6: #{tpu_custom_call.1} parent=1 // loop_footer
      %s27 = sadd.s32 1, %s23
    $region7: #{tpu_custom_call.1} parent=1 // loop_footer_branch
      %22 = sbr.rel target = $region3
    $region8: #{tpu_custom_call.1} parent=1 // loop_exit
      _
    %2258 = vsyncpa [#allocation5], 1
    %s2259 = scalar_lea.sflag [#allocation5], 1
    %2260 = vsyncpa %s2259, 1
    %2261 = vsyncpa [#allocation8], 1
    %s2262 = scalar_lea.sflag [#allocation8], 1
    %2263 = vsyncpa %s2262, 1
    %2264 = vsyncpa [#allocation6], 1
    %s2265 = scalar_lea.sflag [#allocation6], 1
    %2266 = vsyncpa %s2265, 1
    %2267 = vsyncpa [#allocation11], 1
    %s2268 = scalar_lea.sflag [#allocation11], 1
    %2269 = vsyncpa %s2268, 1

</llo_original>
